<compile_context>
chip_gen: v7x
topology: tpu7x:2x2x1
jax: 0.10.0
libtpu: 0.0.40
codegen_flags: <defaults>
</compile_context>

<pallas_src>
import functools

import jax
import jax.numpy as jnp
from jax.experimental import pallas as pl
from jax.experimental.pallas import tpu as pltpu


# --------------------------- fused GRU + MLP kernel ---------------------------
def _fused_gru_mlp_kernel(*refs, seq_len, n_layers, hidden):
    """Whole model in one kernel (everything VMEM-resident).

    refs layout:
      inputs : x (T,B,Din0),
               per layer l: w_ih (Din_l,3H) bf16, w_hh (H,3H) bf16,
                            b_i (1,3H) f32 (b_ih with b_hh_{r,z} folded in),
                            b_hn (1,H) f32,
               w1 (H,256) bf16, b1 (1,256) f32, w2 (256,O) bf16, b2 (1,O) f32
      outputs: out_f (B,O) f32, h_f (L,B,H) f32
      scratch: gi (T,B,3H) f32, act (2,T,B,H) f32 (ping-pong inter-layer acts)
    """
    T, H = seq_len, hidden
    x_ref = refs[0]
    layer_refs = refs[1:1 + 4 * n_layers]
    w1_ref, b1_ref, w2_ref, b2_ref = refs[1 + 4 * n_layers:5 + 4 * n_layers]
    out_ref = refs[5 + 4 * n_layers]
    hf_ref = refs[6 + 4 * n_layers]
    gi_ref = refs[7 + 4 * n_layers]
    act_ref = refs[8 + 4 * n_layers]

    B = x_ref.shape[1]

    def sigmoid(v):
        # single EUP transcendental; avoids exp + exact divide on the serial chain
        return 0.5 * (jnp.tanh(0.5 * v) + 1.0)

    h_finals = []
    h = None
    for l in range(n_layers):
        wih, whh, b_i, b_hn = layer_refs[4 * l:4 * l + 4]

        # ---- hoisted input projection: one lane-packed matmul per layer --------
        if l == 0:
            x2d = x_ref[...].reshape(T * B, x_ref.shape[2])        # (T*B, Din0)
        else:
            x2d = act_ref[(l - 1) % 2].reshape(T * B, H)           # (T*B, H)
        gi = (jnp.dot(x2d.astype(jnp.bfloat16), wih[...],
                      preferred_element_type=jnp.float32) + b_i[...])
        gi_ref[...] = gi.reshape(T, B, 3 * H)                      # stage in VMEM

        whh_v = whh[...]                                           # (H, 3H) bf16
        b_hn_v = b_hn[...]                                         # (1, H)  f32

        # ---- serial recurrence: one MXU round-trip per step (fully unrolled) ---
        h = None
        for t in range(T):
            gi_t = gi_ref[t]                                       # (B, 3H)
            if h is None:
                # h0 == 0 => W_hh @ h0 vanishes (b_hh_{r,z} already folded in gi).
                rz = sigmoid(gi_t[:, :2 * H])
                r = rz[:, :H]
                z = rz[:, H:]
                n = jnp.tanh(gi_t[:, 2 * H:] + r * b_hn_v)
                h = (1.0 - z) * n
            else:
                gh = jnp.dot(h.astype(jnp.bfloat16), whh_v,
                             preferred_element_type=jnp.float32)   # (B, 3H)
                rz = sigmoid(gi_t[:, :2 * H] + gh[:, :2 * H])
                r = rz[:, :H]
                z = rz[:, H:]
                n = jnp.tanh(gi_t[:, 2 * H:] + r * (gh[:, 2 * H:] + b_hn_v))
                h = (1.0 - z) * n + z * h
            if l < n_layers - 1:
                act_ref[l % 2, t] = h                              # feeds next layer
        h_finals.append(h)

    # single store of all final hidden states (instead of L masked stores)
    hf_ref[...] = jnp.stack(h_finals, axis=0)

    # ---- MLP head on h_T of the last layer (== gru_out[:, -1, :]) --------------
    # NOTE: the reference module has NO activation between linear_1 and linear_2.
    h1 = (jnp.dot(h.astype(jnp.bfloat16), w1_ref[...],
                  preferred_element_type=jnp.float32) + b1_ref[...])
    out_ref[...] = (jnp.dot(h1.astype(jnp.bfloat16), w2_ref[...],
                            preferred_element_type=jnp.float32) + b2_ref[...])


# ------------------------------- model forward --------------------------------
def gru_model_forward(x, params):
    """x: (B, T, in_size) batch-first. Returns (out_f (B, o_size), h_f (L, B, H))."""
    B, T, _ = x.shape
    layers = params["gru_layers"]
    L = len(layers)
    H = layers[0]["w_hh"].shape[0]                       # w_hh packed (H, 3H)
    O = params["w2"].shape[-1]

    x_tm = jnp.transpose(x, (1, 0, 2))                   # (T, B, Din) time-major

    args = [x_tm]
    for lp in layers:
        args += [lp["w_ih"], lp["w_hh"], lp["b_i"], lp["b_hn"]]
    args += [params["w1"], params["b1"], params["w2"], params["b2"]]

    vmem = pl.BlockSpec(memory_space=pltpu.MemorySpace.VMEM)
    kernel = functools.partial(_fused_gru_mlp_kernel,
                               seq_len=T, n_layers=L, hidden=H)
    # TODO(synk): on v7x, a grid over batch with dimension_semantics=("parallel",)
    # would use the second TensorCore; at B=2 a single grid-less call is right.
    out_f, h_f = pl.pallas_call(
        kernel,
        out_shape=(jax.ShapeDtypeStruct((B, O), jnp.float32),
                   jax.ShapeDtypeStruct((L, B, H), jnp.float32)),
        in_specs=[vmem] * len(args),
        out_specs=(vmem, vmem),
        scratch_shapes=[pltpu.VMEM((T, B, 3 * H), jnp.float32),
                        pltpu.VMEM((2, T, B, H), jnp.float32)],
    )(*args)
    return out_f, h_f


# ------------------------------ parameter setup ------------------------------
def init_params(key, in_size, h_size, n_layers, lin_hidden, o_size):
    """Gate weights lane-packed [r|z|n]; MXU weights in bf16, biases in f32."""
    def u(k, shape, s):
        return jax.random.uniform(k, shape, minval=-s, maxval=s, dtype=jnp.float32)

    params = {"gru_layers": []}
    scale = h_size ** -0.5
    keys = jax.random.split(key, n_layers * 4 + 4)
    ki = 0
    for l in range(n_layers):
        d_in = in_size if l == 0 else h_size
        w_ih = u(keys[ki + 0], (d_in, 3 * h_size), scale)      # [r|z|n] on lanes
        w_hh = u(keys[ki + 1], (h_size, 3 * h_size), scale)
        b_ih = u(keys[ki + 2], (1, 3 * h_size), scale)
        b_hh = u(keys[ki + 3], (1, 3 * h_size), scale)
        # fold the purely-additive hidden biases for r and z into the input bias
        b_i = b_ih.at[:, :2 * h_size].add(b_hh[:, :2 * h_size])
        b_hn = b_hh[:, 2 * h_size:]
        params["gru_layers"].append({
            "w_ih": w_ih.astype(jnp.bfloat16),
            "w_hh": w_hh.astype(jnp.bfloat16),
            "b_i": b_i,                                         # f32
            "b_hn": b_hn,                                       # f32
        })
        ki += 4
    s1 = h_size ** -0.5
    params["w1"] = u(keys[ki + 0], (h_size, lin_hidden), s1).astype(jnp.bfloat16)
    params["b1"] = u(keys[ki + 1], (1, lin_hidden), s1)
    s2 = lin_hidden ** -0.5
    params["w2"] = u(keys[ki + 2], (lin_hidden, o_size), s2).astype(jnp.bfloat16)
    params["b2"] = u(keys[ki + 3], (1, o_size), s2)
    return params


if __name__ == "__main__":
    # Small shapes consistent with the module's forward (scaled-down h/layers).
    B, T = 2, 8
    IN_SIZE, H_SIZE, N_LAYERS, LIN_HIDDEN, O_SIZE = 8, 32, 3, 256, 3

    key = jax.random.PRNGKey(0)
    k_x, k_p = jax.random.split(key)
    x = jax.random.normal(k_x, (B, T, IN_SIZE), dtype=jnp.float32)
    params = init_params(k_p, IN_SIZE, H_SIZE, N_LAYERS, LIN_HIDDEN, O_SIZE)

    @jax.jit
    def fwd(x_in):
        return gru_model_forward(x_in, params)

    out_f, h_f = fwd(x)
    jax.block_until_ready((out_f, h_f))

    assert out_f.shape == (B, O_SIZE)
    assert h_f.shape == (N_LAYERS, B, H_SIZE)
    assert bool(jnp.all(jnp.isfinite(out_f))) and bool(jnp.all(jnp.isfinite(h_f)))
    print("KERNEL_OK")
</pallas_src>

<mosaic_0001>
module attributes {stable_mosaic.version = 11 : i64} {
  func.func @_fused_gru_mlp_kernel(%arg0: memref<8x2x8xf32, #tpu.memory_space<vmem>>, %arg1: memref<8x96xbf16, #tpu.memory_space<vmem>>, %arg2: memref<32x96xbf16, #tpu.memory_space<vmem>>, %arg3: memref<1x96xf32, #tpu.memory_space<vmem>>, %arg4: memref<1x32xf32, #tpu.memory_space<vmem>>, %arg5: memref<32x96xbf16, #tpu.memory_space<vmem>>, %arg6: memref<32x96xbf16, #tpu.memory_space<vmem>>, %arg7: memref<1x96xf32, #tpu.memory_space<vmem>>, %arg8: memref<1x32xf32, #tpu.memory_space<vmem>>, %arg9: memref<32x96xbf16, #tpu.memory_space<vmem>>, %arg10: memref<32x96xbf16, #tpu.memory_space<vmem>>, %arg11: memref<1x96xf32, #tpu.memory_space<vmem>>, %arg12: memref<1x32xf32, #tpu.memory_space<vmem>>, %arg13: memref<32x256xbf16, #tpu.memory_space<vmem>>, %arg14: memref<1x256xf32, #tpu.memory_space<vmem>>, %arg15: memref<256x3xbf16, #tpu.memory_space<vmem>>, %arg16: memref<1x3xf32, #tpu.memory_space<vmem>>, %arg17: memref<2x3xf32, #tpu.memory_space<vmem>>, %arg18: memref<3x2x32xf32, #tpu.memory_space<vmem>>, %arg19: memref<8x2x96xf32, #tpu.memory_space<vmem>>, %arg20: memref<2x8x2x32xf32, #tpu.memory_space<vmem>>) attributes {dimension_semantics = [], scalar_prefetch = 0 : i64, scratch_operands = 2 : i64, tpu.core_type = #tpu.core_type<tc>} {
    %c0 = arith.constant 0 : index
    %c0_0 = arith.constant 0 : index
    %c0_1 = arith.constant 0 : index
    %0 = vector.load %arg0[%c0, %c0_0, %c0_1] : memref<8x2x8xf32, #tpu.memory_space<vmem>>, vector<8x2x8xf32>
    %1 = vector.shape_cast %0 : vector<8x2x8xf32> to vector<16x8xf32>
    %2 = arith.truncf %1 : vector<16x8xf32> to vector<16x8xbf16>
    %c0_2 = arith.constant 0 : index
    %c0_3 = arith.constant 0 : index
    %3 = vector.load %arg1[%c0_2, %c0_3] : memref<8x96xbf16, #tpu.memory_space<vmem>>, vector<8x96xbf16>
    %cst = arith.constant dense<0.000000e+00> : vector<16x96xf32>
    %4 = tpu.matmul %2, %3, %cst {dimension_numbers = #tpu.dot_dimension_numbers<[1], [0], [0], [1], [0, 0, 1, 1], [], []>} : vector<16x8xbf16>, vector<8x96xbf16>, vector<16x96xf32> -> vector<16x96xf32>
    %c0_4 = arith.constant 0 : index
    %c0_5 = arith.constant 0 : index
    %5 = vector.load %arg3[%c0_4, %c0_5] : memref<1x96xf32, #tpu.memory_space<vmem>>, vector<1x96xf32>
    %6 = vector.broadcast %5 : vector<1x96xf32> to vector<16x96xf32>
    %7 = arith.addf %4, %6 : vector<16x96xf32>
    %8 = vector.shape_cast %7 : vector<16x96xf32> to vector<8x2x96xf32>
    %c0_6 = arith.constant 0 : index
    %c0_7 = arith.constant 0 : index
    %c0_8 = arith.constant 0 : index
    %9 = vector.load %arg19[%c0_6, %c0_7, %c0_8] : memref<8x2x96xf32, #tpu.memory_space<vmem>>, vector<8x2x96xf32>
    tpu.vector_store %arg19[%c0_6, %c0_7, %c0_8], %8 {strides = array<i32>} : memref<8x2x96xf32, #tpu.memory_space<vmem>>, vector<8x2x96xf32>,
    %c0_9 = arith.constant 0 : index
    %c0_10 = arith.constant 0 : index
    %10 = vector.load %arg2[%c0_9, %c0_10] : memref<32x96xbf16, #tpu.memory_space<vmem>>, vector<32x96xbf16>
    %c0_11 = arith.constant 0 : index
    %c0_12 = arith.constant 0 : index
    %11 = vector.load %arg4[%c0_11, %c0_12] : memref<1x32xf32, #tpu.memory_space<vmem>>, vector<1x32xf32>
    %c0_13 = arith.constant 0 : index
    %c0_14 = arith.constant 0 : index
    %c0_15 = arith.constant 0 : index
    %12 = vector.load %arg19[%c0_13, %c0_14, %c0_15] : memref<8x2x96xf32, #tpu.memory_space<vmem>>, vector<1x2x96xf32>
    %13 = vector.shape_cast %12 : vector<1x2x96xf32> to vector<2x96xf32>
    %14 = vector.extract_strided_slice %13 {offsets = [0, 0], sizes = [2, 64], strides = [1, 1]} : vector<2x96xf32> to vector<2x64xf32>
    %cst_16 = arith.constant 5.000000e-01 : f32
    %15 = vector.broadcast %cst_16 : f32 to vector<2x64xf32>
    %16 = arith.mulf %15, %14 : vector<2x64xf32>
    %17 = math.tanh %16 : vector<2x64xf32>
    %cst_17 = arith.constant 1.000000e+00 : f32
    %18 = vector.broadcast %cst_17 : f32 to vector<2x64xf32>
    %19 = arith.addf %17, %18 : vector<2x64xf32>
    %cst_18 = arith.constant 5.000000e-01 : f32
    %20 = vector.broadcast %cst_18 : f32 to vector<2x64xf32>
    %21 = arith.mulf %20, %19 : vector<2x64xf32>
    %22 = vector.extract_strided_slice %21 {offsets = [0, 0], sizes = [2, 32], strides = [1, 1]} : vector<2x64xf32> to vector<2x32xf32>
    %23 = vector.extract_strided_slice %21 {offsets = [0, 32], sizes = [2, 32], strides = [1, 1]} : vector<2x64xf32> to vector<2x32xf32>
    %24 = vector.extract_strided_slice %13 {offsets = [0, 64], sizes = [2, 32], strides = [1, 1]} : vector<2x96xf32> to vector<2x32xf32>
    %25 = vector.broadcast %11 : vector<1x32xf32> to vector<2x32xf32>
    %26 = arith.mulf %22, %25 : vector<2x32xf32>
    %27 = arith.addf %24, %26 : vector<2x32xf32>
    %28 = math.tanh %27 : vector<2x32xf32>
    %cst_19 = arith.constant 1.000000e+00 : f32
    %29 = vector.broadcast %cst_19 : f32 to vector<2x32xf32>
    %30 = arith.subf %29, %23 : vector<2x32xf32>
    %31 = arith.mulf %30, %28 : vector<2x32xf32>
    %c0_20 = arith.constant 0 : index
    %c0_21 = arith.constant 0 : index
    %c0_22 = arith.constant 0 : index
    %c0_23 = arith.constant 0 : index
    %32 = vector.load %arg20[%c0_20, %c0_21, %c0_22, %c0_23] : memref<2x8x2x32xf32, #tpu.memory_space<vmem>>, vector<1x1x2x32xf32>
    %33 = vector.shape_cast %32 : vector<1x1x2x32xf32> to vector<2x32xf32>
    %34 = vector.shape_cast %31 : vector<2x32xf32> to vector<1x1x2x32xf32>
    tpu.vector_store %arg20[%c0_20, %c0_21, %c0_22, %c0_23], %34 {strides = array<i32>} : memref<2x8x2x32xf32, #tpu.memory_space<vmem>>, vector<1x1x2x32xf32>,
    %c1 = arith.constant 1 : index
    %c0_24 = arith.constant 0 : index
    %c0_25 = arith.constant 0 : index
    %35 = vector.load %arg19[%c1, %c0_24, %c0_25] : memref<8x2x96xf32, #tpu.memory_space<vmem>>, vector<1x2x96xf32>
    %36 = vector.shape_cast %35 : vector<1x2x96xf32> to vector<2x96xf32>
    %37 = arith.truncf %31 : vector<2x32xf32> to vector<2x32xbf16>
    %cst_26 = arith.constant dense<0.000000e+00> : vector<2x96xf32>
    %38 = tpu.matmul %37, %10, %cst_26 {dimension_numbers = #tpu.dot_dimension_numbers<[1], [0], [0], [1], [0, 0, 1, 1], [], []>} : vector<2x32xbf16>, vector<32x96xbf16>, vector<2x96xf32> -> vector<2x96xf32>
    %39 = vector.extract_strided_slice %36 {offsets = [0, 0], sizes = [2, 64], strides = [1, 1]} : vector<2x96xf32> to vector<2x64xf32>
    %40 = vector.extract_strided_slice %38 {offsets = [0, 0], sizes = [2, 64], strides = [1, 1]} : vector<2x96xf32> to vector<2x64xf32>
    %41 = arith.addf %39, %40 : vector<2x64xf32>
    %cst_27 = arith.constant 5.000000e-01 : f32
    %42 = vector.broadcast %cst_27 : f32 to vector<2x64xf32>
    %43 = arith.mulf %42, %41 : vector<2x64xf32>
    %44 = math.tanh %43 : vector<2x64xf32>
    %cst_28 = arith.constant 1.000000e+00 : f32
    %45 = vector.broadcast %cst_28 : f32 to vector<2x64xf32>
    %46 = arith.addf %44, %45 : vector<2x64xf32>
    %cst_29 = arith.constant 5.000000e-01 : f32
    %47 = vector.broadcast %cst_29 : f32 to vector<2x64xf32>
    %48 = arith.mulf %47, %46 : vector<2x64xf32>
    %49 = vector.extract_strided_slice %48 {offsets = [0, 0], sizes = [2, 32], strides = [1, 1]} : vector<2x64xf32> to vector<2x32xf32>
    %50 = vector.extract_strided_slice %48 {offsets = [0, 32], sizes = [2, 32], strides = [1, 1]} : vector<2x64xf32> to vector<2x32xf32>
    %51 = vector.extract_strided_slice %36 {offsets = [0, 64], sizes = [2, 32], strides = [1, 1]} : vector<2x96xf32> to vector<2x32xf32>
    %52 = vector.extract_strided_slice %38 {offsets = [0, 64], sizes = [2, 32], strides = [1, 1]} : vector<2x96xf32> to vector<2x32xf32>
    %53 = vector.broadcast %11 : vector<1x32xf32> to vector<2x32xf32>
    %54 = arith.addf %52, %53 : vector<2x32xf32>
    %55 = arith.mulf %49, %54 : vector<2x32xf32>
    %56 = arith.addf %51, %55 : vector<2x32xf32>
    %57 = math.tanh %56 : vector<2x32xf32>
    %cst_30 = arith.constant 1.000000e+00 : f32
    %58 = vector.broadcast %cst_30 : f32 to vector<2x32xf32>
    %59 = arith.subf %58, %50 : vector<2x32xf32>
    %60 = arith.mulf %59, %57 : vector<2x32xf32>
    %61 = arith.mulf %50, %31 : vector<2x32xf32>
    %62 = arith.addf %60, %61 : vector<2x32xf32>
    %c0_31 = arith.constant 0 : index
    %c1_32 = arith.constant 1 : index
    %c0_33 = arith.constant 0 : index
    %c0_34 = arith.constant 0 : index
    %63 = vector.load %arg20[%c0_31, %c1_32, %c0_33, %c0_34] : memref<2x8x2x32xf32, #tpu.memory_space<vmem>>, vector<1x1x2x32xf32>
    %64 = vector.shape_cast %63 : vector<1x1x2x32xf32> to vector<2x32xf32>
    %65 = vector.shape_cast %62 : vector<2x32xf32> to vector<1x1x2x32xf32>
    tpu.vector_store %arg20[%c0_31, %c1_32, %c0_33, %c0_34], %65 {strides = array<i32>} : memref<2x8x2x32xf32, #tpu.memory_space<vmem>>, vector<1x1x2x32xf32>,
    %c2 = arith.constant 2 : index
    %c0_35 = arith.constant 0 : index
    %c0_36 = arith.constant 0 : index
    %66 = vector.load %arg19[%c2, %c0_35, %c0_36] : memref<8x2x96xf32, #tpu.memory_space<vmem>>, vector<1x2x96xf32>
    %67 = vector.shape_cast %66 : vector<1x2x96xf32> to vector<2x96xf32>
    %68 = arith.truncf %62 : vector<2x32xf32> to vector<2x32xbf16>
    %cst_37 = arith.constant dense<0.000000e+00> : vector<2x96xf32>
    %69 = tpu.matmul %68, %10, %cst_37 {dimension_numbers = #tpu.dot_dimension_numbers<[1], [0], [0], [1], [0, 0, 1, 1], [], []>} : vector<2x32xbf16>, vector<32x96xbf16>, vector<2x96xf32> -> vector<2x96xf32>
    %70 = vector.extract_strided_slice %67 {offsets = [0, 0], sizes = [2, 64], strides = [1, 1]} : vector<2x96xf32> to vector<2x64xf32>
    %71 = vector.extract_strided_slice %69 {offsets = [0, 0], sizes = [2, 64], strides = [1, 1]} : vector<2x96xf32> to vector<2x64xf32>
    %72 = arith.addf %70, %71 : vector<2x64xf32>
    %cst_38 = arith.constant 5.000000e-01 : f32
    %73 = vector.broadcast %cst_38 : f32 to vector<2x64xf32>
    %74 = arith.mulf %73, %72 : vector<2x64xf32>
    %75 = math.tanh %74 : vector<2x64xf32>
    %cst_39 = arith.constant 1.000000e+00 : f32
    %76 = vector.broadcast %cst_39 : f32 to vector<2x64xf32>
    %77 = arith.addf %75, %76 : vector<2x64xf32>
    %cst_40 = arith.constant 5.000000e-01 : f32
    %78 = vector.broadcast %cst_40 : f32 to vector<2x64xf32>
    %79 = arith.mulf %78, %77 : vector<2x64xf32>
    %80 = vector.extract_strided_slice %79 {offsets = [0, 0], sizes = [2, 32], strides = [1, 1]} : vector<2x64xf32> to vector<2x32xf32>
    %81 = vector.extract_strided_slice %79 {offsets = [0, 32], sizes = [2, 32], strides = [1, 1]} : vector<2x64xf32> to vector<2x32xf32>
    %82 = vector.extract_strided_slice %67 {offsets = [0, 64], sizes = [2, 32], strides = [1, 1]} : vector<2x96xf32> to vector<2x32xf32>
    %83 = vector.extract_strided_slice %69 {offsets = [0, 64], sizes = [2, 32], strides = [1, 1]} : vector<2x96xf32> to vector<2x32xf32>
    %84 = vector.broadcast %11 : vector<1x32xf32> to vector<2x32xf32>
    %85 = arith.addf %83, %84 : vector<2x32xf32>
    %86 = arith.mulf %80, %85 : vector<2x32xf32>
    %87 = arith.addf %82, %86 : vector<2x32xf32>
    %88 = math.tanh %87 : vector<2x32xf32>
    %cst_41 = arith.constant 1.000000e+00 : f32
    %89 = vector.broadcast %cst_41 : f32 to vector<2x32xf32>
    %90 = arith.subf %89, %81 : vector<2x32xf32>
    %91 = arith.mulf %90, %88 : vector<2x32xf32>
    %92 = arith.mulf %81, %62 : vector<2x32xf32>
    %93 = arith.addf %91, %92 : vector<2x32xf32>
    %c0_42 = arith.constant 0 : index
    %c2_43 = arith.constant 2 : index
    %c0_44 = arith.constant 0 : index
    %c0_45 = arith.constant 0 : index
    %94 = vector.load %arg20[%c0_42, %c2_43, %c0_44, %c0_45] : memref<2x8x2x32xf32, #tpu.memory_space<vmem>>, vector<1x1x2x32xf32>
    %95 = vector.shape_cast %94 : vector<1x1x2x32xf32> to vector<2x32xf32>
    %96 = vector.shape_cast %93 : vector<2x32xf32> to vector<1x1x2x32xf32>
    tpu.vector_store %arg20[%c0_42, %c2_43, %c0_44, %c0_45], %96 {strides = array<i32>} : memref<2x8x2x32xf32, #tpu.memory_space<vmem>>, vector<1x1x2x32xf32>,
    %c3 = arith.constant 3 : index
    %c0_46 = arith.constant 0 : index
    %c0_47 = arith.constant 0 : index
    %97 = vector.load %arg19[%c3, %c0_46, %c0_47] : memref<8x2x96xf32, #tpu.memory_space<vmem>>, vector<1x2x96xf32>
    %98 = vector.shape_cast %97 : vector<1x2x96xf32> to vector<2x96xf32>
    %99 = arith.truncf %93 : vector<2x32xf32> to vector<2x32xbf16>
    %cst_48 = arith.constant dense<0.000000e+00> : vector<2x96xf32>
    %100 = tpu.matmul %99, %10, %cst_48 {dimension_numbers = #tpu.dot_dimension_numbers<[1], [0], [0], [1], [0, 0, 1, 1], [], []>} : vector<2x32xbf16>, vector<32x96xbf16>, vector<2x96xf32> -> vector<2x96xf32>
    %101 = vector.extract_strided_slice %98 {offsets = [0, 0], sizes = [2, 64], strides = [1, 1]} : vector<2x96xf32> to vector<2x64xf32>
    %102 = vector.extract_strided_slice %100 {offsets = [0, 0], sizes = [2, 64], strides = [1, 1]} : vector<2x96xf32> to vector<2x64xf32>
    %103 = arith.addf %101, %102 : vector<2x64xf32>
    %cst_49 = arith.constant 5.000000e-01 : f32
    %104 = vector.broadcast %cst_49 : f32 to vector<2x64xf32>
    %105 = arith.mulf %104, %103 : vector<2x64xf32>
    %106 = math.tanh %105 : vector<2x64xf32>
    %cst_50 = arith.constant 1.000000e+00 : f32
    %107 = vector.broadcast %cst_50 : f32 to vector<2x64xf32>
    %108 = arith.addf %106, %107 : vector<2x64xf32>
    %cst_51 = arith.constant 5.000000e-01 : f32
    %109 = vector.broadcast %cst_51 : f32 to vector<2x64xf32>
    %110 = arith.mulf %109, %108 : vector<2x64xf32>
    %111 = vector.extract_strided_slice %110 {offsets = [0, 0], sizes = [2, 32], strides = [1, 1]} : vector<2x64xf32> to vector<2x32xf32>
    %112 = vector.extract_strided_slice %110 {offsets = [0, 32], sizes = [2, 32], strides = [1, 1]} : vector<2x64xf32> to vector<2x32xf32>
    %113 = vector.extract_strided_slice %98 {offsets = [0, 64], sizes = [2, 32], strides = [1, 1]} : vector<2x96xf32> to vector<2x32xf32>
    %114 = vector.extract_strided_slice %100 {offsets = [0, 64], sizes = [2, 32], strides = [1, 1]} : vector<2x96xf32> to vector<2x32xf32>
    %115 = vector.broadcast %11 : vector<1x32xf32> to vector<2x32xf32>
    %116 = arith.addf %114, %115 : vector<2x32xf32>
    %117 = arith.mulf %111, %116 : vector<2x32xf32>
    %118 = arith.addf %113, %117 : vector<2x32xf32>
    %119 = math.tanh %118 : vector<2x32xf32>
    %cst_52 = arith.constant 1.000000e+00 : f32
    %120 = vector.broadcast %cst_52 : f32 to vector<2x32xf32>
    %121 = arith.subf %120, %112 : vector<2x32xf32>
    %122 = arith.mulf %121, %119 : vector<2x32xf32>
    %123 = arith.mulf %112, %93 : vector<2x32xf32>
    %124 = arith.addf %122, %123 : vector<2x32xf32>
    %c0_53 = arith.constant 0 : index
    %c3_54 = arith.constant 3 : index
    %c0_55 = arith.constant 0 : index
    %c0_56 = arith.constant 0 : index
    %125 = vector.load %arg20[%c0_53, %c3_54, %c0_55, %c0_56] : memref<2x8x2x32xf32, #tpu.memory_space<vmem>>, vector<1x1x2x32xf32>
    %126 = vector.shape_cast %125 : vector<1x1x2x32xf32> to vector<2x32xf32>
    %127 = vector.shape_cast %124 : vector<2x32xf32> to vector<1x1x2x32xf32>
    tpu.vector_store %arg20[%c0_53, %c3_54, %c0_55, %c0_56], %127 {strides = array<i32>} : memref<2x8x2x32xf32, #tpu.memory_space<vmem>>, vector<1x1x2x32xf32>,
    %c4 = arith.constant 4 : index
    %c0_57 = arith.constant 0 : index
    %c0_58 = arith.constant 0 : index
    %128 = vector.load %arg19[%c4, %c0_57, %c0_58] : memref<8x2x96xf32, #tpu.memory_space<vmem>>, vector<1x2x96xf32>
    %129 = vector.shape_cast %128 : vector<1x2x96xf32> to vector<2x96xf32>
    %130 = arith.truncf %124 : vector<2x32xf32> to vector<2x32xbf16>
    %cst_59 = arith.constant dense<0.000000e+00> : vector<2x96xf32>
    %131 = tpu.matmul %130, %10, %cst_59 {dimension_numbers = #tpu.dot_dimension_numbers<[1], [0], [0], [1], [0, 0, 1, 1], [], []>} : vector<2x32xbf16>, vector<32x96xbf16>, vector<2x96xf32> -> vector<2x96xf32>
    %132 = vector.extract_strided_slice %129 {offsets = [0, 0], sizes = [2, 64], strides = [1, 1]} : vector<2x96xf32> to vector<2x64xf32>
    %133 = vector.extract_strided_slice %131 {offsets = [0, 0], sizes = [2, 64], strides = [1, 1]} : vector<2x96xf32> to vector<2x64xf32>
    %134 = arith.addf %132, %133 : vector<2x64xf32>
    %cst_60 = arith.constant 5.000000e-01 : f32
    %135 = vector.broadcast %cst_60 : f32 to vector<2x64xf32>
    %136 = arith.mulf %135, %134 : vector<2x64xf32>
    %137 = math.tanh %136 : vector<2x64xf32>
    %cst_61 = arith.constant 1.000000e+00 : f32
    %138 = vector.broadcast %cst_61 : f32 to vector<2x64xf32>
    %139 = arith.addf %137, %138 : vector<2x64xf32>
    %cst_62 = arith.constant 5.000000e-01 : f32
    %140 = vector.broadcast %cst_62 : f32 to vector<2x64xf32>
    %141 = arith.mulf %140, %139 : vector<2x64xf32>
    %142 = vector.extract_strided_slice %141 {offsets = [0, 0], sizes = [2, 32], strides = [1, 1]} : vector<2x64xf32> to vector<2x32xf32>
    %143 = vector.extract_strided_slice %141 {offsets = [0, 32], sizes = [2, 32], strides = [1, 1]} : vector<2x64xf32> to vector<2x32xf32>
    %144 = vector.extract_strided_slice %129 {offsets = [0, 64], sizes = [2, 32], strides = [1, 1]} : vector<2x96xf32> to vector<2x32xf32>
    %145 = vector.extract_strided_slice %131 {offsets = [0, 64], sizes = [2, 32], strides = [1, 1]} : vector<2x96xf32> to vector<2x32xf32>
    %146 = vector.broadcast %11 : vector<1x32xf32> to vector<2x32xf32>
    %147 = arith.addf %145, %146 : vector<2x32xf32>
    %148 = arith.mulf %142, %147 : vector<2x32xf32>
    %149 = arith.addf %144, %148 : vector<2x32xf32>
    %150 = math.tanh %149 : vector<2x32xf32>
    %cst_63 = arith.constant 1.000000e+00 : f32
    %151 = vector.broadcast %cst_63 : f32 to vector<2x32xf32>
    %152 = arith.subf %151, %143 : vector<2x32xf32>
    %153 = arith.mulf %152, %150 : vector<2x32xf32>
    %154 = arith.mulf %143, %124 : vector<2x32xf32>
    %155 = arith.addf %153, %154 : vector<2x32xf32>
    %c0_64 = arith.constant 0 : index
    %c4_65 = arith.constant 4 : index
    %c0_66 = arith.constant 0 : index
    %c0_67 = arith.constant 0 : index
    %156 = vector.load %arg20[%c0_64, %c4_65, %c0_66, %c0_67] : memref<2x8x2x32xf32, #tpu.memory_space<vmem>>, vector<1x1x2x32xf32>
    %157 = vector.shape_cast %156 : vector<1x1x2x32xf32> to vector<2x32xf32>
    %158 = vector.shape_cast %155 : vector<2x32xf32> to vector<1x1x2x32xf32>
    tpu.vector_store %arg20[%c0_64, %c4_65, %c0_66, %c0_67], %158 {strides = array<i32>} : memref<2x8x2x32xf32, #tpu.memory_space<vmem>>, vector<1x1x2x32xf32>,
    %c5 = arith.constant 5 : index
    %c0_68 = arith.constant 0 : index
    %c0_69 = arith.constant 0 : index
    %159 = vector.load %arg19[%c5, %c0_68, %c0_69] : memref<8x2x96xf32, #tpu.memory_space<vmem>>, vector<1x2x96xf32>
    %160 = vector.shape_cast %159 : vector<1x2x96xf32> to vector<2x96xf32>
    %161 = arith.truncf %155 : vector<2x32xf32> to vector<2x32xbf16>
    %cst_70 = arith.constant dense<0.000000e+00> : vector<2x96xf32>
    %162 = tpu.matmul %161, %10, %cst_70 {dimension_numbers = #tpu.dot_dimension_numbers<[1], [0], [0], [1], [0, 0, 1, 1], [], []>} : vector<2x32xbf16>, vector<32x96xbf16>, vector<2x96xf32> -> vector<2x96xf32>
    %163 = vector.extract_strided_slice %160 {offsets = [0, 0], sizes = [2, 64], strides = [1, 1]} : vector<2x96xf32> to vector<2x64xf32>
    %164 = vector.extract_strided_slice %162 {offsets = [0, 0], sizes = [2, 64], strides = [1, 1]} : vector<2x96xf32> to vector<2x64xf32>
    %165 = arith.addf %163, %164 : vector<2x64xf32>
    %cst_71 = arith.constant 5.000000e-01 : f32
    %166 = vector.broadcast %cst_71 : f32 to vector<2x64xf32>
    %167 = arith.mulf %166, %165 : vector<2x64xf32>
    %168 = math.tanh %167 : vector<2x64xf32>
    %cst_72 = arith.constant 1.000000e+00 : f32
    %169 = vector.broadcast %cst_72 : f32 to vector<2x64xf32>
    %170 = arith.addf %168, %169 : vector<2x64xf32>
    %cst_73 = arith.constant 5.000000e-01 : f32
    %171 = vector.broadcast %cst_73 : f32 to vector<2x64xf32>
    %172 = arith.mulf %171, %170 : vector<2x64xf32>
    %173 = vector.extract_strided_slice %172 {offsets = [0, 0], sizes = [2, 32], strides = [1, 1]} : vector<2x64xf32> to vector<2x32xf32>
    %174 = vector.extract_strided_slice %172 {offsets = [0, 32], sizes = [2, 32], strides = [1, 1]} : vector<2x64xf32> to vector<2x32xf32>
    %175 = vector.extract_strided_slice %160 {offsets = [0, 64], sizes = [2, 32], strides = [1, 1]} : vector<2x96xf32> to vector<2x32xf32>
    %176 = vector.extract_strided_slice %162 {offsets = [0, 64], sizes = [2, 32], strides = [1, 1]} : vector<2x96xf32> to vector<2x32xf32>
    %177 = vector.broadcast %11 : vector<1x32xf32> to vector<2x32xf32>
    %178 = arith.addf %176, %177 : vector<2x32xf32>
    %179 = arith.mulf %173, %178 : vector<2x32xf32>
    %180 = arith.addf %175, %179 : vector<2x32xf32>
    %181 = math.tanh %180 : vector<2x32xf32>
    %cst_74 = arith.constant 1.000000e+00 : f32
    %182 = vector.broadcast %cst_74 : f32 to vector<2x32xf32>
    %183 = arith.subf %182, %174 : vector<2x32xf32>
    %184 = arith.mulf %183, %181 : vector<2x32xf32>
    %185 = arith.mulf %174, %155 : vector<2x32xf32>
    %186 = arith.addf %184, %185 : vector<2x32xf32>
    %c0_75 = arith.constant 0 : index
    %c5_76 = arith.constant 5 : index
    %c0_77 = arith.constant 0 : index
    %c0_78 = arith.constant 0 : index
    %187 = vector.load %arg20[%c0_75, %c5_76, %c0_77, %c0_78] : memref<2x8x2x32xf32, #tpu.memory_space<vmem>>, vector<1x1x2x32xf32>
    %188 = vector.shape_cast %187 : vector<1x1x2x32xf32> to vector<2x32xf32>
    %189 = vector.shape_cast %186 : vector<2x32xf32> to vector<1x1x2x32xf32>
    tpu.vector_store %arg20[%c0_75, %c5_76, %c0_77, %c0_78], %189 {strides = array<i32>} : memref<2x8x2x32xf32, #tpu.memory_space<vmem>>, vector<1x1x2x32xf32>,
    %c6 = arith.constant 6 : index
    %c0_79 = arith.constant 0 : index
    %c0_80 = arith.constant 0 : index
    %190 = vector.load %arg19[%c6, %c0_79, %c0_80] : memref<8x2x96xf32, #tpu.memory_space<vmem>>, vector<1x2x96xf32>
    %191 = vector.shape_cast %190 : vector<1x2x96xf32> to vector<2x96xf32>
    %192 = arith.truncf %186 : vector<2x32xf32> to vector<2x32xbf16>
    %cst_81 = arith.constant dense<0.000000e+00> : vector<2x96xf32>
    %193 = tpu.matmul %192, %10, %cst_81 {dimension_numbers = #tpu.dot_dimension_numbers<[1], [0], [0], [1], [0, 0, 1, 1], [], []>} : vector<2x32xbf16>, vector<32x96xbf16>, vector<2x96xf32> -> vector<2x96xf32>
    %194 = vector.extract_strided_slice %191 {offsets = [0, 0], sizes = [2, 64], strides = [1, 1]} : vector<2x96xf32> to vector<2x64xf32>
    %195 = vector.extract_strided_slice %193 {offsets = [0, 0], sizes = [2, 64], strides = [1, 1]} : vector<2x96xf32> to vector<2x64xf32>
    %196 = arith.addf %194, %195 : vector<2x64xf32>
    %cst_82 = arith.constant 5.000000e-01 : f32
    %197 = vector.broadcast %cst_82 : f32 to vector<2x64xf32>
    %198 = arith.mulf %197, %196 : vector<2x64xf32>
    %199 = math.tanh %198 : vector<2x64xf32>
    %cst_83 = arith.constant 1.000000e+00 : f32
    %200 = vector.broadcast %cst_83 : f32 to vector<2x64xf32>
    %201 = arith.addf %199, %200 : vector<2x64xf32>
    %cst_84 = arith.constant 5.000000e-01 : f32
    %202 = vector.broadcast %cst_84 : f32 to vector<2x64xf32>
    %203 = arith.mulf %202, %201 : vector<2x64xf32>
    %204 = vector.extract_strided_slice %203 {offsets = [0, 0], sizes = [2, 32], strides = [1, 1]} : vector<2x64xf32> to vector<2x32xf32>
    %205 = vector.extract_strided_slice %203 {offsets = [0, 32], sizes = [2, 32], strides = [1, 1]} : vector<2x64xf32> to vector<2x32xf32>
    %206 = vector.extract_strided_slice %191 {offsets = [0, 64], sizes = [2, 32], strides = [1, 1]} : vector<2x96xf32> to vector<2x32xf32>
    %207 = vector.extract_strided_slice %193 {offsets = [0, 64], sizes = [2, 32], strides = [1, 1]} : vector<2x96xf32> to vector<2x32xf32>
    %208 = vector.broadcast %11 : vector<1x32xf32> to vector<2x32xf32>
    %209 = arith.addf %207, %208 : vector<2x32xf32>
    %210 = arith.mulf %204, %209 : vector<2x32xf32>
    %211 = arith.addf %206, %210 : vector<2x32xf32>
    %212 = math.tanh %211 : vector<2x32xf32>
    %cst_85 = arith.constant 1.000000e+00 : f32
    %213 = vector.broadcast %cst_85 : f32 to vector<2x32xf32>
    %214 = arith.subf %213, %205 : vector<2x32xf32>
    %215 = arith.mulf %214, %212 : vector<2x32xf32>
    %216 = arith.mulf %205, %186 : vector<2x32xf32>
    %217 = arith.addf %215, %216 : vector<2x32xf32>
    %c0_86 = arith.constant 0 : index
    %c6_87 = arith.constant 6 : index
    %c0_88 = arith.constant 0 : index
    %c0_89 = arith.constant 0 : index
    %218 = vector.load %arg20[%c0_86, %c6_87, %c0_88, %c0_89] : memref<2x8x2x32xf32, #tpu.memory_space<vmem>>, vector<1x1x2x32xf32>
    %219 = vector.shape_cast %218 : vector<1x1x2x32xf32> to vector<2x32xf32>
    %220 = vector.shape_cast %217 : vector<2x32xf32> to vector<1x1x2x32xf32>
    tpu.vector_store %arg20[%c0_86, %c6_87, %c0_88, %c0_89], %220 {strides = array<i32>} : memref<2x8x2x32xf32, #tpu.memory_space<vmem>>, vector<1x1x2x32xf32>,
    %c7 = arith.constant 7 : index
    %c0_90 = arith.constant 0 : index
    %c0_91 = arith.constant 0 : index
    %221 = vector.load %arg19[%c7, %c0_90, %c0_91] : memref<8x2x96xf32, #tpu.memory_space<vmem>>, vector<1x2x96xf32>
    %222 = vector.shape_cast %221 : vector<1x2x96xf32> to vector<2x96xf32>
    %223 = arith.truncf %217 : vector<2x32xf32> to vector<2x32xbf16>
    %cst_92 = arith.constant dense<0.000000e+00> : vector<2x96xf32>
    %224 = tpu.matmul %223, %10, %cst_92 {dimension_numbers = #tpu.dot_dimension_numbers<[1], [0], [0], [1], [0, 0, 1, 1], [], []>} : vector<2x32xbf16>, vector<32x96xbf16>, vector<2x96xf32> -> vector<2x96xf32>
    %225 = vector.extract_strided_slice %222 {offsets = [0, 0], sizes = [2, 64], strides = [1, 1]} : vector<2x96xf32> to vector<2x64xf32>
    %226 = vector.extract_strided_slice %224 {offsets = [0, 0], sizes = [2, 64], strides = [1, 1]} : vector<2x96xf32> to vector<2x64xf32>
    %227 = arith.addf %225, %226 : vector<2x64xf32>
    %cst_93 = arith.constant 5.000000e-01 : f32
    %228 = vector.broadcast %cst_93 : f32 to vector<2x64xf32>
    %229 = arith.mulf %228, %227 : vector<2x64xf32>
    %230 = math.tanh %229 : vector<2x64xf32>
    %cst_94 = arith.constant 1.000000e+00 : f32
    %231 = vector.broadcast %cst_94 : f32 to vector<2x64xf32>
    %232 = arith.addf %230, %231 : vector<2x64xf32>
    %cst_95 = arith.constant 5.000000e-01 : f32
    %233 = vector.broadcast %cst_95 : f32 to vector<2x64xf32>
    %234 = arith.mulf %233, %232 : vector<2x64xf32>
    %235 = vector.extract_strided_slice %234 {offsets = [0, 0], sizes = [2, 32], strides = [1, 1]} : vector<2x64xf32> to vector<2x32xf32>
    %236 = vector.extract_strided_slice %234 {offsets = [0, 32], sizes = [2, 32], strides = [1, 1]} : vector<2x64xf32> to vector<2x32xf32>
    %237 = vector.extract_strided_slice %222 {offsets = [0, 64], sizes = [2, 32], strides = [1, 1]} : vector<2x96xf32> to vector<2x32xf32>
    %238 = vector.extract_strided_slice %224 {offsets = [0, 64], sizes = [2, 32], strides = [1, 1]} : vector<2x96xf32> to vector<2x32xf32>
    %239 = vector.broadcast %11 : vector<1x32xf32> to vector<2x32xf32>
    %240 = arith.addf %238, %239 : vector<2x32xf32>
    %241 = arith.mulf %235, %240 : vector<2x32xf32>
    %242 = arith.addf %237, %241 : vector<2x32xf32>
    %243 = math.tanh %242 : vector<2x32xf32>
    %cst_96 = arith.constant 1.000000e+00 : f32
    %244 = vector.broadcast %cst_96 : f32 to vector<2x32xf32>
    %245 = arith.subf %244, %236 : vector<2x32xf32>
    %246 = arith.mulf %245, %243 : vector<2x32xf32>
    %247 = arith.mulf %236, %217 : vector<2x32xf32>
    %248 = arith.addf %246, %247 : vector<2x32xf32>
    %c0_97 = arith.constant 0 : index
    %c7_98 = arith.constant 7 : index
    %c0_99 = arith.constant 0 : index
    %c0_100 = arith.constant 0 : index
    %249 = vector.load %arg20[%c0_97, %c7_98, %c0_99, %c0_100] : memref<2x8x2x32xf32, #tpu.memory_space<vmem>>, vector<1x1x2x32xf32>
    %250 = vector.shape_cast %249 : vector<1x1x2x32xf32> to vector<2x32xf32>
    %251 = vector.shape_cast %248 : vector<2x32xf32> to vector<1x1x2x32xf32>
    tpu.vector_store %arg20[%c0_97, %c7_98, %c0_99, %c0_100], %251 {strides = array<i32>} : memref<2x8x2x32xf32, #tpu.memory_space<vmem>>, vector<1x1x2x32xf32>,
    %c0_101 = arith.constant 0 : index
    %c0_102 = arith.constant 0 : index
    %c0_103 = arith.constant 0 : index
    %c0_104 = arith.constant 0 : index
    %252 = vector.load %arg20[%c0_101, %c0_102, %c0_103, %c0_104] : memref<2x8x2x32xf32, #tpu.memory_space<vmem>>, vector<1x8x2x32xf32>
    %253 = vector.shape_cast %252 : vector<1x8x2x32xf32> to vector<8x2x32xf32>
    %254 = vector.shape_cast %253 : vector<8x2x32xf32> to vector<16x32xf32>
    %255 = arith.truncf %254 : vector<16x32xf32> to vector<16x32xbf16>
    %c0_105 = arith.constant 0 : index
    %c0_106 = arith.constant 0 : index
    %256 = vector.load %arg5[%c0_105, %c0_106] : memref<32x96xbf16, #tpu.memory_space<vmem>>, vector<32x96xbf16>
    %cst_107 = arith.constant dense<0.000000e+00> : vector<16x96xf32>
    %257 = tpu.matmul %255, %256, %cst_107 {dimension_numbers = #tpu.dot_dimension_numbers<[1], [0], [0], [1], [0, 0, 1, 1], [], []>} : vector<16x32xbf16>, vector<32x96xbf16>, vector<16x96xf32> -> vector<16x96xf32>
    %c0_108 = arith.constant 0 : index
    %c0_109 = arith.constant 0 : index
    %258 = vector.load %arg7[%c0_108, %c0_109] : memref<1x96xf32, #tpu.memory_space<vmem>>, vector<1x96xf32>
    %259 = vector.broadcast %258 : vector<1x96xf32> to vector<16x96xf32>
    %260 = arith.addf %257, %259 : vector<16x96xf32>
    %261 = vector.shape_cast %260 : vector<16x96xf32> to vector<8x2x96xf32>
    %c0_110 = arith.constant 0 : index
    %c0_111 = arith.constant 0 : index
    %c0_112 = arith.constant 0 : index
    %262 = vector.load %arg19[%c0_110, %c0_111, %c0_112] : memref<8x2x96xf32, #tpu.memory_space<vmem>>, vector<8x2x96xf32>
    tpu.vector_store %arg19[%c0_110, %c0_111, %c0_112], %261 {strides = array<i32>} : memref<8x2x96xf32, #tpu.memory_space<vmem>>, vector<8x2x96xf32>,
    %c0_113 = arith.constant 0 : index
    %c0_114 = arith.constant 0 : index
    %263 = vector.load %arg6[%c0_113, %c0_114] : memref<32x96xbf16, #tpu.memory_space<vmem>>, vector<32x96xbf16>
    %c0_115 = arith.constant 0 : index
    %c0_116 = arith.constant 0 : index
    %264 = vector.load %arg8[%c0_115, %c0_116] : memref<1x32xf32, #tpu.memory_space<vmem>>, vector<1x32xf32>
    %c0_117 = arith.constant 0 : index
    %c0_118 = arith.constant 0 : index
    %c0_119 = arith.constant 0 : index
    %265 = vector.load %arg19[%c0_117, %c0_118, %c0_119] : memref<8x2x96xf32, #tpu.memory_space<vmem>>, vector<1x2x96xf32>
    %266 = vector.shape_cast %265 : vector<1x2x96xf32> to vector<2x96xf32>
    %267 = vector.extract_strided_slice %266 {offsets = [0, 0], sizes = [2, 64], strides = [1, 1]} : vector<2x96xf32> to vector<2x64xf32>
    %cst_120 = arith.constant 5.000000e-01 : f32
    %268 = vector.broadcast %cst_120 : f32 to vector<2x64xf32>
    %269 = arith.mulf %268, %267 : vector<2x64xf32>
    %270 = math.tanh %269 : vector<2x64xf32>
    %cst_121 = arith.constant 1.000000e+00 : f32
    %271 = vector.broadcast %cst_121 : f32 to vector<2x64xf32>
    %272 = arith.addf %270, %271 : vector<2x64xf32>
    %cst_122 = arith.constant 5.000000e-01 : f32
    %273 = vector.broadcast %cst_122 : f32 to vector<2x64xf32>
    %274 = arith.mulf %273, %272 : vector<2x64xf32>
    %275 = vector.extract_strided_slice %274 {offsets = [0, 0], sizes = [2, 32], strides = [1, 1]} : vector<2x64xf32> to vector<2x32xf32>
    %276 = vector.extract_strided_slice %274 {offsets = [0, 32], sizes = [2, 32], strides = [1, 1]} : vector<2x64xf32> to vector<2x32xf32>
    %277 = vector.extract_strided_slice %266 {offsets = [0, 64], sizes = [2, 32], strides = [1, 1]} : vector<2x96xf32> to vector<2x32xf32>
    %278 = vector.broadcast %264 : vector<1x32xf32> to vector<2x32xf32>
    %279 = arith.mulf %275, %278 : vector<2x32xf32>
    %280 = arith.addf %277, %279 : vector<2x32xf32>
    %281 = math.tanh %280 : vector<2x32xf32>
    %cst_123 = arith.constant 1.000000e+00 : f32
    %282 = vector.broadcast %cst_123 : f32 to vector<2x32xf32>
    %283 = arith.subf %282, %276 : vector<2x32xf32>
    %284 = arith.mulf %283, %281 : vector<2x32xf32>
    %c1_124 = arith.constant 1 : index
    %c0_125 = arith.constant 0 : index
    %c0_126 = arith.constant 0 : index
    %c0_127 = arith.constant 0 : index
    %285 = vector.load %arg20[%c1_124, %c0_125, %c0_126, %c0_127] : memref<2x8x2x32xf32, #tpu.memory_space<vmem>>, vector<1x1x2x32xf32>
    %286 = vector.shape_cast %285 : vector<1x1x2x32xf32> to vector<2x32xf32>
    %287 = vector.shape_cast %284 : vector<2x32xf32> to vector<1x1x2x32xf32>
    tpu.vector_store %arg20[%c1_124, %c0_125, %c0_126, %c0_127], %287 {strides = array<i32>} : memref<2x8x2x32xf32, #tpu.memory_space<vmem>>, vector<1x1x2x32xf32>,
    %c1_128 = arith.constant 1 : index
    %c0_129 = arith.constant 0 : index
    %c0_130 = arith.constant 0 : index
    %288 = vector.load %arg19[%c1_128, %c0_129, %c0_130] : memref<8x2x96xf32, #tpu.memory_space<vmem>>, vector<1x2x96xf32>
    %289 = vector.shape_cast %288 : vector<1x2x96xf32> to vector<2x96xf32>
    %290 = arith.truncf %284 : vector<2x32xf32> to vector<2x32xbf16>
    %cst_131 = arith.constant dense<0.000000e+00> : vector<2x96xf32>
    %291 = tpu.matmul %290, %263, %cst_131 {dimension_numbers = #tpu.dot_dimension_numbers<[1], [0], [0], [1], [0, 0, 1, 1], [], []>} : vector<2x32xbf16>, vector<32x96xbf16>, vector<2x96xf32> -> vector<2x96xf32>
    %292 = vector.extract_strided_slice %289 {offsets = [0, 0], sizes = [2, 64], strides = [1, 1]} : vector<2x96xf32> to vector<2x64xf32>
    %293 = vector.extract_strided_slice %291 {offsets = [0, 0], sizes = [2, 64], strides = [1, 1]} : vector<2x96xf32> to vector<2x64xf32>
    %294 = arith.addf %292, %293 : vector<2x64xf32>
    %cst_132 = arith.constant 5.000000e-01 : f32
    %295 = vector.broadcast %cst_132 : f32 to vector<2x64xf32>
    %296 = arith.mulf %295, %294 : vector<2x64xf32>
    %297 = math.tanh %296 : vector<2x64xf32>
    %cst_133 = arith.constant 1.000000e+00 : f32
    %298 = vector.broadcast %cst_133 : f32 to vector<2x64xf32>
    %299 = arith.addf %297, %298 : vector<2x64xf32>
    %cst_134 = arith.constant 5.000000e-01 : f32
    %300 = vector.broadcast %cst_134 : f32 to vector<2x64xf32>
    %301 = arith.mulf %300, %299 : vector<2x64xf32>
    %302 = vector.extract_strided_slice %301 {offsets = [0, 0], sizes = [2, 32], strides = [1, 1]} : vector<2x64xf32> to vector<2x32xf32>
    %303 = vector.extract_strided_slice %301 {offsets = [0, 32], sizes = [2, 32], strides = [1, 1]} : vector<2x64xf32> to vector<2x32xf32>
    %304 = vector.extract_strided_slice %289 {offsets = [0, 64], sizes = [2, 32], strides = [1, 1]} : vector<2x96xf32> to vector<2x32xf32>
    %305 = vector.extract_strided_slice %291 {offsets = [0, 64], sizes = [2, 32], strides = [1, 1]} : vector<2x96xf32> to vector<2x32xf32>
    %306 = vector.broadcast %264 : vector<1x32xf32> to vector<2x32xf32>
    %307 = arith.addf %305, %306 : vector<2x32xf32>
    %308 = arith.mulf %302, %307 : vector<2x32xf32>
    %309 = arith.addf %304, %308 : vector<2x32xf32>
    %310 = math.tanh %309 : vector<2x32xf32>
    %cst_135 = arith.constant 1.000000e+00 : f32
    %311 = vector.broadcast %cst_135 : f32 to vector<2x32xf32>
    %312 = arith.subf %311, %303 : vector<2x32xf32>
    %313 = arith.mulf %312, %310 : vector<2x32xf32>
    %314 = arith.mulf %303, %284 : vector<2x32xf32>
    %315 = arith.addf %313, %314 : vector<2x32xf32>
    %c1_136 = arith.constant 1 : index
    %c1_137 = arith.constant 1 : index
    %c0_138 = arith.constant 0 : index
    %c0_139 = arith.constant 0 : index
    %316 = vector.load %arg20[%c1_136, %c1_137, %c0_138, %c0_139] : memref<2x8x2x32xf32, #tpu.memory_space<vmem>>, vector<1x1x2x32xf32>
    %317 = vector.shape_cast %316 : vector<1x1x2x32xf32> to vector<2x32xf32>
    %318 = vector.shape_cast %315 : vector<2x32xf32> to vector<1x1x2x32xf32>
    tpu.vector_store %arg20[%c1_136, %c1_137, %c0_138, %c0_139], %318 {strides = array<i32>} : memref<2x8x2x32xf32, #tpu.memory_space<vmem>>, vector<1x1x2x32xf32>,
    %c2_140 = arith.constant 2 : index
    %c0_141 = arith.constant 0 : index
    %c0_142 = arith.constant 0 : index
    %319 = vector.load %arg19[%c2_140, %c0_141, %c0_142] : memref<8x2x96xf32, #tpu.memory_space<vmem>>, vector<1x2x96xf32>
    %320 = vector.shape_cast %319 : vector<1x2x96xf32> to vector<2x96xf32>
    %321 = arith.truncf %315 : vector<2x32xf32> to vector<2x32xbf16>
    %cst_143 = arith.constant dense<0.000000e+00> : vector<2x96xf32>
    %322 = tpu.matmul %321, %263, %cst_143 {dimension_numbers = #tpu.dot_dimension_numbers<[1], [0], [0], [1], [0, 0, 1, 1], [], []>} : vector<2x32xbf16>, vector<32x96xbf16>, vector<2x96xf32> -> vector<2x96xf32>
    %323 = vector.extract_strided_slice %320 {offsets = [0, 0], sizes = [2, 64], strides = [1, 1]} : vector<2x96xf32> to vector<2x64xf32>
    %324 = vector.extract_strided_slice %322 {offsets = [0, 0], sizes = [2, 64], strides = [1, 1]} : vector<2x96xf32> to vector<2x64xf32>
    %325 = arith.addf %323, %324 : vector<2x64xf32>
    %cst_144 = arith.constant 5.000000e-01 : f32
    %326 = vector.broadcast %cst_144 : f32 to vector<2x64xf32>
    %327 = arith.mulf %326, %325 : vector<2x64xf32>
    %328 = math.tanh %327 : vector<2x64xf32>
    %cst_145 = arith.constant 1.000000e+00 : f32
    %329 = vector.broadcast %cst_145 : f32 to vector<2x64xf32>
    %330 = arith.addf %328, %329 : vector<2x64xf32>
    %cst_146 = arith.constant 5.000000e-01 : f32
    %331 = vector.broadcast %cst_146 : f32 to vector<2x64xf32>
    %332 = arith.mulf %331, %330 : vector<2x64xf32>
    %333 = vector.extract_strided_slice %332 {offsets = [0, 0], sizes = [2, 32], strides = [1, 1]} : vector<2x64xf32> to vector<2x32xf32>
    %334 = vector.extract_strided_slice %332 {offsets = [0, 32], sizes = [2, 32], strides = [1, 1]} : vector<2x64xf32> to vector<2x32xf32>
    %335 = vector.extract_strided_slice %320 {offsets = [0, 64], sizes = [2, 32], strides = [1, 1]} : vector<2x96xf32> to vector<2x32xf32>
    %336 = vector.extract_strided_slice %322 {offsets = [0, 64], sizes = [2, 32], strides = [1, 1]} : vector<2x96xf32> to vector<2x32xf32>
    %337 = vector.broadcast %264 : vector<1x32xf32> to vector<2x32xf32>
    %338 = arith.addf %336, %337 : vector<2x32xf32>
    %339 = arith.mulf %333, %338 : vector<2x32xf32>
    %340 = arith.addf %335, %339 : vector<2x32xf32>
    %341 = math.tanh %340 : vector<2x32xf32>
    %cst_147 = arith.constant 1.000000e+00 : f32
    %342 = vector.broadcast %cst_147 : f32 to vector<2x32xf32>
    %343 = arith.subf %342, %334 : vector<2x32xf32>
    %344 = arith.mulf %343, %341 : vector<2x32xf32>
    %345 = arith.mulf %334, %315 : vector<2x32xf32>
    %346 = arith.addf %344, %345 : vector<2x32xf32>
    %c1_148 = arith.constant 1 : index
    %c2_149 = arith.constant 2 : index
    %c0_150 = arith.constant 0 : index
    %c0_151 = arith.constant 0 : index
    %347 = vector.load %arg20[%c1_148, %c2_149, %c0_150, %c0_151] : memref<2x8x2x32xf32, #tpu.memory_space<vmem>>, vector<1x1x2x32xf32>
    %348 = vector.shape_cast %347 : vector<1x1x2x32xf32> to vector<2x32xf32>
    %349 = vector.shape_cast %346 : vector<2x32xf32> to vector<1x1x2x32xf32>
    tpu.vector_store %arg20[%c1_148, %c2_149, %c0_150, %c0_151], %349 {strides = array<i32>} : memref<2x8x2x32xf32, #tpu.memory_space<vmem>>, vector<1x1x2x32xf32>,
    %c3_152 = arith.constant 3 : index
    %c0_153 = arith.constant 0 : index
    %c0_154 = arith.constant 0 : index
    %350 = vector.load %arg19[%c3_152, %c0_153, %c0_154] : memref<8x2x96xf32, #tpu.memory_space<vmem>>, vector<1x2x96xf32>
    %351 = vector.shape_cast %350 : vector<1x2x96xf32> to vector<2x96xf32>
    %352 = arith.truncf %346 : vector<2x32xf32> to vector<2x32xbf16>
    %cst_155 = arith.constant dense<0.000000e+00> : vector<2x96xf32>
    %353 = tpu.matmul %352, %263, %cst_155 {dimension_numbers = #tpu.dot_dimension_numbers<[1], [0], [0], [1], [0, 0, 1, 1], [], []>} : vector<2x32xbf16>, vector<32x96xbf16>, vector<2x96xf32> -> vector<2x96xf32>
    %354 = vector.extract_strided_slice %351 {offsets = [0, 0], sizes = [2, 64], strides = [1, 1]} : vector<2x96xf32> to vector<2x64xf32>
    %355 = vector.extract_strided_slice %353 {offsets = [0, 0], sizes = [2, 64], strides = [1, 1]} : vector<2x96xf32> to vector<2x64xf32>
    %356 = arith.addf %354, %355 : vector<2x64xf32>
    %cst_156 = arith.constant 5.000000e-01 : f32
    %357 = vector.broadcast %cst_156 : f32 to vector<2x64xf32>
    %358 = arith.mulf %357, %356 : vector<2x64xf32>
    %359 = math.tanh %358 : vector<2x64xf32>
    %cst_157 = arith.constant 1.000000e+00 : f32
    %360 = vector.broadcast %cst_157 : f32 to vector<2x64xf32>
    %361 = arith.addf %359, %360 : vector<2x64xf32>
    %cst_158 = arith.constant 5.000000e-01 : f32
    %362 = vector.broadcast %cst_158 : f32 to vector<2x64xf32>
    %363 = arith.mulf %362, %361 : vector<2x64xf32>
    %364 = vector.extract_strided_slice %363 {offsets = [0, 0], sizes = [2, 32], strides = [1, 1]} : vector<2x64xf32> to vector<2x32xf32>
    %365 = vector.extract_strided_slice %363 {offsets = [0, 32], sizes = [2, 32], strides = [1, 1]} : vector<2x64xf32> to vector<2x32xf32>
    %366 = vector.extract_strided_slice %351 {offsets = [0, 64], sizes = [2, 32], strides = [1, 1]} : vector<2x96xf32> to vector<2x32xf32>
    %367 = vector.extract_strided_slice %353 {offsets = [0, 64], sizes = [2, 32], strides = [1, 1]} : vector<2x96xf32> to vector<2x32xf32>
    %368 = vector.broadcast %264 : vector<1x32xf32> to vector<2x32xf32>
    %369 = arith.addf %367, %368 : vector<2x32xf32>
    %370 = arith.mulf %364, %369 : vector<2x32xf32>
    %371 = arith.addf %366, %370 : vector<2x32xf32>
    %372 = math.tanh %371 : vector<2x32xf32>
    %cst_159 = arith.constant 1.000000e+00 : f32
    %373 = vector.broadcast %cst_159 : f32 to vector<2x32xf32>
    %374 = arith.subf %373, %365 : vector<2x32xf32>
    %375 = arith.mulf %374, %372 : vector<2x32xf32>
    %376 = arith.mulf %365, %346 : vector<2x32xf32>
    %377 = arith.addf %375, %376 : vector<2x32xf32>
    %c1_160 = arith.constant 1 : index
    %c3_161 = arith.constant 3 : index
    %c0_162 = arith.constant 0 : index
    %c0_163 = arith.constant 0 : index
    %378 = vector.load %arg20[%c1_160, %c3_161, %c0_162, %c0_163] : memref<2x8x2x32xf32, #tpu.memory_space<vmem>>, vector<1x1x2x32xf32>
    %379 = vector.shape_cast %378 : vector<1x1x2x32xf32> to vector<2x32xf32>
    %380 = vector.shape_cast %377 : vector<2x32xf32> to vector<1x1x2x32xf32>
    tpu.vector_store %arg20[%c1_160, %c3_161, %c0_162, %c0_163], %380 {strides = array<i32>} : memref<2x8x2x32xf32, #tpu.memory_space<vmem>>, vector<1x1x2x32xf32>,
    %c4_164 = arith.constant 4 : index
    %c0_165 = arith.constant 0 : index
    %c0_166 = arith.constant 0 : index
    %381 = vector.load %arg19[%c4_164, %c0_165, %c0_166] : memref<8x2x96xf32, #tpu.memory_space<vmem>>, vector<1x2x96xf32>
    %382 = vector.shape_cast %381 : vector<1x2x96xf32> to vector<2x96xf32>
    %383 = arith.truncf %377 : vector<2x32xf32> to vector<2x32xbf16>
    %cst_167 = arith.constant dense<0.000000e+00> : vector<2x96xf32>
    %384 = tpu.matmul %383, %263, %cst_167 {dimension_numbers = #tpu.dot_dimension_numbers<[1], [0], [0], [1], [0, 0, 1, 1], [], []>} : vector<2x32xbf16>, vector<32x96xbf16>, vector<2x96xf32> -> vector<2x96xf32>
    %385 = vector.extract_strided_slice %382 {offsets = [0, 0], sizes = [2, 64], strides = [1, 1]} : vector<2x96xf32> to vector<2x64xf32>
    %386 = vector.extract_strided_slice %384 {offsets = [0, 0], sizes = [2, 64], strides = [1, 1]} : vector<2x96xf32> to vector<2x64xf32>
    %387 = arith.addf %385, %386 : vector<2x64xf32>
    %cst_168 = arith.constant 5.000000e-01 : f32
    %388 = vector.broadcast %cst_168 : f32 to vector<2x64xf32>
    %389 = arith.mulf %388, %387 : vector<2x64xf32>
    %390 = math.tanh %389 : vector<2x64xf32>
    %cst_169 = arith.constant 1.000000e+00 : f32
    %391 = vector.broadcast %cst_169 : f32 to vector<2x64xf32>
    %392 = arith.addf %390, %391 : vector<2x64xf32>
    %cst_170 = arith.constant 5.000000e-01 : f32
    %393 = vector.broadcast %cst_170 : f32 to vector<2x64xf32>
    %394 = arith.mulf %393, %392 : vector<2x64xf32>
    %395 = vector.extract_strided_slice %394 {offsets = [0, 0], sizes = [2, 32], strides = [1, 1]} : vector<2x64xf32> to vector<2x32xf32>
    %396 = vector.extract_strided_slice %394 {offsets = [0, 32], sizes = [2, 32], strides = [1, 1]} : vector<2x64xf32> to vector<2x32xf32>
    %397 = vector.extract_strided_slice %382 {offsets = [0, 64], sizes = [2, 32], strides = [1, 1]} : vector<2x96xf32> to vector<2x32xf32>
    %398 = vector.extract_strided_slice %384 {offsets = [0, 64], sizes = [2, 32], strides = [1, 1]} : vector<2x96xf32> to vector<2x32xf32>
    %399 = vector.broadcast %264 : vector<1x32xf32> to vector<2x32xf32>
    %400 = arith.addf %398, %399 : vector<2x32xf32>
    %401 = arith.mulf %395, %400 : vector<2x32xf32>
    %402 = arith.addf %397, %401 : vector<2x32xf32>
    %403 = math.tanh %402 : vector<2x32xf32>
    %cst_171 = arith.constant 1.000000e+00 : f32
    %404 = vector.broadcast %cst_171 : f32 to vector<2x32xf32>
    %405 = arith.subf %404, %396 : vector<2x32xf32>
    %406 = arith.mulf %405, %403 : vector<2x32xf32>
    %407 = arith.mulf %396, %377 : vector<2x32xf32>
    %408 = arith.addf %406, %407 : vector<2x32xf32>
    %c1_172 = arith.constant 1 : index
    %c4_173 = arith.constant 4 : index
    %c0_174 = arith.constant 0 : index
    %c0_175 = arith.constant 0 : index
    %409 = vector.load %arg20[%c1_172, %c4_173, %c0_174, %c0_175] : memref<2x8x2x32xf32, #tpu.memory_space<vmem>>, vector<1x1x2x32xf32>
    %410 = vector.shape_cast %409 : vector<1x1x2x32xf32> to vector<2x32xf32>
    %411 = vector.shape_cast %408 : vector<2x32xf32> to vector<1x1x2x32xf32>
    tpu.vector_store %arg20[%c1_172, %c4_173, %c0_174, %c0_175], %411 {strides = array<i32>} : memref<2x8x2x32xf32, #tpu.memory_space<vmem>>, vector<1x1x2x32xf32>,
    %c5_176 = arith.constant 5 : index
    %c0_177 = arith.constant 0 : index
    %c0_178 = arith.constant 0 : index
    %412 = vector.load %arg19[%c5_176, %c0_177, %c0_178] : memref<8x2x96xf32, #tpu.memory_space<vmem>>, vector<1x2x96xf32>
    %413 = vector.shape_cast %412 : vector<1x2x96xf32> to vector<2x96xf32>
    %414 = arith.truncf %408 : vector<2x32xf32> to vector<2x32xbf16>
    %cst_179 = arith.constant dense<0.000000e+00> : vector<2x96xf32>
    %415 = tpu.matmul %414, %263, %cst_179 {dimension_numbers = #tpu.dot_dimension_numbers<[1], [0], [0], [1], [0, 0, 1, 1], [], []>} : vector<2x32xbf16>, vector<32x96xbf16>, vector<2x96xf32> -> vector<2x96xf32>
    %416 = vector.extract_strided_slice %413 {offsets = [0, 0], sizes = [2, 64], strides = [1, 1]} : vector<2x96xf32> to vector<2x64xf32>
    %417 = vector.extract_strided_slice %415 {offsets = [0, 0], sizes = [2, 64], strides = [1, 1]} : vector<2x96xf32> to vector<2x64xf32>
    %418 = arith.addf %416, %417 : vector<2x64xf32>
    %cst_180 = arith.constant 5.000000e-01 : f32
    %419 = vector.broadcast %cst_180 : f32 to vector<2x64xf32>
    %420 = arith.mulf %419, %418 : vector<2x64xf32>
    %421 = math.tanh %420 : vector<2x64xf32>
    %cst_181 = arith.constant 1.000000e+00 : f32
    %422 = vector.broadcast %cst_181 : f32 to vector<2x64xf32>
    %423 = arith.addf %421, %422 : vector<2x64xf32>
    %cst_182 = arith.constant 5.000000e-01 : f32
    %424 = vector.broadcast %cst_182 : f32 to vector<2x64xf32>
    %425 = arith.mulf %424, %423 : vector<2x64xf32>
    %426 = vector.extract_strided_slice %425 {offsets = [0, 0], sizes = [2, 32], strides = [1, 1]} : vector<2x64xf32> to vector<2x32xf32>
    %427 = vector.extract_strided_slice %425 {offsets = [0, 32], sizes = [2, 32], strides = [1, 1]} : vector<2x64xf32> to vector<2x32xf32>
    %428 = vector.extract_strided_slice %413 {offsets = [0, 64], sizes = [2, 32], strides = [1, 1]} : vector<2x96xf32> to vector<2x32xf32>
    %429 = vector.extract_strided_slice %415 {offsets = [0, 64], sizes = [2, 32], strides = [1, 1]} : vector<2x96xf32> to vector<2x32xf32>
    %430 = vector.broadcast %264 : vector<1x32xf32> to vector<2x32xf32>
    %431 = arith.addf %429, %430 : vector<2x32xf32>
    %432 = arith.mulf %426, %431 : vector<2x32xf32>
    %433 = arith.addf %428, %432 : vector<2x32xf32>
    %434 = math.tanh %433 : vector<2x32xf32>
    %cst_183 = arith.constant 1.000000e+00 : f32
    %435 = vector.broadcast %cst_183 : f32 to vector<2x32xf32>
    %436 = arith.subf %435, %427 : vector<2x32xf32>
    %437 = arith.mulf %436, %434 : vector<2x32xf32>
    %438 = arith.mulf %427, %408 : vector<2x32xf32>
    %439 = arith.addf %437, %438 : vector<2x32xf32>
    %c1_184 = arith.constant 1 : index
    %c5_185 = arith.constant 5 : index
    %c0_186 = arith.constant 0 : index
    %c0_187 = arith.constant 0 : index
    %440 = vector.load %arg20[%c1_184, %c5_185, %c0_186, %c0_187] : memref<2x8x2x32xf32, #tpu.memory_space<vmem>>, vector<1x1x2x32xf32>
    %441 = vector.shape_cast %440 : vector<1x1x2x32xf32> to vector<2x32xf32>
    %442 = vector.shape_cast %439 : vector<2x32xf32> to vector<1x1x2x32xf32>
    tpu.vector_store %arg20[%c1_184, %c5_185, %c0_186, %c0_187], %442 {strides = array<i32>} : memref<2x8x2x32xf32, #tpu.memory_space<vmem>>, vector<1x1x2x32xf32>,
    %c6_188 = arith.constant 6 : index
    %c0_189 = arith.constant 0 : index
    %c0_190 = arith.constant 0 : index
    %443 = vector.load %arg19[%c6_188, %c0_189, %c0_190] : memref<8x2x96xf32, #tpu.memory_space<vmem>>, vector<1x2x96xf32>
    %444 = vector.shape_cast %443 : vector<1x2x96xf32> to vector<2x96xf32>
    %445 = arith.truncf %439 : vector<2x32xf32> to vector<2x32xbf16>
    %cst_191 = arith.constant dense<0.000000e+00> : vector<2x96xf32>
    %446 = tpu.matmul %445, %263, %cst_191 {dimension_numbers = #tpu.dot_dimension_numbers<[1], [0], [0], [1], [0, 0, 1, 1], [], []>} : vector<2x32xbf16>, vector<32x96xbf16>, vector<2x96xf32> -> vector<2x96xf32>
    %447 = vector.extract_strided_slice %444 {offsets = [0, 0], sizes = [2, 64], strides = [1, 1]} : vector<2x96xf32> to vector<2x64xf32>
    %448 = vector.extract_strided_slice %446 {offsets = [0, 0], sizes = [2, 64], strides = [1, 1]} : vector<2x96xf32> to vector<2x64xf32>
    %449 = arith.addf %447, %448 : vector<2x64xf32>
    %cst_192 = arith.constant 5.000000e-01 : f32
    %450 = vector.broadcast %cst_192 : f32 to vector<2x64xf32>
    %451 = arith.mulf %450, %449 : vector<2x64xf32>
    %452 = math.tanh %451 : vector<2x64xf32>
    %cst_193 = arith.constant 1.000000e+00 : f32
    %453 = vector.broadcast %cst_193 : f32 to vector<2x64xf32>
    %454 = arith.addf %452, %453 : vector<2x64xf32>
    %cst_194 = arith.constant 5.000000e-01 : f32
    %455 = vector.broadcast %cst_194 : f32 to vector<2x64xf32>
    %456 = arith.mulf %455, %454 : vector<2x64xf32>
    %457 = vector.extract_strided_slice %456 {offsets = [0, 0], sizes = [2, 32], strides = [1, 1]} : vector<2x64xf32> to vector<2x32xf32>
    %458 = vector.extract_strided_slice %456 {offsets = [0, 32], sizes = [2, 32], strides = [1, 1]} : vector<2x64xf32> to vector<2x32xf32>
    %459 = vector.extract_strided_slice %444 {offsets = [0, 64], sizes = [2, 32], strides = [1, 1]} : vector<2x96xf32> to vector<2x32xf32>
    %460 = vector.extract_strided_slice %446 {offsets = [0, 64], sizes = [2, 32], strides = [1, 1]} : vector<2x96xf32> to vector<2x32xf32>
    %461 = vector.broadcast %264 : vector<1x32xf32> to vector<2x32xf32>
    %462 = arith.addf %460, %461 : vector<2x32xf32>
    %463 = arith.mulf %457, %462 : vector<2x32xf32>
    %464 = arith.addf %459, %463 : vector<2x32xf32>
    %465 = math.tanh %464 : vector<2x32xf32>
    %cst_195 = arith.constant 1.000000e+00 : f32
    %466 = vector.broadcast %cst_195 : f32 to vector<2x32xf32>
    %467 = arith.subf %466, %458 : vector<2x32xf32>
    %468 = arith.mulf %467, %465 : vector<2x32xf32>
    %469 = arith.mulf %458, %439 : vector<2x32xf32>
    %470 = arith.addf %468, %469 : vector<2x32xf32>
    %c1_196 = arith.constant 1 : index
    %c6_197 = arith.constant 6 : index
    %c0_198 = arith.constant 0 : index
    %c0_199 = arith.constant 0 : index
    %471 = vector.load %arg20[%c1_196, %c6_197, %c0_198, %c0_199] : memref<2x8x2x32xf32, #tpu.memory_space<vmem>>, vector<1x1x2x32xf32>
    %472 = vector.shape_cast %471 : vector<1x1x2x32xf32> to vector<2x32xf32>
    %473 = vector.shape_cast %470 : vector<2x32xf32> to vector<1x1x2x32xf32>
    tpu.vector_store %arg20[%c1_196, %c6_197, %c0_198, %c0_199], %473 {strides = array<i32>} : memref<2x8x2x32xf32, #tpu.memory_space<vmem>>, vector<1x1x2x32xf32>,
    %c7_200 = arith.constant 7 : index
    %c0_201 = arith.constant 0 : index
    %c0_202 = arith.constant 0 : index
    %474 = vector.load %arg19[%c7_200, %c0_201, %c0_202] : memref<8x2x96xf32, #tpu.memory_space<vmem>>, vector<1x2x96xf32>
    %475 = vector.shape_cast %474 : vector<1x2x96xf32> to vector<2x96xf32>
    %476 = arith.truncf %470 : vector<2x32xf32> to vector<2x32xbf16>
    %cst_203 = arith.constant dense<0.000000e+00> : vector<2x96xf32>
    %477 = tpu.matmul %476, %263, %cst_203 {dimension_numbers = #tpu.dot_dimension_numbers<[1], [0], [0], [1], [0, 0, 1, 1], [], []>} : vector<2x32xbf16>, vector<32x96xbf16>, vector<2x96xf32> -> vector<2x96xf32>
    %478 = vector.extract_strided_slice %475 {offsets = [0, 0], sizes = [2, 64], strides = [1, 1]} : vector<2x96xf32> to vector<2x64xf32>
    %479 = vector.extract_strided_slice %477 {offsets = [0, 0], sizes = [2, 64], strides = [1, 1]} : vector<2x96xf32> to vector<2x64xf32>
    %480 = arith.addf %478, %479 : vector<2x64xf32>
    %cst_204 = arith.constant 5.000000e-01 : f32
    %481 = vector.broadcast %cst_204 : f32 to vector<2x64xf32>
    %482 = arith.mulf %481, %480 : vector<2x64xf32>
    %483 = math.tanh %482 : vector<2x64xf32>
    %cst_205 = arith.constant 1.000000e+00 : f32
    %484 = vector.broadcast %cst_205 : f32 to vector<2x64xf32>
    %485 = arith.addf %483, %484 : vector<2x64xf32>
    %cst_206 = arith.constant 5.000000e-01 : f32
    %486 = vector.broadcast %cst_206 : f32 to vector<2x64xf32>
    %487 = arith.mulf %486, %485 : vector<2x64xf32>
    %488 = vector.extract_strided_slice %487 {offsets = [0, 0], sizes = [2, 32], strides = [1, 1]} : vector<2x64xf32> to vector<2x32xf32>
    %489 = vector.extract_strided_slice %487 {offsets = [0, 32], sizes = [2, 32], strides = [1, 1]} : vector<2x64xf32> to vector<2x32xf32>
    %490 = vector.extract_strided_slice %475 {offsets = [0, 64], sizes = [2, 32], strides = [1, 1]} : vector<2x96xf32> to vector<2x32xf32>
    %491 = vector.extract_strided_slice %477 {offsets = [0, 64], sizes = [2, 32], strides = [1, 1]} : vector<2x96xf32> to vector<2x32xf32>
    %492 = vector.broadcast %264 : vector<1x32xf32> to vector<2x32xf32>
    %493 = arith.addf %491, %492 : vector<2x32xf32>
    %494 = arith.mulf %488, %493 : vector<2x32xf32>
    %495 = arith.addf %490, %494 : vector<2x32xf32>
    %496 = math.tanh %495 : vector<2x32xf32>
    %cst_207 = arith.constant 1.000000e+00 : f32
    %497 = vector.broadcast %cst_207 : f32 to vector<2x32xf32>
    %498 = arith.subf %497, %489 : vector<2x32xf32>
    %499 = arith.mulf %498, %496 : vector<2x32xf32>
    %500 = arith.mulf %489, %470 : vector<2x32xf32>
    %501 = arith.addf %499, %500 : vector<2x32xf32>
    %c1_208 = arith.constant 1 : index
    %c7_209 = arith.constant 7 : index
    %c0_210 = arith.constant 0 : index
    %c0_211 = arith.constant 0 : index
    %502 = vector.load %arg20[%c1_208, %c7_209, %c0_210, %c0_211] : memref<2x8x2x32xf32, #tpu.memory_space<vmem>>, vector<1x1x2x32xf32>
    %503 = vector.shape_cast %502 : vector<1x1x2x32xf32> to vector<2x32xf32>
    %504 = vector.shape_cast %501 : vector<2x32xf32> to vector<1x1x2x32xf32>
    tpu.vector_store %arg20[%c1_208, %c7_209, %c0_210, %c0_211], %504 {strides = array<i32>} : memref<2x8x2x32xf32, #tpu.memory_space<vmem>>, vector<1x1x2x32xf32>,
    %c1_212 = arith.constant 1 : index
    %c0_213 = arith.constant 0 : index
    %c0_214 = arith.constant 0 : index
    %c0_215 = arith.constant 0 : index
    %505 = vector.load %arg20[%c1_212, %c0_213, %c0_214, %c0_215] : memref<2x8x2x32xf32, #tpu.memory_space<vmem>>, vector<1x8x2x32xf32>
    %506 = vector.shape_cast %505 : vector<1x8x2x32xf32> to vector<8x2x32xf32>
    %507 = vector.shape_cast %506 : vector<8x2x32xf32> to vector<16x32xf32>
    %508 = arith.truncf %507 : vector<16x32xf32> to vector<16x32xbf16>
    %c0_216 = arith.constant 0 : index
    %c0_217 = arith.constant 0 : index
    %509 = vector.load %arg9[%c0_216, %c0_217] : memref<32x96xbf16, #tpu.memory_space<vmem>>, vector<32x96xbf16>
    %cst_218 = arith.constant dense<0.000000e+00> : vector<16x96xf32>
    %510 = tpu.matmul %508, %509, %cst_218 {dimension_numbers = #tpu.dot_dimension_numbers<[1], [0], [0], [1], [0, 0, 1, 1], [], []>} : vector<16x32xbf16>, vector<32x96xbf16>, vector<16x96xf32> -> vector<16x96xf32>
    %c0_219 = arith.constant 0 : index
    %c0_220 = arith.constant 0 : index
    %511 = vector.load %arg11[%c0_219, %c0_220] : memref<1x96xf32, #tpu.memory_space<vmem>>, vector<1x96xf32>
    %512 = vector.broadcast %511 : vector<1x96xf32> to vector<16x96xf32>
    %513 = arith.addf %510, %512 : vector<16x96xf32>
    %514 = vector.shape_cast %513 : vector<16x96xf32> to vector<8x2x96xf32>
    %c0_221 = arith.constant 0 : index
    %c0_222 = arith.constant 0 : index
    %c0_223 = arith.constant 0 : index
    %515 = vector.load %arg19[%c0_221, %c0_222, %c0_223] : memref<8x2x96xf32, #tpu.memory_space<vmem>>, vector<8x2x96xf32>
    tpu.vector_store %arg19[%c0_221, %c0_222, %c0_223], %514 {strides = array<i32>} : memref<8x2x96xf32, #tpu.memory_space<vmem>>, vector<8x2x96xf32>,
    %c0_224 = arith.constant 0 : index
    %c0_225 = arith.constant 0 : index
    %516 = vector.load %arg10[%c0_224, %c0_225] : memref<32x96xbf16, #tpu.memory_space<vmem>>, vector<32x96xbf16>
    %c0_226 = arith.constant 0 : index
    %c0_227 = arith.constant 0 : index
    %517 = vector.load %arg12[%c0_226, %c0_227] : memref<1x32xf32, #tpu.memory_space<vmem>>, vector<1x32xf32>
    %c0_228 = arith.constant 0 : index
    %c0_229 = arith.constant 0 : index
    %c0_230 = arith.constant 0 : index
    %518 = vector.load %arg19[%c0_228, %c0_229, %c0_230] : memref<8x2x96xf32, #tpu.memory_space<vmem>>, vector<1x2x96xf32>
    %519 = vector.shape_cast %518 : vector<1x2x96xf32> to vector<2x96xf32>
    %520 = vector.extract_strided_slice %519 {offsets = [0, 0], sizes = [2, 64], strides = [1, 1]} : vector<2x96xf32> to vector<2x64xf32>
    %cst_231 = arith.constant 5.000000e-01 : f32
    %521 = vector.broadcast %cst_231 : f32 to vector<2x64xf32>
    %522 = arith.mulf %521, %520 : vector<2x64xf32>
    %523 = math.tanh %522 : vector<2x64xf32>
    %cst_232 = arith.constant 1.000000e+00 : f32
    %524 = vector.broadcast %cst_232 : f32 to vector<2x64xf32>
    %525 = arith.addf %523, %524 : vector<2x64xf32>
    %cst_233 = arith.constant 5.000000e-01 : f32
    %526 = vector.broadcast %cst_233 : f32 to vector<2x64xf32>
    %527 = arith.mulf %526, %525 : vector<2x64xf32>
    %528 = vector.extract_strided_slice %527 {offsets = [0, 0], sizes = [2, 32], strides = [1, 1]} : vector<2x64xf32> to vector<2x32xf32>
    %529 = vector.extract_strided_slice %527 {offsets = [0, 32], sizes = [2, 32], strides = [1, 1]} : vector<2x64xf32> to vector<2x32xf32>
    %530 = vector.extract_strided_slice %519 {offsets = [0, 64], sizes = [2, 32], strides = [1, 1]} : vector<2x96xf32> to vector<2x32xf32>
    %531 = vector.broadcast %517 : vector<1x32xf32> to vector<2x32xf32>
    %532 = arith.mulf %528, %531 : vector<2x32xf32>
    %533 = arith.addf %530, %532 : vector<2x32xf32>
    %534 = math.tanh %533 : vector<2x32xf32>
    %cst_234 = arith.constant 1.000000e+00 : f32
    %535 = vector.broadcast %cst_234 : f32 to vector<2x32xf32>
    %536 = arith.subf %535, %529 : vector<2x32xf32>
    %537 = arith.mulf %536, %534 : vector<2x32xf32>
    %c1_235 = arith.constant 1 : index
    %c0_236 = arith.constant 0 : index
    %c0_237 = arith.constant 0 : index
    %538 = vector.load %arg19[%c1_235, %c0_236, %c0_237] : memref<8x2x96xf32, #tpu.memory_space<vmem>>, vector<1x2x96xf32>
    %539 = vector.shape_cast %538 : vector<1x2x96xf32> to vector<2x96xf32>
    %540 = arith.truncf %537 : vector<2x32xf32> to vector<2x32xbf16>
    %cst_238 = arith.constant dense<0.000000e+00> : vector<2x96xf32>
    %541 = tpu.matmul %540, %516, %cst_238 {dimension_numbers = #tpu.dot_dimension_numbers<[1], [0], [0], [1], [0, 0, 1, 1], [], []>} : vector<2x32xbf16>, vector<32x96xbf16>, vector<2x96xf32> -> vector<2x96xf32>
    %542 = vector.extract_strided_slice %539 {offsets = [0, 0], sizes = [2, 64], strides = [1, 1]} : vector<2x96xf32> to vector<2x64xf32>
    %543 = vector.extract_strided_slice %541 {offsets = [0, 0], sizes = [2, 64], strides = [1, 1]} : vector<2x96xf32> to vector<2x64xf32>
    %544 = arith.addf %542, %543 : vector<2x64xf32>
    %cst_239 = arith.constant 5.000000e-01 : f32
    %545 = vector.broadcast %cst_239 : f32 to vector<2x64xf32>
    %546 = arith.mulf %545, %544 : vector<2x64xf32>
    %547 = math.tanh %546 : vector<2x64xf32>
    %cst_240 = arith.constant 1.000000e+00 : f32
    %548 = vector.broadcast %cst_240 : f32 to vector<2x64xf32>
    %549 = arith.addf %547, %548 : vector<2x64xf32>
    %cst_241 = arith.constant 5.000000e-01 : f32
    %550 = vector.broadcast %cst_241 : f32 to vector<2x64xf32>
    %551 = arith.mulf %550, %549 : vector<2x64xf32>
    %552 = vector.extract_strided_slice %551 {offsets = [0, 0], sizes = [2, 32], strides = [1, 1]} : vector<2x64xf32> to vector<2x32xf32>
    %553 = vector.extract_strided_slice %551 {offsets = [0, 32], sizes = [2, 32], strides = [1, 1]} : vector<2x64xf32> to vector<2x32xf32>
    %554 = vector.extract_strided_slice %539 {offsets = [0, 64], sizes = [2, 32], strides = [1, 1]} : vector<2x96xf32> to vector<2x32xf32>
    %555 = vector.extract_strided_slice %541 {offsets = [0, 64], sizes = [2, 32], strides = [1, 1]} : vector<2x96xf32> to vector<2x32xf32>
    %556 = vector.broadcast %517 : vector<1x32xf32> to vector<2x32xf32>
    %557 = arith.addf %555, %556 : vector<2x32xf32>
    %558 = arith.mulf %552, %557 : vector<2x32xf32>
    %559 = arith.addf %554, %558 : vector<2x32xf32>
    %560 = math.tanh %559 : vector<2x32xf32>
    %cst_242 = arith.constant 1.000000e+00 : f32
    %561 = vector.broadcast %cst_242 : f32 to vector<2x32xf32>
    %562 = arith.subf %561, %553 : vector<2x32xf32>
    %563 = arith.mulf %562, %560 : vector<2x32xf32>
    %564 = arith.mulf %553, %537 : vector<2x32xf32>
    %565 = arith.addf %563, %564 : vector<2x32xf32>
    %c2_243 = arith.constant 2 : index
    %c0_244 = arith.constant 0 : index
    %c0_245 = arith.constant 0 : index
    %566 = vector.load %arg19[%c2_243, %c0_244, %c0_245] : memref<8x2x96xf32, #tpu.memory_space<vmem>>, vector<1x2x96xf32>
    %567 = vector.shape_cast %566 : vector<1x2x96xf32> to vector<2x96xf32>
    %568 = arith.truncf %565 : vector<2x32xf32> to vector<2x32xbf16>
    %cst_246 = arith.constant dense<0.000000e+00> : vector<2x96xf32>
    %569 = tpu.matmul %568, %516, %cst_246 {dimension_numbers = #tpu.dot_dimension_numbers<[1], [0], [0], [1], [0, 0, 1, 1], [], []>} : vector<2x32xbf16>, vector<32x96xbf16>, vector<2x96xf32> -> vector<2x96xf32>
    %570 = vector.extract_strided_slice %567 {offsets = [0, 0], sizes = [2, 64], strides = [1, 1]} : vector<2x96xf32> to vector<2x64xf32>
    %571 = vector.extract_strided_slice %569 {offsets = [0, 0], sizes = [2, 64], strides = [1, 1]} : vector<2x96xf32> to vector<2x64xf32>
    %572 = arith.addf %570, %571 : vector<2x64xf32>
    %cst_247 = arith.constant 5.000000e-01 : f32
    %573 = vector.broadcast %cst_247 : f32 to vector<2x64xf32>
    %574 = arith.mulf %573, %572 : vector<2x64xf32>
    %575 = math.tanh %574 : vector<2x64xf32>
    %cst_248 = arith.constant 1.000000e+00 : f32
    %576 = vector.broadcast %cst_248 : f32 to vector<2x64xf32>
    %577 = arith.addf %575, %576 : vector<2x64xf32>
    %cst_249 = arith.constant 5.000000e-01 : f32
    %578 = vector.broadcast %cst_249 : f32 to vector<2x64xf32>
    %579 = arith.mulf %578, %577 : vector<2x64xf32>
    %580 = vector.extract_strided_slice %579 {offsets = [0, 0], sizes = [2, 32], strides = [1, 1]} : vector<2x64xf32> to vector<2x32xf32>
    %581 = vector.extract_strided_slice %579 {offsets = [0, 32], sizes = [2, 32], strides = [1, 1]} : vector<2x64xf32> to vector<2x32xf32>
    %582 = vector.extract_strided_slice %567 {offsets = [0, 64], sizes = [2, 32], strides = [1, 1]} : vector<2x96xf32> to vector<2x32xf32>
    %583 = vector.extract_strided_slice %569 {offsets = [0, 64], sizes = [2, 32], strides = [1, 1]} : vector<2x96xf32> to vector<2x32xf32>
    %584 = vector.broadcast %517 : vector<1x32xf32> to vector<2x32xf32>
    %585 = arith.addf %583, %584 : vector<2x32xf32>
    %586 = arith.mulf %580, %585 : vector<2x32xf32>
    %587 = arith.addf %582, %586 : vector<2x32xf32>
    %588 = math.tanh %587 : vector<2x32xf32>
    %cst_250 = arith.constant 1.000000e+00 : f32
    %589 = vector.broadcast %cst_250 : f32 to vector<2x32xf32>
    %590 = arith.subf %589, %581 : vector<2x32xf32>
    %591 = arith.mulf %590, %588 : vector<2x32xf32>
    %592 = arith.mulf %581, %565 : vector<2x32xf32>
    %593 = arith.addf %591, %592 : vector<2x32xf32>
    %c3_251 = arith.constant 3 : index
    %c0_252 = arith.constant 0 : index
    %c0_253 = arith.constant 0 : index
    %594 = vector.load %arg19[%c3_251, %c0_252, %c0_253] : memref<8x2x96xf32, #tpu.memory_space<vmem>>, vector<1x2x96xf32>
    %595 = vector.shape_cast %594 : vector<1x2x96xf32> to vector<2x96xf32>
    %596 = arith.truncf %593 : vector<2x32xf32> to vector<2x32xbf16>
    %cst_254 = arith.constant dense<0.000000e+00> : vector<2x96xf32>
    %597 = tpu.matmul %596, %516, %cst_254 {dimension_numbers = #tpu.dot_dimension_numbers<[1], [0], [0], [1], [0, 0, 1, 1], [], []>} : vector<2x32xbf16>, vector<32x96xbf16>, vector<2x96xf32> -> vector<2x96xf32>
    %598 = vector.extract_strided_slice %595 {offsets = [0, 0], sizes = [2, 64], strides = [1, 1]} : vector<2x96xf32> to vector<2x64xf32>
    %599 = vector.extract_strided_slice %597 {offsets = [0, 0], sizes = [2, 64], strides = [1, 1]} : vector<2x96xf32> to vector<2x64xf32>
    %600 = arith.addf %598, %599 : vector<2x64xf32>
    %cst_255 = arith.constant 5.000000e-01 : f32
    %601 = vector.broadcast %cst_255 : f32 to vector<2x64xf32>
    %602 = arith.mulf %601, %600 : vector<2x64xf32>
    %603 = math.tanh %602 : vector<2x64xf32>
    %cst_256 = arith.constant 1.000000e+00 : f32
    %604 = vector.broadcast %cst_256 : f32 to vector<2x64xf32>
    %605 = arith.addf %603, %604 : vector<2x64xf32>
    %cst_257 = arith.constant 5.000000e-01 : f32
    %606 = vector.broadcast %cst_257 : f32 to vector<2x64xf32>
    %607 = arith.mulf %606, %605 : vector<2x64xf32>
    %608 = vector.extract_strided_slice %607 {offsets = [0, 0], sizes = [2, 32], strides = [1, 1]} : vector<2x64xf32> to vector<2x32xf32>
    %609 = vector.extract_strided_slice %607 {offsets = [0, 32], sizes = [2, 32], strides = [1, 1]} : vector<2x64xf32> to vector<2x32xf32>
    %610 = vector.extract_strided_slice %595 {offsets = [0, 64], sizes = [2, 32], strides = [1, 1]} : vector<2x96xf32> to vector<2x32xf32>
    %611 = vector.extract_strided_slice %597 {offsets = [0, 64], sizes = [2, 32], strides = [1, 1]} : vector<2x96xf32> to vector<2x32xf32>
    %612 = vector.broadcast %517 : vector<1x32xf32> to vector<2x32xf32>
    %613 = arith.addf %611, %612 : vector<2x32xf32>
    %614 = arith.mulf %608, %613 : vector<2x32xf32>
    %615 = arith.addf %610, %614 : vector<2x32xf32>
    %616 = math.tanh %615 : vector<2x32xf32>
    %cst_258 = arith.constant 1.000000e+00 : f32
    %617 = vector.broadcast %cst_258 : f32 to vector<2x32xf32>
    %618 = arith.subf %617, %609 : vector<2x32xf32>
    %619 = arith.mulf %618, %616 : vector<2x32xf32>
    %620 = arith.mulf %609, %593 : vector<2x32xf32>
    %621 = arith.addf %619, %620 : vector<2x32xf32>
    %c4_259 = arith.constant 4 : index
    %c0_260 = arith.constant 0 : index
    %c0_261 = arith.constant 0 : index
    %622 = vector.load %arg19[%c4_259, %c0_260, %c0_261] : memref<8x2x96xf32, #tpu.memory_space<vmem>>, vector<1x2x96xf32>
    %623 = vector.shape_cast %622 : vector<1x2x96xf32> to vector<2x96xf32>
    %624 = arith.truncf %621 : vector<2x32xf32> to vector<2x32xbf16>
    %cst_262 = arith.constant dense<0.000000e+00> : vector<2x96xf32>
    %625 = tpu.matmul %624, %516, %cst_262 {dimension_numbers = #tpu.dot_dimension_numbers<[1], [0], [0], [1], [0, 0, 1, 1], [], []>} : vector<2x32xbf16>, vector<32x96xbf16>, vector<2x96xf32> -> vector<2x96xf32>
    %626 = vector.extract_strided_slice %623 {offsets = [0, 0], sizes = [2, 64], strides = [1, 1]} : vector<2x96xf32> to vector<2x64xf32>
    %627 = vector.extract_strided_slice %625 {offsets = [0, 0], sizes = [2, 64], strides = [1, 1]} : vector<2x96xf32> to vector<2x64xf32>
    %628 = arith.addf %626, %627 : vector<2x64xf32>
    %cst_263 = arith.constant 5.000000e-01 : f32
    %629 = vector.broadcast %cst_263 : f32 to vector<2x64xf32>
    %630 = arith.mulf %629, %628 : vector<2x64xf32>
    %631 = math.tanh %630 : vector<2x64xf32>
    %cst_264 = arith.constant 1.000000e+00 : f32
    %632 = vector.broadcast %cst_264 : f32 to vector<2x64xf32>
    %633 = arith.addf %631, %632 : vector<2x64xf32>
    %cst_265 = arith.constant 5.000000e-01 : f32
    %634 = vector.broadcast %cst_265 : f32 to vector<2x64xf32>
    %635 = arith.mulf %634, %633 : vector<2x64xf32>
    %636 = vector.extract_strided_slice %635 {offsets = [0, 0], sizes = [2, 32], strides = [1, 1]} : vector<2x64xf32> to vector<2x32xf32>
    %637 = vector.extract_strided_slice %635 {offsets = [0, 32], sizes = [2, 32], strides = [1, 1]} : vector<2x64xf32> to vector<2x32xf32>
    %638 = vector.extract_strided_slice %623 {offsets = [0, 64], sizes = [2, 32], strides = [1, 1]} : vector<2x96xf32> to vector<2x32xf32>
    %639 = vector.extract_strided_slice %625 {offsets = [0, 64], sizes = [2, 32], strides = [1, 1]} : vector<2x96xf32> to vector<2x32xf32>
    %640 = vector.broadcast %517 : vector<1x32xf32> to vector<2x32xf32>
    %641 = arith.addf %639, %640 : vector<2x32xf32>
    %642 = arith.mulf %636, %641 : vector<2x32xf32>
    %643 = arith.addf %638, %642 : vector<2x32xf32>
    %644 = math.tanh %643 : vector<2x32xf32>
    %cst_266 = arith.constant 1.000000e+00 : f32
    %645 = vector.broadcast %cst_266 : f32 to vector<2x32xf32>
    %646 = arith.subf %645, %637 : vector<2x32xf32>
    %647 = arith.mulf %646, %644 : vector<2x32xf32>
    %648 = arith.mulf %637, %621 : vector<2x32xf32>
    %649 = arith.addf %647, %648 : vector<2x32xf32>
    %c5_267 = arith.constant 5 : index
    %c0_268 = arith.constant 0 : index
    %c0_269 = arith.constant 0 : index
    %650 = vector.load %arg19[%c5_267, %c0_268, %c0_269] : memref<8x2x96xf32, #tpu.memory_space<vmem>>, vector<1x2x96xf32>
    %651 = vector.shape_cast %650 : vector<1x2x96xf32> to vector<2x96xf32>
    %652 = arith.truncf %649 : vector<2x32xf32> to vector<2x32xbf16>
    %cst_270 = arith.constant dense<0.000000e+00> : vector<2x96xf32>
    %653 = tpu.matmul %652, %516, %cst_270 {dimension_numbers = #tpu.dot_dimension_numbers<[1], [0], [0], [1], [0, 0, 1, 1], [], []>} : vector<2x32xbf16>, vector<32x96xbf16>, vector<2x96xf32> -> vector<2x96xf32>
    %654 = vector.extract_strided_slice %651 {offsets = [0, 0], sizes = [2, 64], strides = [1, 1]} : vector<2x96xf32> to vector<2x64xf32>
    %655 = vector.extract_strided_slice %653 {offsets = [0, 0], sizes = [2, 64], strides = [1, 1]} : vector<2x96xf32> to vector<2x64xf32>
    %656 = arith.addf %654, %655 : vector<2x64xf32>
    %cst_271 = arith.constant 5.000000e-01 : f32
    %657 = vector.broadcast %cst_271 : f32 to vector<2x64xf32>
    %658 = arith.mulf %657, %656 : vector<2x64xf32>
    %659 = math.tanh %658 : vector<2x64xf32>
    %cst_272 = arith.constant 1.000000e+00 : f32
    %660 = vector.broadcast %cst_272 : f32 to vector<2x64xf32>
    %661 = arith.addf %659, %660 : vector<2x64xf32>
    %cst_273 = arith.constant 5.000000e-01 : f32
    %662 = vector.broadcast %cst_273 : f32 to vector<2x64xf32>
    %663 = arith.mulf %662, %661 : vector<2x64xf32>
    %664 = vector.extract_strided_slice %663 {offsets = [0, 0], sizes = [2, 32], strides = [1, 1]} : vector<2x64xf32> to vector<2x32xf32>
    %665 = vector.extract_strided_slice %663 {offsets = [0, 32], sizes = [2, 32], strides = [1, 1]} : vector<2x64xf32> to vector<2x32xf32>
    %666 = vector.extract_strided_slice %651 {offsets = [0, 64], sizes = [2, 32], strides = [1, 1]} : vector<2x96xf32> to vector<2x32xf32>
    %667 = vector.extract_strided_slice %653 {offsets = [0, 64], sizes = [2, 32], strides = [1, 1]} : vector<2x96xf32> to vector<2x32xf32>
    %668 = vector.broadcast %517 : vector<1x32xf32> to vector<2x32xf32>
    %669 = arith.addf %667, %668 : vector<2x32xf32>
    %670 = arith.mulf %664, %669 : vector<2x32xf32>
    %671 = arith.addf %666, %670 : vector<2x32xf32>
    %672 = math.tanh %671 : vector<2x32xf32>
    %cst_274 = arith.constant 1.000000e+00 : f32
    %673 = vector.broadcast %cst_274 : f32 to vector<2x32xf32>
    %674 = arith.subf %673, %665 : vector<2x32xf32>
    %675 = arith.mulf %674, %672 : vector<2x32xf32>
    %676 = arith.mulf %665, %649 : vector<2x32xf32>
    %677 = arith.addf %675, %676 : vector<2x32xf32>
    %c6_275 = arith.constant 6 : index
    %c0_276 = arith.constant 0 : index
    %c0_277 = arith.constant 0 : index
    %678 = vector.load %arg19[%c6_275, %c0_276, %c0_277] : memref<8x2x96xf32, #tpu.memory_space<vmem>>, vector<1x2x96xf32>
    %679 = vector.shape_cast %678 : vector<1x2x96xf32> to vector<2x96xf32>
    %680 = arith.truncf %677 : vector<2x32xf32> to vector<2x32xbf16>
    %cst_278 = arith.constant dense<0.000000e+00> : vector<2x96xf32>
    %681 = tpu.matmul %680, %516, %cst_278 {dimension_numbers = #tpu.dot_dimension_numbers<[1], [0], [0], [1], [0, 0, 1, 1], [], []>} : vector<2x32xbf16>, vector<32x96xbf16>, vector<2x96xf32> -> vector<2x96xf32>
    %682 = vector.extract_strided_slice %679 {offsets = [0, 0], sizes = [2, 64], strides = [1, 1]} : vector<2x96xf32> to vector<2x64xf32>
    %683 = vector.extract_strided_slice %681 {offsets = [0, 0], sizes = [2, 64], strides = [1, 1]} : vector<2x96xf32> to vector<2x64xf32>
    %684 = arith.addf %682, %683 : vector<2x64xf32>
    %cst_279 = arith.constant 5.000000e-01 : f32
    %685 = vector.broadcast %cst_279 : f32 to vector<2x64xf32>
    %686 = arith.mulf %685, %684 : vector<2x64xf32>
    %687 = math.tanh %686 : vector<2x64xf32>
    %cst_280 = arith.constant 1.000000e+00 : f32
    %688 = vector.broadcast %cst_280 : f32 to vector<2x64xf32>
    %689 = arith.addf %687, %688 : vector<2x64xf32>
    %cst_281 = arith.constant 5.000000e-01 : f32
    %690 = vector.broadcast %cst_281 : f32 to vector<2x64xf32>
    %691 = arith.mulf %690, %689 : vector<2x64xf32>
    %692 = vector.extract_strided_slice %691 {offsets = [0, 0], sizes = [2, 32], strides = [1, 1]} : vector<2x64xf32> to vector<2x32xf32>
    %693 = vector.extract_strided_slice %691 {offsets = [0, 32], sizes = [2, 32], strides = [1, 1]} : vector<2x64xf32> to vector<2x32xf32>
    %694 = vector.extract_strided_slice %679 {offsets = [0, 64], sizes = [2, 32], strides = [1, 1]} : vector<2x96xf32> to vector<2x32xf32>
    %695 = vector.extract_strided_slice %681 {offsets = [0, 64], sizes = [2, 32], strides = [1, 1]} : vector<2x96xf32> to vector<2x32xf32>
    %696 = vector.broadcast %517 : vector<1x32xf32> to vector<2x32xf32>
    %697 = arith.addf %695, %696 : vector<2x32xf32>
    %698 = arith.mulf %692, %697 : vector<2x32xf32>
    %699 = arith.addf %694, %698 : vector<2x32xf32>
    %700 = math.tanh %699 : vector<2x32xf32>
    %cst_282 = arith.constant 1.000000e+00 : f32
    %701 = vector.broadcast %cst_282 : f32 to vector<2x32xf32>
    %702 = arith.subf %701, %693 : vector<2x32xf32>
    %703 = arith.mulf %702, %700 : vector<2x32xf32>
    %704 = arith.mulf %693, %677 : vector<2x32xf32>
    %705 = arith.addf %703, %704 : vector<2x32xf32>
    %c7_283 = arith.constant 7 : index
    %c0_284 = arith.constant 0 : index
    %c0_285 = arith.constant 0 : index
    %706 = vector.load %arg19[%c7_283, %c0_284, %c0_285] : memref<8x2x96xf32, #tpu.memory_space<vmem>>, vector<1x2x96xf32>
    %707 = vector.shape_cast %706 : vector<1x2x96xf32> to vector<2x96xf32>
    %708 = arith.truncf %705 : vector<2x32xf32> to vector<2x32xbf16>
    %cst_286 = arith.constant dense<0.000000e+00> : vector<2x96xf32>
    %709 = tpu.matmul %708, %516, %cst_286 {dimension_numbers = #tpu.dot_dimension_numbers<[1], [0], [0], [1], [0, 0, 1, 1], [], []>} : vector<2x32xbf16>, vector<32x96xbf16>, vector<2x96xf32> -> vector<2x96xf32>
    %710 = vector.extract_strided_slice %707 {offsets = [0, 0], sizes = [2, 64], strides = [1, 1]} : vector<2x96xf32> to vector<2x64xf32>
    %711 = vector.extract_strided_slice %709 {offsets = [0, 0], sizes = [2, 64], strides = [1, 1]} : vector<2x96xf32> to vector<2x64xf32>
    %712 = arith.addf %710, %711 : vector<2x64xf32>
    %cst_287 = arith.constant 5.000000e-01 : f32
    %713 = vector.broadcast %cst_287 : f32 to vector<2x64xf32>
    %714 = arith.mulf %713, %712 : vector<2x64xf32>
    %715 = math.tanh %714 : vector<2x64xf32>
    %cst_288 = arith.constant 1.000000e+00 : f32
    %716 = vector.broadcast %cst_288 : f32 to vector<2x64xf32>
    %717 = arith.addf %715, %716 : vector<2x64xf32>
    %cst_289 = arith.constant 5.000000e-01 : f32
    %718 = vector.broadcast %cst_289 : f32 to vector<2x64xf32>
    %719 = arith.mulf %718, %717 : vector<2x64xf32>
    %720 = vector.extract_strided_slice %719 {offsets = [0, 0], sizes = [2, 32], strides = [1, 1]} : vector<2x64xf32> to vector<2x32xf32>
    %721 = vector.extract_strided_slice %719 {offsets = [0, 32], sizes = [2, 32], strides = [1, 1]} : vector<2x64xf32> to vector<2x32xf32>
    %722 = vector.extract_strided_slice %707 {offsets = [0, 64], sizes = [2, 32], strides = [1, 1]} : vector<2x96xf32> to vector<2x32xf32>
    %723 = vector.extract_strided_slice %709 {offsets = [0, 64], sizes = [2, 32], strides = [1, 1]} : vector<2x96xf32> to vector<2x32xf32>
    %724 = vector.broadcast %517 : vector<1x32xf32> to vector<2x32xf32>
    %725 = arith.addf %723, %724 : vector<2x32xf32>
    %726 = arith.mulf %720, %725 : vector<2x32xf32>
    %727 = arith.addf %722, %726 : vector<2x32xf32>
    %728 = math.tanh %727 : vector<2x32xf32>
    %cst_290 = arith.constant 1.000000e+00 : f32
    %729 = vector.broadcast %cst_290 : f32 to vector<2x32xf32>
    %730 = arith.subf %729, %721 : vector<2x32xf32>
    %731 = arith.mulf %730, %728 : vector<2x32xf32>
    %732 = arith.mulf %721, %705 : vector<2x32xf32>
    %733 = arith.addf %731, %732 : vector<2x32xf32>
    %734 = vector.shape_cast %248 : vector<2x32xf32> to vector<1x2x32xf32>
    %735 = vector.shape_cast %501 : vector<2x32xf32> to vector<1x2x32xf32>
    %736 = vector.shape_cast %733 : vector<2x32xf32> to vector<1x2x32xf32>
    %737 = tpu.concatenate %734, %735, %736 in 0 : vector<1x2x32xf32>, vector<1x2x32xf32>, vector<1x2x32xf32> -> vector<3x2x32xf32>
    %c0_291 = arith.constant 0 : index
    %c0_292 = arith.constant 0 : index
    %c0_293 = arith.constant 0 : index
    %738 = vector.load %arg18[%c0_291, %c0_292, %c0_293] : memref<3x2x32xf32, #tpu.memory_space<vmem>>, vector<3x2x32xf32>
    tpu.vector_store %arg18[%c0_291, %c0_292, %c0_293], %737 {strides = array<i32>} : memref<3x2x32xf32, #tpu.memory_space<vmem>>, vector<3x2x32xf32>,
    %739 = arith.truncf %733 : vector<2x32xf32> to vector<2x32xbf16>
    %c0_294 = arith.constant 0 : index
    %c0_295 = arith.constant 0 : index
    %740 = vector.load %arg13[%c0_294, %c0_295] : memref<32x256xbf16, #tpu.memory_space<vmem>>, vector<32x256xbf16>
    %cst_296 = arith.constant dense<0.000000e+00> : vector<2x256xf32>
    %741 = tpu.matmul %739, %740, %cst_296 {dimension_numbers = #tpu.dot_dimension_numbers<[1], [0], [0], [1], [0, 0, 1, 1], [], []>} : vector<2x32xbf16>, vector<32x256xbf16>, vector<2x256xf32> -> vector<2x256xf32>
    %c0_297 = arith.constant 0 : index
    %c0_298 = arith.constant 0 : index
    %742 = vector.load %arg14[%c0_297, %c0_298] : memref<1x256xf32, #tpu.memory_space<vmem>>, vector<1x256xf32>
    %743 = vector.broadcast %742 : vector<1x256xf32> to vector<2x256xf32>
    %744 = arith.addf %741, %743 : vector<2x256xf32>
    %745 = arith.truncf %744 : vector<2x256xf32> to vector<2x256xbf16>
    %c0_299 = arith.constant 0 : index
    %c0_300 = arith.constant 0 : index
    %746 = vector.load %arg15[%c0_299, %c0_300] : memref<256x3xbf16, #tpu.memory_space<vmem>>, vector<256x3xbf16>
    %cst_301 = arith.constant dense<0.000000e+00> : vector<2x3xf32>
    %747 = tpu.matmul %745, %746, %cst_301 {dimension_numbers = #tpu.dot_dimension_numbers<[1], [0], [0], [1], [0, 0, 1, 1], [], []>} : vector<2x256xbf16>, vector<256x3xbf16>, vector<2x3xf32> -> vector<2x3xf32>
    %c0_302 = arith.constant 0 : index
    %c0_303 = arith.constant 0 : index
    %748 = vector.load %arg16[%c0_302, %c0_303] : memref<1x3xf32, #tpu.memory_space<vmem>>, vector<1x3xf32>
    %749 = vector.broadcast %748 : vector<1x3xf32> to vector<2x3xf32>
    %750 = arith.addf %747, %749 : vector<2x3xf32>
    %c0_304 = arith.constant 0 : index
    %c0_305 = arith.constant 0 : index
    %751 = vector.load %arg17[%c0_304, %c0_305] : memref<2x3xf32, #tpu.memory_space<vmem>>, vector<2x3xf32>
    tpu.vector_store %arg17[%c0_304, %c0_305], %750 {strides = array<i32>} : memref<2x3xf32, #tpu.memory_space<vmem>>, vector<2x3xf32>,
    return
  }
}

</mosaic_0001>

<llo_original>
// kernel: fwd.1
$region0: #{fwd.1}
  #allocation0 [shape = 'u32[]', space=smem, size = 0x4, offset = 0x4, fixed_abs, tag = 'smem constant byte address 0x4 - core index']
  #allocation1 [shape = 'u32[144,128]{1,0:T(1,128)}', space=vmem, size = 0x12000, scoped, tag = 'internal scratch']
  #allocation2 [shape = 'f32[8,2,96]{2,1,0:T(2,128)}', space=vmem, size = 0x2000, scoped, tag = 'scratch operand']
  #allocation3 [shape = 'f32[2,8,2,32]{3,2,1,0:T(2,128)}', space=vmem, size = 0x4000, scoped, tag = 'scratch operand']
  %s0 = inlined_call_operand.vmem [shape: f32[8,2,8], index: 0, kind: input, shape index: {}]
  %s1 = inlined_call_operand.hbm [shape: bf16[8,96], index: 1, kind: input, shape index: {}]
  %s2 = inlined_call_operand.hbm [shape: bf16[32,96], index: 2, kind: input, shape index: {}]
  %s3 = inlined_call_operand.hbm [shape: f32[1,96], index: 3, kind: input, shape index: {}]
  %s4 = inlined_call_operand.hbm [shape: f32[1,32], index: 4, kind: input, shape index: {}]
  %s5 = inlined_call_operand.hbm [shape: bf16[32,96], index: 5, kind: input, shape index: {}]
  %s6 = inlined_call_operand.vmem [shape: bf16[32,96], index: 6, kind: input, shape index: {}]
  %s7 = inlined_call_operand.hbm [shape: f32[1,96], index: 7, kind: input, shape index: {}]
  %s8 = inlined_call_operand.hbm [shape: f32[1,32], index: 8, kind: input, shape index: {}]
  %s9 = inlined_call_operand.vmem [shape: bf16[32,96], index: 9, kind: input, shape index: {}]
  %s10 = inlined_call_operand.vmem [shape: bf16[32,96], index: 10, kind: input, shape index: {}]
  %s11 = inlined_call_operand.hbm [shape: f32[1,96], index: 11, kind: input, shape index: {}]
  %s12 = inlined_call_operand.hbm [shape: f32[1,32], index: 12, kind: input, shape index: {}]
  %s13 = inlined_call_operand.vmem [shape: bf16[32,256], index: 13, kind: input, shape index: {}]
  %s14 = inlined_call_operand.vmem [shape: f32[1,256], index: 14, kind: input, shape index: {}]
  %s15 = inlined_call_operand.vmem [shape: bf16[256,3], index: 15, kind: input, shape index: {}]
  %s16 = inlined_call_operand.vmem [shape: f32[1,3], index: 16, kind: input, shape index: {}]
  %s17 = inlined_call_operand.hbm [shape: f32[2,3], index: 17, kind: output, shape index: {0}]
  %s18 = inlined_call_operand.hbm [shape: f32[3,2,32], index: 18, kind: output, shape index: {1}]
  %19 = xla_tuple %s17, %s18
  %s20 = sld [smem:[#allocation0]]
  $region122: #{fwd.1} parent=0
    _
  %s22 = ssub.s32 1, %s20
  %s23 = scalar_select 0, %s22, %s20
  $region1: #{fwd.1} parent=0
    #allocation4 [shape = 'u8[2048]{0}', space=vmem, size = 0x800, scoped, tag = 'input window, operand 1, single buffered']
    #allocation5 [shape = 's32[1]{0}', space=sflag, size = 0x4, scoped, tag = 'scoped memory for fwd.1']
    #allocation6 [shape = 's32[1]{0}', space=sflag, size = 0x4, scoped, tag = 'scoped memory for fwd.1']
    #allocation7 [shape = 'u8[8192]{0}', space=vmem, size = 0x2000, scoped, tag = 'input window, operand 2, single buffered']
    #allocation8 [shape = 's32[1]{0}', space=sflag, size = 0x4, scoped, tag = 'scoped memory for fwd.1']
    #allocation9 [shape = 'u8[512]{0}', space=vmem, size = 0x400, scoped, tag = 'input window, operand 3, single buffered']
    #allocation10 [shape = 'u8[512]{0}', space=vmem, size = 0x400, scoped, tag = 'input window, operand 4, single buffered']
    #allocation11 [shape = 's32[1]{0}', space=sflag, size = 0x4, scoped, tag = 'scoped memory for fwd.1']
    #allocation12 [shape = 'u8[8192]{0}', space=vmem, size = 0x2000, scoped, tag = 'input window, operand 5, single buffered']
    #allocation13 [shape = 'u8[512]{0}', space=vmem, size = 0x400, scoped, tag = 'input window, operand 7, single buffered']
    #allocation14 [shape = 's32[1]{0}', space=sflag, size = 0x4, scoped, tag = 'scoped memory for fwd.1']
    #allocation15 [shape = 'u8[512]{0}', space=vmem, size = 0x400, scoped, tag = 'input window, operand 8, single buffered']
    #allocation16 [shape = 'u8[512]{0}', space=vmem, size = 0x400, scoped, tag = 'input window, operand 11, single buffered']
    #allocation17 [shape = 's32[1]{0}', space=sflag, size = 0x4, scoped, tag = 'scoped memory for fwd.1']
    #allocation18 [shape = 'u8[512]{0}', space=vmem, size = 0x400, scoped, tag = 'input window, operand 12, single buffered']
    #allocation19 [shape = 'u8[1024]{0}', space=vmem, size = 0x400, scoped, tag = 'output window, operand 0, single buffered']
    #allocation20 [shape = 'u8[3072]{0}', space=vmem, size = 0xc00, scoped, tag = 'output window, operand 1, single buffered']
    #allocation21 [shape = 's32[1]{0}', space=sflag, size = 0x4, scoped, tag = 'scoped memory for fwd.1']
    %24 = vsyncpa [#allocation5], 0
    %25 = vsyncpa [#allocation8], 0
    %26 = vsyncpa [#allocation11], 0
    %27 = vsyncpa [#allocation14], 0
    %28 = vsyncpa [#allocation17], 0
    %29 = vsyncpa [#allocation6], 0
    %30 = vsyncpa [#allocation21], 0
    // Predicated region
    $region2: #{fwd.1} parent=1 // pred_check
      _
    $region3: #{fwd.1} parent=1 // pred_check_branch
      %32 = sbr.rel (0) target = $region5
    $region4: #{fwd.1} parent=1 // pred_region
      _
    $region5: #{fwd.1} parent=1 // pred_fallthru
      _
    // Predicated region
    $region6: #{fwd.1} parent=1 // pred_check
      _
    $region7: #{fwd.1} parent=1 // pred_check_branch
      %34 = sbr.rel (0) target = $region9
    $region8: #{fwd.1} parent=1 // pred_region
      %s36 = ssub.s32 64, 64
      %37 = vsyncadd [#allocation5], %s36
      %s39 = sshll.u32 [#allocation4], 4
      %s40 = int_to_ptr.vmem [resolvable:$true] %s39
      %42 = dma.hbm_to_vmem [thread:$0]  %s1, 64, %s40, [#allocation5]
    $region9: #{fwd.1} parent=1 // pred_fallthru
      _
    // Predicated region
    $region10: #{fwd.1} parent=1 // pred_check
      _
    $region11: #{fwd.1} parent=1 // pred_check_branch
      %44 = sbr.rel (0) target = $region13
    $region12: #{fwd.1} parent=1 // pred_region
      %s46 = ssub.s32 256, 256
      %47 = vsyncadd [#allocation8], %s46
      %s48 = sshll.u32 [#allocation7], 4
      %s49 = int_to_ptr.vmem [resolvable:$true] %s48
      %54 = dma.hbm_to_vmem [thread:$0]  %s2, 256, %s49, [#allocation8], 64, 64, 4
    $region13: #{fwd.1} parent=1 // pred_fallthru
      _
    // Predicated region
    $region14: #{fwd.1} parent=1 // pred_check
      _
    $region15: #{fwd.1} parent=1 // pred_check_branch
      %56 = sbr.rel (0) target = $region17
    $region16: #{fwd.1} parent=1 // pred_region
      %s58 = ssub.s32 16, 16
      %59 = vsyncadd [#allocation8], %s58
      %s61 = sshll.u32 [#allocation9], 4
      %s62 = int_to_ptr.vmem [resolvable:$true] %s61
      %64 = dma.hbm_to_vmem [thread:$0]  %s3, 16, %s62, [#allocation8]
    $region17: #{fwd.1} parent=1 // pred_fallthru
      _
    // Predicated region
    $region18: #{fwd.1} parent=1 // pred_check
      _
    $region19: #{fwd.1} parent=1 // pred_check_branch
      %66 = sbr.rel (0) target = $region21
    $region20: #{fwd.1} parent=1 // pred_region
      %s68 = ssub.s32 16, 16
      %69 = vsyncadd [#allocation11], %s68
      %s71 = sshll.u32 [#allocation10], 4
      %s72 = int_to_ptr.vmem [resolvable:$true] %s71
      %74 = dma.hbm_to_vmem [thread:$0]  %s4, 16, %s72, [#allocation11]
    $region21: #{fwd.1} parent=1 // pred_fallthru
      _
    // Predicated region
    $region22: #{fwd.1} parent=1 // pred_check
      _
    $region23: #{fwd.1} parent=1 // pred_check_branch
      %76 = sbr.rel (0) target = $region25
    $region24: #{fwd.1} parent=1 // pred_region
      %s78 = ssub.s32 256, 256
      %79 = vsyncadd [#allocation11], %s78
      %s80 = sshll.u32 [#allocation12], 4
      %s81 = int_to_ptr.vmem [resolvable:$true] %s80
      %86 = dma.hbm_to_vmem [thread:$0]  %s5, 256, %s81, [#allocation11], 64, 64, 4
    $region25: #{fwd.1} parent=1 // pred_fallthru
      _
    // Predicated region
    $region26: #{fwd.1} parent=1 // pred_check
      _
    $region27: #{fwd.1} parent=1 // pred_check_branch
      %88 = sbr.rel (0) target = $region29
    $region28: #{fwd.1} parent=1 // pred_region
      _
    $region29: #{fwd.1} parent=1 // pred_fallthru
      _
    // Predicated region
    $region30: #{fwd.1} parent=1 // pred_check
      _
    $region31: #{fwd.1} parent=1 // pred_check_branch
      %90 = sbr.rel (0) target = $region33
    $region32: #{fwd.1} parent=1 // pred_region
      %s92 = ssub.s32 16, 16
      %93 = vsyncadd [#allocation14], %s92
      %s95 = sshll.u32 [#allocation13], 4
      %s96 = int_to_ptr.vmem [resolvable:$true] %s95
      %98 = dma.hbm_to_vmem [thread:$0]  %s7, 16, %s96, [#allocation14]
    $region33: #{fwd.1} parent=1 // pred_fallthru
      _
    // Predicated region
    $region34: #{fwd.1} parent=1 // pred_check
      _
    $region35: #{fwd.1} parent=1 // pred_check_branch
      %100 = sbr.rel (0) target = $region37
    $region36: #{fwd.1} parent=1 // pred_region
      %s102 = ssub.s32 16, 16
      %103 = vsyncadd [#allocation14], %s102
      %s105 = sshll.u32 [#allocation15], 4
      %s106 = int_to_ptr.vmem [resolvable:$true] %s105
      %108 = dma.hbm_to_vmem [thread:$0]  %s8, 16, %s106, [#allocation14]
    $region37: #{fwd.1} parent=1 // pred_fallthru
      _
    // Predicated region
    $region38: #{fwd.1} parent=1 // pred_check
      _
    $region39: #{fwd.1} parent=1 // pred_check_branch
      %110 = sbr.rel (0) target = $region41
    $region40: #{fwd.1} parent=1 // pred_region
      _
    $region41: #{fwd.1} parent=1 // pred_fallthru
      _
    // Predicated region
    $region42: #{fwd.1} parent=1 // pred_check
      _
    $region43: #{fwd.1} parent=1 // pred_check_branch
      %112 = sbr.rel (0) target = $region45
    $region44: #{fwd.1} parent=1 // pred_region
      _
    $region45: #{fwd.1} parent=1 // pred_fallthru
      _
    // Predicated region
    $region46: #{fwd.1} parent=1 // pred_check
      _
    $region47: #{fwd.1} parent=1 // pred_check_branch
      %114 = sbr.rel (0) target = $region49
    $region48: #{fwd.1} parent=1 // pred_region
      %s116 = ssub.s32 16, 16
      %117 = vsyncadd [#allocation17], %s116
      %s119 = sshll.u32 [#allocation16], 4
      %s120 = int_to_ptr.vmem [resolvable:$true] %s119
      %122 = dma.hbm_to_vmem [thread:$0]  %s11, 16, %s120, [#allocation17]
    $region49: #{fwd.1} parent=1 // pred_fallthru
      _
    // Predicated region
    $region50: #{fwd.1} parent=1 // pred_check
      _
    $region51: #{fwd.1} parent=1 // pred_check_branch
      %124 = sbr.rel (0) target = $region53
    $region52: #{fwd.1} parent=1 // pred_region
      %s126 = ssub.s32 16, 16
      %127 = vsyncadd [#allocation17], %s126
      %s129 = sshll.u32 [#allocation18], 4
      %s130 = int_to_ptr.vmem [resolvable:$true] %s129
      %132 = dma.hbm_to_vmem [thread:$0]  %s12, 16, %s130, [#allocation17]
    $region53: #{fwd.1} parent=1 // pred_fallthru
      _
    // Predicated region
    $region54: #{fwd.1} parent=1 // pred_check
      _
    $region55: #{fwd.1} parent=1 // pred_check_branch
      %134 = sbr.rel (0) target = $region57
    $region56: #{fwd.1} parent=1 // pred_region
      _
    $region57: #{fwd.1} parent=1 // pred_fallthru
      _
    // Predicated region
    $region58: #{fwd.1} parent=1 // pred_check
      _
    $region59: #{fwd.1} parent=1 // pred_check_branch
      %136 = sbr.rel (0) target = $region61
    $region60: #{fwd.1} parent=1 // pred_region
      _
    $region61: #{fwd.1} parent=1 // pred_fallthru
      _
    // Predicated region
    $region62: #{fwd.1} parent=1 // pred_check
      _
    $region63: #{fwd.1} parent=1 // pred_check_branch
      %138 = sbr.rel (0) target = $region65
    $region64: #{fwd.1} parent=1 // pred_region
      _
    $region65: #{fwd.1} parent=1 // pred_fallthru
      _
    // Predicated region
    $region66: #{fwd.1} parent=1 // pred_check
      _
    $region67: #{fwd.1} parent=1 // pred_check_branch
      %140 = sbr.rel (0) target = $region69
    $region68: #{fwd.1} parent=1 // pred_region
      _
    $region69: #{fwd.1} parent=1 // pred_fallthru
      _
    // Predicated region
    $region70: #{fwd.1} parent=1 // pred_check
      _
    $region71: #{fwd.1} parent=1 // pred_check_branch
      %142 = sbr.rel (0) target = $region73
    $region72: #{fwd.1} parent=1 // pred_region
      %143 = dma.done [#allocation5], 64
    $region73: #{fwd.1} parent=1 // pred_fallthru
      _
    // Predicated region
    $region74: #{fwd.1} parent=1 // pred_check
      _
    $region75: #{fwd.1} parent=1 // pred_check_branch
      %145 = sbr.rel (0) target = $region77
    $region76: #{fwd.1} parent=1 // pred_region
      %146 = dma.done [#allocation8], 256
    $region77: #{fwd.1} parent=1 // pred_fallthru
      _
    // Predicated region
    $region78: #{fwd.1} parent=1 // pred_check
      _
    $region79: #{fwd.1} parent=1 // pred_check_branch
      %148 = sbr.rel (0) target = $region81
    $region80: #{fwd.1} parent=1 // pred_region
      %149 = dma.done [#allocation8], 16
    $region81: #{fwd.1} parent=1 // pred_fallthru
      _
    // Predicated region
    $region82: #{fwd.1} parent=1 // pred_check
      _
    $region83: #{fwd.1} parent=1 // pred_check_branch
      %151 = sbr.rel (0) target = $region85
    $region84: #{fwd.1} parent=1 // pred_region
      %152 = dma.done [#allocation11], 16
    $region85: #{fwd.1} parent=1 // pred_fallthru
      _
    // Predicated region
    $region86: #{fwd.1} parent=1 // pred_check
      _
    $region87: #{fwd.1} parent=1 // pred_check_branch
      %154 = sbr.rel (0) target = $region89
    $region88: #{fwd.1} parent=1 // pred_region
      %155 = dma.done [#allocation11], 256
    $region89: #{fwd.1} parent=1 // pred_fallthru
      _
    // Predicated region
    $region90: #{fwd.1} parent=1 // pred_check
      _
    $region91: #{fwd.1} parent=1 // pred_check_branch
      %157 = sbr.rel (0) target = $region93
    $region92: #{fwd.1} parent=1 // pred_region
      %158 = dma.done [#allocation14], 16
    $region93: #{fwd.1} parent=1 // pred_fallthru
      _
    // Predicated region
    $region94: #{fwd.1} parent=1 // pred_check
      _
    $region95: #{fwd.1} parent=1 // pred_check_branch
      %160 = sbr.rel (0) target = $region97
    $region96: #{fwd.1} parent=1 // pred_region
      %161 = dma.done [#allocation14], 16
    $region97: #{fwd.1} parent=1 // pred_fallthru
      _
    // Predicated region
    $region98: #{fwd.1} parent=1 // pred_check
      _
    $region99: #{fwd.1} parent=1 // pred_check_branch
      %163 = sbr.rel (0) target = $region101
    $region100: #{fwd.1} parent=1 // pred_region
      %164 = dma.done [#allocation17], 16
    $region101: #{fwd.1} parent=1 // pred_fallthru
      _
    // Predicated region
    $region102: #{fwd.1} parent=1 // pred_check
      _
    $region103: #{fwd.1} parent=1 // pred_check_branch
      %166 = sbr.rel (0) target = $region105
    $region104: #{fwd.1} parent=1 // pred_region
      %167 = dma.done [#allocation17], 16
    $region105: #{fwd.1} parent=1 // pred_fallthru
      _
    %v169 = vld [vmem:[%s0] sm:$0x3]
    %v170 = vld [vmem:[%s0 + $0x2] sm:$0x3]
    %v171 = vld [vmem:[%s0 + $0x4] sm:$0x3]
    %v172 = vld [vmem:[%s0 + $0x6] sm:$0x3]
    %v173 = vld [vmem:[%s0 + $0x8] sm:$0x3]
    %v174 = vld [vmem:[%s0 + $0xa] sm:$0x3]
    %v175 = vld [vmem:[%s0 + $0xc] sm:$0x3]
    %v176 = vld [vmem:[%s0 + $0xe] sm:$0x3]
    %v185 = vcombine.low %v169, %v170
    %v186 = vcombine.low %v171, %v172
    %v188 = vunpack.c.l.s4 1983009808
    %v189 = vunpack.c.0.s8 %v188
    %v190 = vlaneseq
    %v191 = vshrl.u32 %v190, 7
    %v192 = vsub.s32 %v189, %v191
    %v193 = vrot.slane %v185, %v192
    %v195 = vunpack.c.l.s4 1983009808
    %v196 = vunpack.c.0.s8 %v195
    %v197 = vlaneseq
    %v198 = vshrl.u32 %v197, 7
    %v199 = vsub.s32 %v196, %v198
    %v200 = vrot.slane %v186, %v199
    %v201 = vcombine.low %v193, %v200
    %v202 = vcombine.low %v173, %v174
    %v203 = vcombine.low %v175, %v176
    %v205 = vunpack.c.l.s4 1983009808
    %v206 = vunpack.c.0.s8 %v205
    %v207 = vlaneseq
    %v208 = vshrl.u32 %v207, 7
    %v209 = vsub.s32 %v206, %v208
    %v210 = vrot.slane %v202, %v209
    %v212 = vunpack.c.l.s4 1983009808
    %v213 = vunpack.c.0.s8 %v212
    %v214 = vlaneseq
    %v215 = vshrl.u32 %v214, 7
    %v216 = vsub.s32 %v213, %v215
    %v217 = vrot.slane %v203, %v216
    %v218 = vcombine.low %v210, %v217
    %v221 = vpack.c.bf16 %v218, %v201
    %v222 = vld [vmem:[#allocation4] sm:$0xf]
    %v223 = vld [vmem:[#allocation9] sm:$0x1]
    %v225 = vlaneseq
    %v226 = vshrl.u32 %v225, 7
    %v227 = vsub.s32 0, %v226
    %v228 = vrot.slane %v223, %v227
    %vm230 = vcmask 64512
    %v232 = vsel %vm230, %v221, 0
    %vm234 = vcmask 1043456
    %v236 = vsel %vm234, %v222, 0
    %238 = vmatprep.subr.bf16.mxu0 0
    %239 = vmatpush1.bf16.msra.mxu0 %v236
    %240 = vmatprep.subr.bf16.mxu0 0
    %241 = vmatpush1.bf16.msra.mxu0 0
    %242 = vmatprep.subr.bf16.mxu0 0
    %243 = vmatpush1.bf16.msra.mxu0 0
    %244 = vmatprep.subr.bf16.mxu0 0
    %245 = vmatpush1.bf16.msra.mxu0 0
    %246 = vmatprep.subr.bf16.mxu0 0
    %247 = vmatpush1.bf16.msra.mxu0 0
    %248 = vmatprep.subr.bf16.mxu0 0
    %249 = vmatpush1.bf16.msra.mxu0 0
    %250 = vmatprep.subr.bf16.mxu0 0
    %251 = vmatpush1.bf16.msra.mxu0 0
    %252 = vmatprep.subr.bf16.mxu0 0
    %253 = vmatpush1.bf16.msra.mxu0 0
    %254 = vmatprep.subr.bf16.mxu0 0
    %255 = vmatpush1.bf16.msra.mxu0 0
    %256 = vmatprep.subr.bf16.mxu0 0
    %257 = vmatpush1.bf16.msra.mxu0 0
    %258 = vmatprep.subr.bf16.mxu0 0
    %259 = vmatpush1.bf16.msra.mxu0 0
    %260 = vmatprep.subr.bf16.mxu0 0
    %261 = vmatpush1.bf16.msra.mxu0 0
    %262 = vmatprep.subr.bf16.mxu0 0
    %263 = vmatpush1.bf16.msra.mxu0 0
    %264 = vmatprep.subr.bf16.mxu0 0
    %265 = vmatpush1.bf16.msra.mxu0 0
    %266 = vmatprep.subr.bf16.mxu0 0
    %267 = vmatpush1.bf16.msra.mxu0 0
    %268 = vmatprep.subr.bf16.mxu0 0
    %269 = vmatpush1.bf16.msra.mxu0 0
    %270 = vmatprep.mubr.bf16.mxu0 0
    %271 = vmatmul.mubr.bf16.gmra.mrb[0].mxu0 %v232
    %v272 = vpop.f32.mrb[0].mxu0
    %v273 = vadd.f32 %v228, %v272
    %v274 = vpop.f32.mrb[0].mxu0
    %v275 = vpop.f32.mrb[0].mxu0
    %v276 = vadd.f32 %v228, %v275
    %v277 = vpop.f32.mrb[0].mxu0
    %278 = vdwg.mxu0
    %v281 = vcombine.high %v273, %v273
    %v283 = vunpack.c.l.s4 1983009808
    %v284 = vunpack.c.0.s8 %v283
    %v285 = vlaneseq
    %v286 = vshrl.u32 %v285, 7
    %v287 = vsub.s32 %v284, %v286
    %v288 = vrot.slane %v273, %v287
    %v290 = vunpack.c.l.s4 1983009808
    %v291 = vunpack.c.0.s8 %v290
    %v292 = vlaneseq
    %v293 = vshrl.u32 %v292, 7
    %v294 = vsub.s32 %v291, %v293
    %v295 = vrot.slane %v281, %v294
    %v296 = vcombine.high %v288, %v288
    %v297 = vcombine.high %v295, %v295
    %v298 = vcombine.high %v276, %v276
    %v300 = vunpack.c.l.s4 1983009808
    %v301 = vunpack.c.0.s8 %v300
    %v302 = vlaneseq
    %v303 = vshrl.u32 %v302, 7
    %v304 = vsub.s32 %v301, %v303
    %v305 = vrot.slane %v276, %v304
    %v307 = vunpack.c.l.s4 1983009808
    %v308 = vunpack.c.0.s8 %v307
    %v309 = vlaneseq
    %v310 = vshrl.u32 %v309, 7
    %v311 = vsub.s32 %v308, %v310
    %v312 = vrot.slane %v298, %v311
    %v313 = vcombine.high %v305, %v305
    %v314 = vcombine.high %v312, %v312
    %vm323 = vcmask 779264
    %324 = vst.msk [vmem:[#allocation2] sm:$0x3] %vm323, %v288
    %325 = vst.msk [vmem:[#allocation2 + $0x2] sm:$0x3] %vm323, %v296
    %326 = vst.msk [vmem:[#allocation2 + $0x4] sm:$0x3] %vm323, %v295
    %327 = vst.msk [vmem:[#allocation2 + $0x6] sm:$0x3] %vm323, %v297
    %328 = vst.msk [vmem:[#allocation2 + $0x8] sm:$0x3] %vm323, %v305
    %329 = vst.msk [vmem:[#allocation2 + $0xa] sm:$0x3] %vm323, %v313
    %330 = vst.msk [vmem:[#allocation2 + $0xc] sm:$0x3] %vm323, %v312
    %331 = vst.msk [vmem:[#allocation2 + $0xe] sm:$0x3] %vm323, %v314
    %v332 = vld [vmem:[#allocation7] sm:$0xf]
    %v333 = vld [vmem:[#allocation7 + $0x4] sm:$0xf]
    %v334 = vld [vmem:[#allocation7 + $0x8] sm:$0xf]
    %v335 = vld [vmem:[#allocation7 + $0xc] sm:$0xf]
    %v336 = vld [vmem:[#allocation10] sm:$0x1]
    %v337 = vld [vmem:[#allocation2] sm:$0x3]
    %v338 = vmul.f32 %v337, 0.5
    %v339 = vtanh.pop %v338
    %v340 = vadd.f32 %v339, 1.0
    %v341 = vmul.f32 %v340, 0.5
    %v343 = vlaneseq
    %v344 = vshrl.u32 %v343, 7
    %v345 = vsub.s32 0, %v344
    %v346 = vrot.slane %v336, %v345
    %v348 = vmul.f32 %v341, %v346
    %350 = vrot.lane.b32.xlu0 %v348, 64
    %v351 = vpop.permute.xlu0 %350
    %v353 = vadd.f32 %v337, %v351
    %v354 = vtanh.pop %v353
    %v355 = vsub.f32 1.0, %v341
    %357 = vrot.lane.b32.xlu0 %v354, 96
    %v358 = vpop.permute.xlu0 %357
    %v360 = vmul.f32 %v355, %v358
    %362 = vrot.lane.b32.xlu0 %v360, 96
    %v363 = vpop.permute.xlu0 %362
    %vm365 = vcmask 254976
    %366 = vst.msk [vmem:[#allocation3] sm:$0x3] %vm365, %v363
    %s367 = scalar_lea.vmem [#allocation2], 2
    %v368 = vld [vmem:[%s367] sm:$0x3]
    %v369 = vpack.c.bf16 %v360, %v360
    %371 = vrot.lane.b32.xlu0 %v369, 96
    %v372 = vpop.permute.xlu0 %371
    %v377 = vunpack.c.l.b16 %v332
    %v378 = vunpack.c.l.b16 %v333
    %v379 = vunpack.c.l.b16 %v334
    %v380 = vunpack.c.l.b16 %v335
    %v381 = vpack.c.b16 %v378, %v377
    %v382 = vpack.c.b16 %v380, %v379
    %vm385 = vcmask 261120
    %v387 = vsel %vm385, %v372, 0
    %389 = vmatprep.subr.bf16.mxu0 0
    %390 = vmatpush1.bf16.msra.mxu0 %v381
    %391 = vmatprep.subr.bf16.mxu0 0
    %392 = vmatpush1.bf16.msra.mxu0 %v382
    %393 = vmatprep.subr.bf16.mxu0 0
    %394 = vmatpush1.bf16.msra.mxu0 0
    %395 = vmatprep.subr.bf16.mxu0 0
    %396 = vmatpush1.bf16.msra.mxu0 0
    %397 = vmatprep.subr.bf16.mxu0 0
    %398 = vmatpush1.bf16.msra.mxu0 0
    %399 = vmatprep.subr.bf16.mxu0 0
    %400 = vmatpush1.bf16.msra.mxu0 0
    %401 = vmatprep.subr.bf16.mxu0 0
    %402 = vmatpush1.bf16.msra.mxu0 0
    %403 = vmatprep.subr.bf16.mxu0 0
    %404 = vmatpush1.bf16.msra.mxu0 0
    %405 = vmatprep.subr.bf16.mxu0 0
    %406 = vmatpush1.bf16.msra.mxu0 0
    %407 = vmatprep.subr.bf16.mxu0 0
    %408 = vmatpush1.bf16.msra.mxu0 0
    %409 = vmatprep.subr.bf16.mxu0 0
    %410 = vmatpush1.bf16.msra.mxu0 0
    %411 = vmatprep.subr.bf16.mxu0 0
    %412 = vmatpush1.bf16.msra.mxu0 0
    %413 = vmatprep.subr.bf16.mxu0 0
    %414 = vmatpush1.bf16.msra.mxu0 0
    %415 = vmatprep.subr.bf16.mxu0 0
    %416 = vmatpush1.bf16.msra.mxu0 0
    %417 = vmatprep.subr.bf16.mxu0 0
    %418 = vmatpush1.bf16.msra.mxu0 0
    %419 = vmatprep.subr.bf16.mxu0 0
    %420 = vmatpush1.bf16.msra.mxu0 0
    %421 = vmatprep.mubr.bf16.mxu0 0
    %422 = vmatmul.mubr.bf16.gmra.mrb[0].mxu0 %v387
    %v423 = vpop.f32.mrb[0].mxu0
    %v424 = vadd.f32 0.0, %v423
    %v425 = vpop.f32.mrb[0].mxu0
    %v426 = vpop.f32.mrb[0].mxu0
    %v427 = vpop.f32.mrb[0].mxu0
    %428 = vdwg.mxu0
    %v429 = vadd.f32 %v368, %v424
    %v430 = vmul.f32 %v429, 0.5
    %v431 = vtanh.pop %v430
    %v432 = vadd.f32 %v431, 1.0
    %v433 = vmul.f32 %v432, 0.5
    %434 = vrot.lane.b32.xlu0 %v346, 64
    %v435 = vpop.permute.xlu0 %434
    %v437 = vadd.f32 %v424, %v435
    %439 = vrot.lane.b32.xlu0 %v437, 64
    %v440 = vpop.permute.xlu0 %439
    %v442 = vmul.f32 %v433, %v440
    %444 = vrot.lane.b32.xlu0 %v442, 64
    %v445 = vpop.permute.xlu0 %444
    %v447 = vadd.f32 %v368, %v445
    %v448 = vtanh.pop %v447
    %v449 = vsub.f32 1.0, %v433
    %451 = vrot.lane.b32.xlu0 %v448, 96
    %v452 = vpop.permute.xlu0 %451
    %v454 = vmul.f32 %v449, %v452
    %v455 = vmul.f32 %v433, %v360
    %v456 = vadd.f32 %v454, %v455
    %458 = vrot.lane.b32.xlu0 %v456, 96
    %v459 = vpop.permute.xlu0 %458
    %s461 = scalar_lea.vmem [#allocation3], 2
    %462 = vst.msk [vmem:[%s461] sm:$0x3] %vm365, %v459
    %s463 = scalar_lea.vmem [#allocation2], 4
    %v464 = vld [vmem:[%s463] sm:$0x3]
    %v465 = vpack.c.bf16 %v456, %v456
    %467 = vrot.lane.b32.xlu0 %v465, 96
    %v468 = vpop.permute.xlu0 %467
    %v470 = vsel %vm385, %v468, 0
    %472 = vmatprep.subr.bf16.mxu0 0
    %473 = vmatpush1.bf16.msra.mxu0 %v381
    %474 = vmatprep.subr.bf16.mxu0 0
    %475 = vmatpush1.bf16.msra.mxu0 %v382
    %476 = vmatprep.subr.bf16.mxu0 0
    %477 = vmatpush1.bf16.msra.mxu0 0
    %478 = vmatprep.subr.bf16.mxu0 0
    %479 = vmatpush1.bf16.msra.mxu0 0
    %480 = vmatprep.subr.bf16.mxu0 0
    %481 = vmatpush1.bf16.msra.mxu0 0
    %482 = vmatprep.subr.bf16.mxu0 0
    %483 = vmatpush1.bf16.msra.mxu0 0
    %484 = vmatprep.subr.bf16.mxu0 0
    %485 = vmatpush1.bf16.msra.mxu0 0
    %486 = vmatprep.subr.bf16.mxu0 0
    %487 = vmatpush1.bf16.msra.mxu0 0
    %488 = vmatprep.subr.bf16.mxu0 0
    %489 = vmatpush1.bf16.msra.mxu0 0
    %490 = vmatprep.subr.bf16.mxu0 0
    %491 = vmatpush1.bf16.msra.mxu0 0
    %492 = vmatprep.subr.bf16.mxu0 0
    %493 = vmatpush1.bf16.msra.mxu0 0
    %494 = vmatprep.subr.bf16.mxu0 0
    %495 = vmatpush1.bf16.msra.mxu0 0
    %496 = vmatprep.subr.bf16.mxu0 0
    %497 = vmatpush1.bf16.msra.mxu0 0
    %498 = vmatprep.subr.bf16.mxu0 0
    %499 = vmatpush1.bf16.msra.mxu0 0
    %500 = vmatprep.subr.bf16.mxu0 0
    %501 = vmatpush1.bf16.msra.mxu0 0
    %502 = vmatprep.subr.bf16.mxu0 0
    %503 = vmatpush1.bf16.msra.mxu0 0
    %504 = vmatprep.mubr.bf16.mxu0 0
    %505 = vmatmul.mubr.bf16.gmra.mrb[0].mxu0 %v470
    %v506 = vpop.f32.mrb[0].mxu0
    %v507 = vadd.f32 0.0, %v506
    %v508 = vpop.f32.mrb[0].mxu0
    %v509 = vpop.f32.mrb[0].mxu0
    %v510 = vpop.f32.mrb[0].mxu0
    %511 = vdwg.mxu0
    %v512 = vadd.f32 %v464, %v507
    %v513 = vmul.f32 %v512, 0.5
    %v514 = vtanh.pop %v513
    %v515 = vadd.f32 %v514, 1.0
    %v516 = vmul.f32 %v515, 0.5
    %v517 = vadd.f32 %v507, %v435
    %519 = vrot.lane.b32.xlu0 %v517, 64
    %v520 = vpop.permute.xlu0 %519
    %v522 = vmul.f32 %v516, %v520
    %524 = vrot.lane.b32.xlu0 %v522, 64
    %v525 = vpop.permute.xlu0 %524
    %v527 = vadd.f32 %v464, %v525
    %v528 = vtanh.pop %v527
    %v529 = vsub.f32 1.0, %v516
    %531 = vrot.lane.b32.xlu0 %v528, 96
    %v532 = vpop.permute.xlu0 %531
    %v534 = vmul.f32 %v529, %v532
    %v535 = vmul.f32 %v516, %v456
    %v536 = vadd.f32 %v534, %v535
    %538 = vrot.lane.b32.xlu0 %v536, 96
    %v539 = vpop.permute.xlu0 %538
    %s541 = scalar_lea.vmem [#allocation3], 4
    %542 = vst.msk [vmem:[%s541] sm:$0x3] %vm365, %v539
    %s543 = scalar_lea.vmem [#allocation2], 6
    %v544 = vld [vmem:[%s543] sm:$0x3]
    %v545 = vpack.c.bf16 %v536, %v536
    %547 = vrot.lane.b32.xlu0 %v545, 96
    %v548 = vpop.permute.xlu0 %547
    %v550 = vsel %vm385, %v548, 0
    %552 = vmatprep.subr.bf16.mxu0 0
    %553 = vmatpush1.bf16.msra.mxu0 %v381
    %554 = vmatprep.subr.bf16.mxu0 0
    %555 = vmatpush1.bf16.msra.mxu0 %v382
    %556 = vmatprep.subr.bf16.mxu0 0
    %557 = vmatpush1.bf16.msra.mxu0 0
    %558 = vmatprep.subr.bf16.mxu0 0
    %559 = vmatpush1.bf16.msra.mxu0 0
    %560 = vmatprep.subr.bf16.mxu0 0
    %561 = vmatpush1.bf16.msra.mxu0 0
    %562 = vmatprep.subr.bf16.mxu0 0
    %563 = vmatpush1.bf16.msra.mxu0 0
    %564 = vmatprep.subr.bf16.mxu0 0
    %565 = vmatpush1.bf16.msra.mxu0 0
    %566 = vmatprep.subr.bf16.mxu0 0
    %567 = vmatpush1.bf16.msra.mxu0 0
    %568 = vmatprep.subr.bf16.mxu0 0
    %569 = vmatpush1.bf16.msra.mxu0 0
    %570 = vmatprep.subr.bf16.mxu0 0
    %571 = vmatpush1.bf16.msra.mxu0 0
    %572 = vmatprep.subr.bf16.mxu0 0
    %573 = vmatpush1.bf16.msra.mxu0 0
    %574 = vmatprep.subr.bf16.mxu0 0
    %575 = vmatpush1.bf16.msra.mxu0 0
    %576 = vmatprep.subr.bf16.mxu0 0
    %577 = vmatpush1.bf16.msra.mxu0 0
    %578 = vmatprep.subr.bf16.mxu0 0
    %579 = vmatpush1.bf16.msra.mxu0 0
    %580 = vmatprep.subr.bf16.mxu0 0
    %581 = vmatpush1.bf16.msra.mxu0 0
    %582 = vmatprep.subr.bf16.mxu0 0
    %583 = vmatpush1.bf16.msra.mxu0 0
    %584 = vmatprep.mubr.bf16.mxu0 0
    %585 = vmatmul.mubr.bf16.gmra.mrb[0].mxu0 %v550
    %v586 = vpop.f32.mrb[0].mxu0
    %v587 = vadd.f32 0.0, %v586
    %v588 = vpop.f32.mrb[0].mxu0
    %v589 = vpop.f32.mrb[0].mxu0
    %v590 = vpop.f32.mrb[0].mxu0
    %591 = vdwg.mxu0
    %v592 = vadd.f32 %v544, %v587
    %v593 = vmul.f32 %v592, 0.5
    %v594 = vtanh.pop %v593
    %v595 = vadd.f32 %v594, 1.0
    %v596 = vmul.f32 %v595, 0.5
    %v597 = vadd.f32 %v587, %v435
    %599 = vrot.lane.b32.xlu0 %v597, 64
    %v600 = vpop.permute.xlu0 %599
    %v602 = vmul.f32 %v596, %v600
    %604 = vrot.lane.b32.xlu0 %v602, 64
    %v605 = vpop.permute.xlu0 %604
    %v607 = vadd.f32 %v544, %v605
    %v608 = vtanh.pop %v607
    %v609 = vsub.f32 1.0, %v596
    %611 = vrot.lane.b32.xlu0 %v608, 96
    %v612 = vpop.permute.xlu0 %611
    %v614 = vmul.f32 %v609, %v612
    %v615 = vmul.f32 %v596, %v536
    %v616 = vadd.f32 %v614, %v615
    %618 = vrot.lane.b32.xlu0 %v616, 96
    %v619 = vpop.permute.xlu0 %618
    %s621 = scalar_lea.vmem [#allocation3], 6
    %622 = vst.msk [vmem:[%s621] sm:$0x3] %vm365, %v619
    %s623 = scalar_lea.vmem [#allocation2], 8
    %v624 = vld [vmem:[%s623] sm:$0x3]
    %v625 = vpack.c.bf16 %v616, %v616
    %627 = vrot.lane.b32.xlu0 %v625, 96
    %v628 = vpop.permute.xlu0 %627
    %v630 = vsel %vm385, %v628, 0
    %632 = vmatprep.subr.bf16.mxu0 0
    %633 = vmatpush1.bf16.msra.mxu0 %v381
    %634 = vmatprep.subr.bf16.mxu0 0
    %635 = vmatpush1.bf16.msra.mxu0 %v382
    %636 = vmatprep.subr.bf16.mxu0 0
    %637 = vmatpush1.bf16.msra.mxu0 0
    %638 = vmatprep.subr.bf16.mxu0 0
    %639 = vmatpush1.bf16.msra.mxu0 0
    %640 = vmatprep.subr.bf16.mxu0 0
    %641 = vmatpush1.bf16.msra.mxu0 0
    %642 = vmatprep.subr.bf16.mxu0 0
    %643 = vmatpush1.bf16.msra.mxu0 0
    %644 = vmatprep.subr.bf16.mxu0 0
    %645 = vmatpush1.bf16.msra.mxu0 0
    %646 = vmatprep.subr.bf16.mxu0 0
    %647 = vmatpush1.bf16.msra.mxu0 0
    %648 = vmatprep.subr.bf16.mxu0 0
    %649 = vmatpush1.bf16.msra.mxu0 0
    %650 = vmatprep.subr.bf16.mxu0 0
    %651 = vmatpush1.bf16.msra.mxu0 0
    %652 = vmatprep.subr.bf16.mxu0 0
    %653 = vmatpush1.bf16.msra.mxu0 0
    %654 = vmatprep.subr.bf16.mxu0 0
    %655 = vmatpush1.bf16.msra.mxu0 0
    %656 = vmatprep.subr.bf16.mxu0 0
    %657 = vmatpush1.bf16.msra.mxu0 0
    %658 = vmatprep.subr.bf16.mxu0 0
    %659 = vmatpush1.bf16.msra.mxu0 0
    %660 = vmatprep.subr.bf16.mxu0 0
    %661 = vmatpush1.bf16.msra.mxu0 0
    %662 = vmatprep.subr.bf16.mxu0 0
    %663 = vmatpush1.bf16.msra.mxu0 0
    %664 = vmatprep.mubr.bf16.mxu0 0
    %665 = vmatmul.mubr.bf16.gmra.mrb[0].mxu0 %v630
    %v666 = vpop.f32.mrb[0].mxu0
    %v667 = vadd.f32 0.0, %v666
    %v668 = vpop.f32.mrb[0].mxu0
    %v669 = vpop.f32.mrb[0].mxu0
    %v670 = vpop.f32.mrb[0].mxu0
    %671 = vdwg.mxu0
    %v672 = vadd.f32 %v624, %v667
    %v673 = vmul.f32 %v672, 0.5
    %v674 = vtanh.pop %v673
    %v675 = vadd.f32 %v674, 1.0
    %v676 = vmul.f32 %v675, 0.5
    %v677 = vadd.f32 %v667, %v435
    %679 = vrot.lane.b32.xlu0 %v677, 64
    %v680 = vpop.permute.xlu0 %679
    %v682 = vmul.f32 %v676, %v680
    %684 = vrot.lane.b32.xlu0 %v682, 64
    %v685 = vpop.permute.xlu0 %684
    %v687 = vadd.f32 %v624, %v685
    %v688 = vtanh.pop %v687
    %v689 = vsub.f32 1.0, %v676
    %691 = vrot.lane.b32.xlu0 %v688, 96
    %v692 = vpop.permute.xlu0 %691
    %v694 = vmul.f32 %v689, %v692
    %v695 = vmul.f32 %v676, %v616
    %v696 = vadd.f32 %v694, %v695
    %698 = vrot.lane.b32.xlu0 %v696, 96
    %v699 = vpop.permute.xlu0 %698
    %s701 = scalar_lea.vmem [#allocation3], 8
    %702 = vst.msk [vmem:[%s701] sm:$0x3] %vm365, %v699
    %s703 = scalar_lea.vmem [#allocation2], 10
    %v704 = vld [vmem:[%s703] sm:$0x3]
    %v705 = vpack.c.bf16 %v696, %v696
    %707 = vrot.lane.b32.xlu0 %v705, 96
    %v708 = vpop.permute.xlu0 %707
    %v710 = vsel %vm385, %v708, 0
    %712 = vmatprep.subr.bf16.mxu0 0
    %713 = vmatpush1.bf16.msra.mxu0 %v381
    %714 = vmatprep.subr.bf16.mxu0 0
    %715 = vmatpush1.bf16.msra.mxu0 %v382
    %716 = vmatprep.subr.bf16.mxu0 0
    %717 = vmatpush1.bf16.msra.mxu0 0
    %718 = vmatprep.subr.bf16.mxu0 0
    %719 = vmatpush1.bf16.msra.mxu0 0
    %720 = vmatprep.subr.bf16.mxu0 0
    %721 = vmatpush1.bf16.msra.mxu0 0
    %722 = vmatprep.subr.bf16.mxu0 0
    %723 = vmatpush1.bf16.msra.mxu0 0
    %724 = vmatprep.subr.bf16.mxu0 0
    %725 = vmatpush1.bf16.msra.mxu0 0
    %726 = vmatprep.subr.bf16.mxu0 0
    %727 = vmatpush1.bf16.msra.mxu0 0
    %728 = vmatprep.subr.bf16.mxu0 0
    %729 = vmatpush1.bf16.msra.mxu0 0
    %730 = vmatprep.subr.bf16.mxu0 0
    %731 = vmatpush1.bf16.msra.mxu0 0
    %732 = vmatprep.subr.bf16.mxu0 0
    %733 = vmatpush1.bf16.msra.mxu0 0
    %734 = vmatprep.subr.bf16.mxu0 0
    %735 = vmatpush1.bf16.msra.mxu0 0
    %736 = vmatprep.subr.bf16.mxu0 0
    %737 = vmatpush1.bf16.msra.mxu0 0
    %738 = vmatprep.subr.bf16.mxu0 0
    %739 = vmatpush1.bf16.msra.mxu0 0
    %740 = vmatprep.subr.bf16.mxu0 0
    %741 = vmatpush1.bf16.msra.mxu0 0
    %742 = vmatprep.subr.bf16.mxu0 0
    %743 = vmatpush1.bf16.msra.mxu0 0
    %744 = vmatprep.mubr.bf16.mxu0 0
    %745 = vmatmul.mubr.bf16.gmra.mrb[0].mxu0 %v710
    %v746 = vpop.f32.mrb[0].mxu0
    %v747 = vadd.f32 0.0, %v746
    %v748 = vpop.f32.mrb[0].mxu0
    %v749 = vpop.f32.mrb[0].mxu0
    %v750 = vpop.f32.mrb[0].mxu0
    %751 = vdwg.mxu0
    %v752 = vadd.f32 %v704, %v747
    %v753 = vmul.f32 %v752, 0.5
    %v754 = vtanh.pop %v753
    %v755 = vadd.f32 %v754, 1.0
    %v756 = vmul.f32 %v755, 0.5
    %v757 = vadd.f32 %v747, %v435
    %759 = vrot.lane.b32.xlu0 %v757, 64
    %v760 = vpop.permute.xlu0 %759
    %v762 = vmul.f32 %v756, %v760
    %764 = vrot.lane.b32.xlu0 %v762, 64
    %v765 = vpop.permute.xlu0 %764
    %v767 = vadd.f32 %v704, %v765
    %v768 = vtanh.pop %v767
    %v769 = vsub.f32 1.0, %v756
    %771 = vrot.lane.b32.xlu0 %v768, 96
    %v772 = vpop.permute.xlu0 %771
    %v774 = vmul.f32 %v769, %v772
    %v775 = vmul.f32 %v756, %v696
    %v776 = vadd.f32 %v774, %v775
    %778 = vrot.lane.b32.xlu0 %v776, 96
    %v779 = vpop.permute.xlu0 %778
    %s781 = scalar_lea.vmem [#allocation3], 10
    %782 = vst.msk [vmem:[%s781] sm:$0x3] %vm365, %v779
    %s783 = scalar_lea.vmem [#allocation2], 12
    %v784 = vld [vmem:[%s783] sm:$0x3]
    %v785 = vpack.c.bf16 %v776, %v776
    %787 = vrot.lane.b32.xlu0 %v785, 96
    %v788 = vpop.permute.xlu0 %787
    %v790 = vsel %vm385, %v788, 0
    %792 = vmatprep.subr.bf16.mxu0 0
    %793 = vmatpush1.bf16.msra.mxu0 %v381
    %794 = vmatprep.subr.bf16.mxu0 0
    %795 = vmatpush1.bf16.msra.mxu0 %v382
    %796 = vmatprep.subr.bf16.mxu0 0
    %797 = vmatpush1.bf16.msra.mxu0 0
    %798 = vmatprep.subr.bf16.mxu0 0
    %799 = vmatpush1.bf16.msra.mxu0 0
    %800 = vmatprep.subr.bf16.mxu0 0
    %801 = vmatpush1.bf16.msra.mxu0 0
    %802 = vmatprep.subr.bf16.mxu0 0
    %803 = vmatpush1.bf16.msra.mxu0 0
    %804 = vmatprep.subr.bf16.mxu0 0
    %805 = vmatpush1.bf16.msra.mxu0 0
    %806 = vmatprep.subr.bf16.mxu0 0
    %807 = vmatpush1.bf16.msra.mxu0 0
    %808 = vmatprep.subr.bf16.mxu0 0
    %809 = vmatpush1.bf16.msra.mxu0 0
    %810 = vmatprep.subr.bf16.mxu0 0
    %811 = vmatpush1.bf16.msra.mxu0 0
    %812 = vmatprep.subr.bf16.mxu0 0
    %813 = vmatpush1.bf16.msra.mxu0 0
    %814 = vmatprep.subr.bf16.mxu0 0
    %815 = vmatpush1.bf16.msra.mxu0 0
    %816 = vmatprep.subr.bf16.mxu0 0
    %817 = vmatpush1.bf16.msra.mxu0 0
    %818 = vmatprep.subr.bf16.mxu0 0
    %819 = vmatpush1.bf16.msra.mxu0 0
    %820 = vmatprep.subr.bf16.mxu0 0
    %821 = vmatpush1.bf16.msra.mxu0 0
    %822 = vmatprep.subr.bf16.mxu0 0
    %823 = vmatpush1.bf16.msra.mxu0 0
    %824 = vmatprep.mubr.bf16.mxu0 0
    %825 = vmatmul.mubr.bf16.gmra.mrb[0].mxu0 %v790
    %v826 = vpop.f32.mrb[0].mxu0
    %v827 = vadd.f32 0.0, %v826
    %v828 = vpop.f32.mrb[0].mxu0
    %v829 = vpop.f32.mrb[0].mxu0
    %v830 = vpop.f32.mrb[0].mxu0
    %831 = vdwg.mxu0
    %v832 = vadd.f32 %v784, %v827
    %v833 = vmul.f32 %v832, 0.5
    %v834 = vtanh.pop %v833
    %v835 = vadd.f32 %v834, 1.0
    %v836 = vmul.f32 %v835, 0.5
    %v837 = vadd.f32 %v827, %v435
    %839 = vrot.lane.b32.xlu0 %v837, 64
    %v840 = vpop.permute.xlu0 %839
    %v842 = vmul.f32 %v836, %v840
    %844 = vrot.lane.b32.xlu0 %v842, 64
    %v845 = vpop.permute.xlu0 %844
    %v847 = vadd.f32 %v784, %v845
    %v848 = vtanh.pop %v847
    %v849 = vsub.f32 1.0, %v836
    %851 = vrot.lane.b32.xlu0 %v848, 96
    %v852 = vpop.permute.xlu0 %851
    %v854 = vmul.f32 %v849, %v852
    %v855 = vmul.f32 %v836, %v776
    %v856 = vadd.f32 %v854, %v855
    %858 = vrot.lane.b32.xlu0 %v856, 96
    %v859 = vpop.permute.xlu0 %858
    %s861 = scalar_lea.vmem [#allocation3], 12
    %862 = vst.msk [vmem:[%s861] sm:$0x3] %vm365, %v859
    %s863 = scalar_lea.vmem [#allocation2], 14
    %v864 = vld [vmem:[%s863] sm:$0x3]
    %v865 = vpack.c.bf16 %v856, %v856
    %867 = vrot.lane.b32.xlu0 %v865, 96
    %v868 = vpop.permute.xlu0 %867
    %v870 = vsel %vm385, %v868, 0
    %872 = vmatprep.subr.bf16.mxu0 0
    %873 = vmatpush1.bf16.msra.mxu0 %v381
    %874 = vmatprep.subr.bf16.mxu0 0
    %875 = vmatpush1.bf16.msra.mxu0 %v382
    %876 = vmatprep.subr.bf16.mxu0 0
    %877 = vmatpush1.bf16.msra.mxu0 0
    %878 = vmatprep.subr.bf16.mxu0 0
    %879 = vmatpush1.bf16.msra.mxu0 0
    %880 = vmatprep.subr.bf16.mxu0 0
    %881 = vmatpush1.bf16.msra.mxu0 0
    %882 = vmatprep.subr.bf16.mxu0 0
    %883 = vmatpush1.bf16.msra.mxu0 0
    %884 = vmatprep.subr.bf16.mxu0 0
    %885 = vmatpush1.bf16.msra.mxu0 0
    %886 = vmatprep.subr.bf16.mxu0 0
    %887 = vmatpush1.bf16.msra.mxu0 0
    %888 = vmatprep.subr.bf16.mxu0 0
    %889 = vmatpush1.bf16.msra.mxu0 0
    %890 = vmatprep.subr.bf16.mxu0 0
    %891 = vmatpush1.bf16.msra.mxu0 0
    %892 = vmatprep.subr.bf16.mxu0 0
    %893 = vmatpush1.bf16.msra.mxu0 0
    %894 = vmatprep.subr.bf16.mxu0 0
    %895 = vmatpush1.bf16.msra.mxu0 0
    %896 = vmatprep.subr.bf16.mxu0 0
    %897 = vmatpush1.bf16.msra.mxu0 0
    %898 = vmatprep.subr.bf16.mxu0 0
    %899 = vmatpush1.bf16.msra.mxu0 0
    %900 = vmatprep.subr.bf16.mxu0 0
    %901 = vmatpush1.bf16.msra.mxu0 0
    %902 = vmatprep.subr.bf16.mxu0 0
    %903 = vmatpush1.bf16.msra.mxu0 0
    %904 = vmatprep.mubr.bf16.mxu0 0
    %905 = vmatmul.mubr.bf16.gmra.mrb[0].mxu0 %v870
    %v906 = vpop.f32.mrb[0].mxu0
    %v907 = vadd.f32 0.0, %v906
    %v908 = vpop.f32.mrb[0].mxu0
    %v909 = vpop.f32.mrb[0].mxu0
    %v910 = vpop.f32.mrb[0].mxu0
    %911 = vdwg.mxu0
    %v912 = vadd.f32 %v864, %v907
    %v913 = vmul.f32 %v912, 0.5
    %v914 = vtanh.pop %v913
    %v915 = vadd.f32 %v914, 1.0
    %v916 = vmul.f32 %v915, 0.5
    %v917 = vadd.f32 %v907, %v435
    %919 = vrot.lane.b32.xlu0 %v917, 64
    %v920 = vpop.permute.xlu0 %919
    %v922 = vmul.f32 %v916, %v920
    %924 = vrot.lane.b32.xlu0 %v922, 64
    %v925 = vpop.permute.xlu0 %924
    %v927 = vadd.f32 %v864, %v925
    %v928 = vtanh.pop %v927
    %v929 = vsub.f32 1.0, %v916
    %931 = vrot.lane.b32.xlu0 %v928, 96
    %v932 = vpop.permute.xlu0 %931
    %v934 = vmul.f32 %v929, %v932
    %v935 = vmul.f32 %v916, %v856
    %v936 = vadd.f32 %v934, %v935
    %938 = vrot.lane.b32.xlu0 %v936, 96
    %v939 = vpop.permute.xlu0 %938
    %s941 = scalar_lea.vmem [#allocation3], 14
    %942 = vst.msk [vmem:[%s941] sm:$0x3] %vm365, %v939
    %v943 = vld [vmem:[#allocation3] sm:$0x3]
    %v944 = vld [vmem:[#allocation3 + $0x2] sm:$0x3]
    %v945 = vld [vmem:[#allocation3 + $0x4] sm:$0x3]
    %v946 = vld [vmem:[#allocation3 + $0x6] sm:$0x3]
    %v947 = vld [vmem:[#allocation3 + $0x8] sm:$0x3]
    %v948 = vld [vmem:[#allocation3 + $0xa] sm:$0x3]
    %v949 = vld [vmem:[#allocation3 + $0xc] sm:$0x3]
    %v950 = vld [vmem:[#allocation3 + $0xe] sm:$0x3]
    %v959 = vcombine.low %v943, %v944
    %v960 = vcombine.low %v945, %v946
    %v962 = vunpack.c.l.s4 1983009808
    %v963 = vunpack.c.0.s8 %v962
    %v964 = vlaneseq
    %v965 = vshrl.u32 %v964, 7
    %v966 = vsub.s32 %v963, %v965
    %v967 = vrot.slane %v959, %v966
    %v969 = vunpack.c.l.s4 1983009808
    %v970 = vunpack.c.0.s8 %v969
    %v971 = vlaneseq
    %v972 = vshrl.u32 %v971, 7
    %v973 = vsub.s32 %v970, %v972
    %v974 = vrot.slane %v960, %v973
    %v975 = vcombine.low %v967, %v974
    %v976 = vcombine.low %v947, %v948
    %v977 = vcombine.low %v949, %v950
    %v979 = vunpack.c.l.s4 1983009808
    %v980 = vunpack.c.0.s8 %v979
    %v981 = vlaneseq
    %v982 = vshrl.u32 %v981, 7
    %v983 = vsub.s32 %v980, %v982
    %v984 = vrot.slane %v976, %v983
    %v986 = vunpack.c.l.s4 1983009808
    %v987 = vunpack.c.0.s8 %v986
    %v988 = vlaneseq
    %v989 = vshrl.u32 %v988, 7
    %v990 = vsub.s32 %v987, %v989
    %v991 = vrot.slane %v977, %v990
    %v992 = vcombine.low %v984, %v991
    %v995 = vpack.c.bf16 %v992, %v975
    %v996 = vld [vmem:[#allocation12] sm:$0xf]
    %v997 = vld [vmem:[#allocation12 + $0x4] sm:$0xf]
    %v998 = vld [vmem:[#allocation12 + $0x8] sm:$0xf]
    %v999 = vld [vmem:[#allocation12 + $0xc] sm:$0xf]
    %v1000 = vld [vmem:[#allocation13] sm:$0x1]
    %v1002 = vlaneseq
    %v1003 = vshrl.u32 %v1002, 7
    %v1004 = vsub.s32 0, %v1003
    %v1005 = vrot.slane %v1000, %v1004
    %v1011 = vunpack.c.l.b16 %v996
    %v1012 = vunpack.c.l.b16 %v997
    %v1013 = vunpack.c.l.b16 %v998
    %v1014 = vunpack.c.l.b16 %v999
    %v1015 = vpack.c.b16 %v1012, %v1011
    %v1016 = vpack.c.b16 %v1014, %v1013
    %v1020 = vsel %vm385, %v995, 0
    %1022 = vmatprep.subr.bf16.mxu0 0
    %1023 = vmatpush1.bf16.msra.mxu0 %v1015
    %1024 = vmatprep.subr.bf16.mxu0 0
    %1025 = vmatpush1.bf16.msra.mxu0 %v1016
    %1026 = vmatprep.subr.bf16.mxu0 0
    %1027 = vmatpush1.bf16.msra.mxu0 0
    %1028 = vmatprep.subr.bf16.mxu0 0
    %1029 = vmatpush1.bf16.msra.mxu0 0
    %1030 = vmatprep.subr.bf16.mxu0 0
    %1031 = vmatpush1.bf16.msra.mxu0 0
    %1032 = vmatprep.subr.bf16.mxu0 0
    %1033 = vmatpush1.bf16.msra.mxu0 0
    %1034 = vmatprep.subr.bf16.mxu0 0
    %1035 = vmatpush1.bf16.msra.mxu0 0
    %1036 = vmatprep.subr.bf16.mxu0 0
    %1037 = vmatpush1.bf16.msra.mxu0 0
    %1038 = vmatprep.subr.bf16.mxu0 0
    %1039 = vmatpush1.bf16.msra.mxu0 0
    %1040 = vmatprep.subr.bf16.mxu0 0
    %1041 = vmatpush1.bf16.msra.mxu0 0
    %1042 = vmatprep.subr.bf16.mxu0 0
    %1043 = vmatpush1.bf16.msra.mxu0 0
    %1044 = vmatprep.subr.bf16.mxu0 0
    %1045 = vmatpush1.bf16.msra.mxu0 0
    %1046 = vmatprep.subr.bf16.mxu0 0
    %1047 = vmatpush1.bf16.msra.mxu0 0
    %1048 = vmatprep.subr.bf16.mxu0 0
    %1049 = vmatpush1.bf16.msra.mxu0 0
    %1050 = vmatprep.subr.bf16.mxu0 0
    %1051 = vmatpush1.bf16.msra.mxu0 0
    %1052 = vmatprep.subr.bf16.mxu0 0
    %1053 = vmatpush1.bf16.msra.mxu0 0
    %1054 = vmatprep.mubr.bf16.mxu0 0
    %1055 = vmatmul.mubr.bf16.gmra.mrb[0].mxu0 %v1020
    %v1056 = vpop.f32.mrb[0].mxu0
    %v1057 = vadd.f32 %v1005, %v1056
    %v1058 = vpop.f32.mrb[0].mxu0
    %v1059 = vpop.f32.mrb[0].mxu0
    %v1060 = vadd.f32 %v1005, %v1059
    %v1061 = vpop.f32.mrb[0].mxu0
    %1062 = vdwg.mxu0
    %v1065 = vcombine.high %v1057, %v1057
    %v1067 = vunpack.c.l.s4 1983009808
    %v1068 = vunpack.c.0.s8 %v1067
    %v1069 = vlaneseq
    %v1070 = vshrl.u32 %v1069, 7
    %v1071 = vsub.s32 %v1068, %v1070
    %v1072 = vrot.slane %v1057, %v1071
    %v1074 = vunpack.c.l.s4 1983009808
    %v1075 = vunpack.c.0.s8 %v1074
    %v1076 = vlaneseq
    %v1077 = vshrl.u32 %v1076, 7
    %v1078 = vsub.s32 %v1075, %v1077
    %v1079 = vrot.slane %v1065, %v1078
    %v1080 = vcombine.high %v1072, %v1072
    %v1081 = vcombine.high %v1079, %v1079
    %v1082 = vcombine.high %v1060, %v1060
    %v1084 = vunpack.c.l.s4 1983009808
    %v1085 = vunpack.c.0.s8 %v1084
    %v1086 = vlaneseq
    %v1087 = vshrl.u32 %v1086, 7
    %v1088 = vsub.s32 %v1085, %v1087
    %v1089 = vrot.slane %v1060, %v1088
    %v1091 = vunpack.c.l.s4 1983009808
    %v1092 = vunpack.c.0.s8 %v1091
    %v1093 = vlaneseq
    %v1094 = vshrl.u32 %v1093, 7
    %v1095 = vsub.s32 %v1092, %v1094
    %v1096 = vrot.slane %v1082, %v1095
    %v1097 = vcombine.high %v1089, %v1089
    %v1098 = vcombine.high %v1096, %v1096
    %1107 = vst.msk [vmem:[#allocation2] sm:$0x3] %vm323, %v1072
    %1108 = vst.msk [vmem:[#allocation2 + $0x2] sm:$0x3] %vm323, %v1080
    %1109 = vst.msk [vmem:[#allocation2 + $0x4] sm:$0x3] %vm323, %v1079
    %1110 = vst.msk [vmem:[#allocation2 + $0x6] sm:$0x3] %vm323, %v1081
    %1111 = vst.msk [vmem:[#allocation2 + $0x8] sm:$0x3] %vm323, %v1089
    %1112 = vst.msk [vmem:[#allocation2 + $0xa] sm:$0x3] %vm323, %v1097
    %1113 = vst.msk [vmem:[#allocation2 + $0xc] sm:$0x3] %vm323, %v1096
    %1114 = vst.msk [vmem:[#allocation2 + $0xe] sm:$0x3] %vm323, %v1098
    %v1115 = vld [vmem:[%s6] sm:$0xf]
    %v1116 = vld [vmem:[%s6 + $0x4] sm:$0xf]
    %v1117 = vld [vmem:[%s6 + $0x8] sm:$0xf]
    %v1118 = vld [vmem:[%s6 + $0xc] sm:$0xf]
    %v1119 = vld [vmem:[#allocation15] sm:$0x1]
    %v1120 = vld [vmem:[#allocation2] sm:$0x3]
    %v1121 = vmul.f32 %v1120, 0.5
    %v1122 = vtanh.pop %v1121
    %v1123 = vadd.f32 %v1122, 1.0
    %v1124 = vmul.f32 %v1123, 0.5
    %v1126 = vlaneseq
    %v1127 = vshrl.u32 %v1126, 7
    %v1128 = vsub.s32 0, %v1127
    %v1129 = vrot.slane %v1119, %v1128
    %v1131 = vmul.f32 %v1124, %v1129
    %1133 = vrot.lane.b32.xlu0 %v1131, 64
    %v1134 = vpop.permute.xlu0 %1133
    %v1136 = vadd.f32 %v1120, %v1134
    %v1137 = vtanh.pop %v1136
    %v1138 = vsub.f32 1.0, %v1124
    %1140 = vrot.lane.b32.xlu0 %v1137, 96
    %v1141 = vpop.permute.xlu0 %1140
    %v1143 = vmul.f32 %v1138, %v1141
    %1145 = vrot.lane.b32.xlu0 %v1143, 96
    %v1146 = vpop.permute.xlu0 %1145
    %s1148 = scalar_lea.vmem [#allocation3], 16
    %1149 = vst.msk [vmem:[%s1148] sm:$0x3] %vm365, %v1146
    %v1150 = vld [vmem:[%s367] sm:$0x3]
    %v1151 = vpack.c.bf16 %v1143, %v1143
    %1153 = vrot.lane.b32.xlu0 %v1151, 96
    %v1154 = vpop.permute.xlu0 %1153
    %v1159 = vunpack.c.l.b16 %v1115
    %v1160 = vunpack.c.l.b16 %v1116
    %v1161 = vunpack.c.l.b16 %v1117
    %v1162 = vunpack.c.l.b16 %v1118
    %v1163 = vpack.c.b16 %v1160, %v1159
    %v1164 = vpack.c.b16 %v1162, %v1161
    %v1168 = vsel %vm385, %v1154, 0
    %1170 = vmatprep.subr.bf16.mxu0 0
    %1171 = vmatpush1.bf16.msra.mxu0 %v1163
    %1172 = vmatprep.subr.bf16.mxu0 0
    %1173 = vmatpush1.bf16.msra.mxu0 %v1164
    %1174 = vmatprep.subr.bf16.mxu0 0
    %1175 = vmatpush1.bf16.msra.mxu0 0
    %1176 = vmatprep.subr.bf16.mxu0 0
    %1177 = vmatpush1.bf16.msra.mxu0 0
    %1178 = vmatprep.subr.bf16.mxu0 0
    %1179 = vmatpush1.bf16.msra.mxu0 0
    %1180 = vmatprep.subr.bf16.mxu0 0
    %1181 = vmatpush1.bf16.msra.mxu0 0
    %1182 = vmatprep.subr.bf16.mxu0 0
    %1183 = vmatpush1.bf16.msra.mxu0 0
    %1184 = vmatprep.subr.bf16.mxu0 0
    %1185 = vmatpush1.bf16.msra.mxu0 0
    %1186 = vmatprep.subr.bf16.mxu0 0
    %1187 = vmatpush1.bf16.msra.mxu0 0
    %1188 = vmatprep.subr.bf16.mxu0 0
    %1189 = vmatpush1.bf16.msra.mxu0 0
    %1190 = vmatprep.subr.bf16.mxu0 0
    %1191 = vmatpush1.bf16.msra.mxu0 0
    %1192 = vmatprep.subr.bf16.mxu0 0
    %1193 = vmatpush1.bf16.msra.mxu0 0
    %1194 = vmatprep.subr.bf16.mxu0 0
    %1195 = vmatpush1.bf16.msra.mxu0 0
    %1196 = vmatprep.subr.bf16.mxu0 0
    %1197 = vmatpush1.bf16.msra.mxu0 0
    %1198 = vmatprep.subr.bf16.mxu0 0
    %1199 = vmatpush1.bf16.msra.mxu0 0
    %1200 = vmatprep.subr.bf16.mxu0 0
    %1201 = vmatpush1.bf16.msra.mxu0 0
    %1202 = vmatprep.mubr.bf16.mxu0 0
    %1203 = vmatmul.mubr.bf16.gmra.mrb[0].mxu0 %v1168
    %v1204 = vpop.f32.mrb[0].mxu0
    %v1205 = vadd.f32 0.0, %v1204
    %v1206 = vpop.f32.mrb[0].mxu0
    %v1207 = vpop.f32.mrb[0].mxu0
    %v1208 = vpop.f32.mrb[0].mxu0
    %1209 = vdwg.mxu0
    %v1210 = vadd.f32 %v1150, %v1205
    %v1211 = vmul.f32 %v1210, 0.5
    %v1212 = vtanh.pop %v1211
    %v1213 = vadd.f32 %v1212, 1.0
    %v1214 = vmul.f32 %v1213, 0.5
    %1215 = vrot.lane.b32.xlu0 %v1129, 64
    %v1216 = vpop.permute.xlu0 %1215
    %v1218 = vadd.f32 %v1205, %v1216
    %1220 = vrot.lane.b32.xlu0 %v1218, 64
    %v1221 = vpop.permute.xlu0 %1220
    %v1223 = vmul.f32 %v1214, %v1221
    %1225 = vrot.lane.b32.xlu0 %v1223, 64
    %v1226 = vpop.permute.xlu0 %1225
    %v1228 = vadd.f32 %v1150, %v1226
    %v1229 = vtanh.pop %v1228
    %v1230 = vsub.f32 1.0, %v1214
    %1232 = vrot.lane.b32.xlu0 %v1229, 96
    %v1233 = vpop.permute.xlu0 %1232
    %v1235 = vmul.f32 %v1230, %v1233
    %v1236 = vmul.f32 %v1214, %v1143
    %v1237 = vadd.f32 %v1235, %v1236
    %1239 = vrot.lane.b32.xlu0 %v1237, 96
    %v1240 = vpop.permute.xlu0 %1239
    %s1242 = scalar_lea.vmem [#allocation3], 18
    %1243 = vst.msk [vmem:[%s1242] sm:$0x3] %vm365, %v1240
    %v1244 = vld [vmem:[%s463] sm:$0x3]
    %v1245 = vpack.c.bf16 %v1237, %v1237
    %1247 = vrot.lane.b32.xlu0 %v1245, 96
    %v1248 = vpop.permute.xlu0 %1247
    %v1250 = vsel %vm385, %v1248, 0
    %1252 = vmatprep.subr.bf16.mxu0 0
    %1253 = vmatpush1.bf16.msra.mxu0 %v1163
    %1254 = vmatprep.subr.bf16.mxu0 0
    %1255 = vmatpush1.bf16.msra.mxu0 %v1164
    %1256 = vmatprep.subr.bf16.mxu0 0
    %1257 = vmatpush1.bf16.msra.mxu0 0
    %1258 = vmatprep.subr.bf16.mxu0 0
    %1259 = vmatpush1.bf16.msra.mxu0 0
    %1260 = vmatprep.subr.bf16.mxu0 0
    %1261 = vmatpush1.bf16.msra.mxu0 0
    %1262 = vmatprep.subr.bf16.mxu0 0
    %1263 = vmatpush1.bf16.msra.mxu0 0
    %1264 = vmatprep.subr.bf16.mxu0 0
    %1265 = vmatpush1.bf16.msra.mxu0 0
    %1266 = vmatprep.subr.bf16.mxu0 0
    %1267 = vmatpush1.bf16.msra.mxu0 0
    %1268 = vmatprep.subr.bf16.mxu0 0
    %1269 = vmatpush1.bf16.msra.mxu0 0
    %1270 = vmatprep.subr.bf16.mxu0 0
    %1271 = vmatpush1.bf16.msra.mxu0 0
    %1272 = vmatprep.subr.bf16.mxu0 0
    %1273 = vmatpush1.bf16.msra.mxu0 0
    %1274 = vmatprep.subr.bf16.mxu0 0
    %1275 = vmatpush1.bf16.msra.mxu0 0
    %1276 = vmatprep.subr.bf16.mxu0 0
    %1277 = vmatpush1.bf16.msra.mxu0 0
    %1278 = vmatprep.subr.bf16.mxu0 0
    %1279 = vmatpush1.bf16.msra.mxu0 0
    %1280 = vmatprep.subr.bf16.mxu0 0
    %1281 = vmatpush1.bf16.msra.mxu0 0
    %1282 = vmatprep.subr.bf16.mxu0 0
    %1283 = vmatpush1.bf16.msra.mxu0 0
    %1284 = vmatprep.mubr.bf16.mxu0 0
    %1285 = vmatmul.mubr.bf16.gmra.mrb[0].mxu0 %v1250
    %v1286 = vpop.f32.mrb[0].mxu0
    %v1287 = vadd.f32 0.0, %v1286
    %v1288 = vpop.f32.mrb[0].mxu0
    %v1289 = vpop.f32.mrb[0].mxu0
    %v1290 = vpop.f32.mrb[0].mxu0
    %1291 = vdwg.mxu0
    %v1292 = vadd.f32 %v1244, %v1287
    %v1293 = vmul.f32 %v1292, 0.5
    %v1294 = vtanh.pop %v1293
    %v1295 = vadd.f32 %v1294, 1.0
    %v1296 = vmul.f32 %v1295, 0.5
    %v1297 = vadd.f32 %v1287, %v1216
    %1299 = vrot.lane.b32.xlu0 %v1297, 64
    %v1300 = vpop.permute.xlu0 %1299
    %v1302 = vmul.f32 %v1296, %v1300
    %1304 = vrot.lane.b32.xlu0 %v1302, 64
    %v1305 = vpop.permute.xlu0 %1304
    %v1307 = vadd.f32 %v1244, %v1305
    %v1308 = vtanh.pop %v1307
    %v1309 = vsub.f32 1.0, %v1296
    %1311 = vrot.lane.b32.xlu0 %v1308, 96
    %v1312 = vpop.permute.xlu0 %1311
    %v1314 = vmul.f32 %v1309, %v1312
    %v1315 = vmul.f32 %v1296, %v1237
    %v1316 = vadd.f32 %v1314, %v1315
    %1318 = vrot.lane.b32.xlu0 %v1316, 96
    %v1319 = vpop.permute.xlu0 %1318
    %s1321 = scalar_lea.vmem [#allocation3], 20
    %1322 = vst.msk [vmem:[%s1321] sm:$0x3] %vm365, %v1319
    %v1323 = vld [vmem:[%s543] sm:$0x3]
    %v1324 = vpack.c.bf16 %v1316, %v1316
    %1326 = vrot.lane.b32.xlu0 %v1324, 96
    %v1327 = vpop.permute.xlu0 %1326
    %v1329 = vsel %vm385, %v1327, 0
    %1331 = vmatprep.subr.bf16.mxu0 0
    %1332 = vmatpush1.bf16.msra.mxu0 %v1163
    %1333 = vmatprep.subr.bf16.mxu0 0
    %1334 = vmatpush1.bf16.msra.mxu0 %v1164
    %1335 = vmatprep.subr.bf16.mxu0 0
    %1336 = vmatpush1.bf16.msra.mxu0 0
    %1337 = vmatprep.subr.bf16.mxu0 0
    %1338 = vmatpush1.bf16.msra.mxu0 0
    %1339 = vmatprep.subr.bf16.mxu0 0
    %1340 = vmatpush1.bf16.msra.mxu0 0
    %1341 = vmatprep.subr.bf16.mxu0 0
    %1342 = vmatpush1.bf16.msra.mxu0 0
    %1343 = vmatprep.subr.bf16.mxu0 0
    %1344 = vmatpush1.bf16.msra.mxu0 0
    %1345 = vmatprep.subr.bf16.mxu0 0
    %1346 = vmatpush1.bf16.msra.mxu0 0
    %1347 = vmatprep.subr.bf16.mxu0 0
    %1348 = vmatpush1.bf16.msra.mxu0 0
    %1349 = vmatprep.subr.bf16.mxu0 0
    %1350 = vmatpush1.bf16.msra.mxu0 0
    %1351 = vmatprep.subr.bf16.mxu0 0
    %1352 = vmatpush1.bf16.msra.mxu0 0
    %1353 = vmatprep.subr.bf16.mxu0 0
    %1354 = vmatpush1.bf16.msra.mxu0 0
    %1355 = vmatprep.subr.bf16.mxu0 0
    %1356 = vmatpush1.bf16.msra.mxu0 0
    %1357 = vmatprep.subr.bf16.mxu0 0
    %1358 = vmatpush1.bf16.msra.mxu0 0
    %1359 = vmatprep.subr.bf16.mxu0 0
    %1360 = vmatpush1.bf16.msra.mxu0 0
    %1361 = vmatprep.subr.bf16.mxu0 0
    %1362 = vmatpush1.bf16.msra.mxu0 0
    %1363 = vmatprep.mubr.bf16.mxu0 0
    %1364 = vmatmul.mubr.bf16.gmra.mrb[0].mxu0 %v1329
    %v1365 = vpop.f32.mrb[0].mxu0
    %v1366 = vadd.f32 0.0, %v1365
    %v1367 = vpop.f32.mrb[0].mxu0
    %v1368 = vpop.f32.mrb[0].mxu0
    %v1369 = vpop.f32.mrb[0].mxu0
    %1370 = vdwg.mxu0
    %v1371 = vadd.f32 %v1323, %v1366
    %v1372 = vmul.f32 %v1371, 0.5
    %v1373 = vtanh.pop %v1372
    %v1374 = vadd.f32 %v1373, 1.0
    %v1375 = vmul.f32 %v1374, 0.5
    %v1376 = vadd.f32 %v1366, %v1216
    %1378 = vrot.lane.b32.xlu0 %v1376, 64
    %v1379 = vpop.permute.xlu0 %1378
    %v1381 = vmul.f32 %v1375, %v1379
    %1383 = vrot.lane.b32.xlu0 %v1381, 64
    %v1384 = vpop.permute.xlu0 %1383
    %v1386 = vadd.f32 %v1323, %v1384
    %v1387 = vtanh.pop %v1386
    %v1388 = vsub.f32 1.0, %v1375
    %1390 = vrot.lane.b32.xlu0 %v1387, 96
    %v1391 = vpop.permute.xlu0 %1390
    %v1393 = vmul.f32 %v1388, %v1391
    %v1394 = vmul.f32 %v1375, %v1316
    %v1395 = vadd.f32 %v1393, %v1394
    %1397 = vrot.lane.b32.xlu0 %v1395, 96
    %v1398 = vpop.permute.xlu0 %1397
    %s1400 = scalar_lea.vmem [#allocation3], 22
    %1401 = vst.msk [vmem:[%s1400] sm:$0x3] %vm365, %v1398
    %v1402 = vld [vmem:[%s623] sm:$0x3]
    %v1403 = vpack.c.bf16 %v1395, %v1395
    %1405 = vrot.lane.b32.xlu0 %v1403, 96
    %v1406 = vpop.permute.xlu0 %1405
    %v1408 = vsel %vm385, %v1406, 0
    %1410 = vmatprep.subr.bf16.mxu0 0
    %1411 = vmatpush1.bf16.msra.mxu0 %v1163
    %1412 = vmatprep.subr.bf16.mxu0 0
    %1413 = vmatpush1.bf16.msra.mxu0 %v1164
    %1414 = vmatprep.subr.bf16.mxu0 0
    %1415 = vmatpush1.bf16.msra.mxu0 0
    %1416 = vmatprep.subr.bf16.mxu0 0
    %1417 = vmatpush1.bf16.msra.mxu0 0
    %1418 = vmatprep.subr.bf16.mxu0 0
    %1419 = vmatpush1.bf16.msra.mxu0 0
    %1420 = vmatprep.subr.bf16.mxu0 0
    %1421 = vmatpush1.bf16.msra.mxu0 0
    %1422 = vmatprep.subr.bf16.mxu0 0
    %1423 = vmatpush1.bf16.msra.mxu0 0
    %1424 = vmatprep.subr.bf16.mxu0 0
    %1425 = vmatpush1.bf16.msra.mxu0 0
    %1426 = vmatprep.subr.bf16.mxu0 0
    %1427 = vmatpush1.bf16.msra.mxu0 0
    %1428 = vmatprep.subr.bf16.mxu0 0
    %1429 = vmatpush1.bf16.msra.mxu0 0
    %1430 = vmatprep.subr.bf16.mxu0 0
    %1431 = vmatpush1.bf16.msra.mxu0 0
    %1432 = vmatprep.subr.bf16.mxu0 0
    %1433 = vmatpush1.bf16.msra.mxu0 0
    %1434 = vmatprep.subr.bf16.mxu0 0
    %1435 = vmatpush1.bf16.msra.mxu0 0
    %1436 = vmatprep.subr.bf16.mxu0 0
    %1437 = vmatpush1.bf16.msra.mxu0 0
    %1438 = vmatprep.subr.bf16.mxu0 0
    %1439 = vmatpush1.bf16.msra.mxu0 0
    %1440 = vmatprep.subr.bf16.mxu0 0
    %1441 = vmatpush1.bf16.msra.mxu0 0
    %1442 = vmatprep.mubr.bf16.mxu0 0
    %1443 = vmatmul.mubr.bf16.gmra.mrb[0].mxu0 %v1408
    %v1444 = vpop.f32.mrb[0].mxu0
    %v1445 = vadd.f32 0.0, %v1444
    %v1446 = vpop.f32.mrb[0].mxu0
    %v1447 = vpop.f32.mrb[0].mxu0
    %v1448 = vpop.f32.mrb[0].mxu0
    %1449 = vdwg.mxu0
    %v1450 = vadd.f32 %v1402, %v1445
    %v1451 = vmul.f32 %v1450, 0.5
    %v1452 = vtanh.pop %v1451
    %v1453 = vadd.f32 %v1452, 1.0
    %v1454 = vmul.f32 %v1453, 0.5
    %v1455 = vadd.f32 %v1445, %v1216
    %1457 = vrot.lane.b32.xlu0 %v1455, 64
    %v1458 = vpop.permute.xlu0 %1457
    %v1460 = vmul.f32 %v1454, %v1458
    %1462 = vrot.lane.b32.xlu0 %v1460, 64
    %v1463 = vpop.permute.xlu0 %1462
    %v1465 = vadd.f32 %v1402, %v1463
    %v1466 = vtanh.pop %v1465
    %v1467 = vsub.f32 1.0, %v1454
    %1469 = vrot.lane.b32.xlu0 %v1466, 96
    %v1470 = vpop.permute.xlu0 %1469
    %v1472 = vmul.f32 %v1467, %v1470
    %v1473 = vmul.f32 %v1454, %v1395
    %v1474 = vadd.f32 %v1472, %v1473
    %1476 = vrot.lane.b32.xlu0 %v1474, 96
    %v1477 = vpop.permute.xlu0 %1476
    %s1479 = scalar_lea.vmem [#allocation3], 24
    %1480 = vst.msk [vmem:[%s1479] sm:$0x3] %vm365, %v1477
    %v1481 = vld [vmem:[%s703] sm:$0x3]
    %v1482 = vpack.c.bf16 %v1474, %v1474
    %1484 = vrot.lane.b32.xlu0 %v1482, 96
    %v1485 = vpop.permute.xlu0 %1484
    %v1487 = vsel %vm385, %v1485, 0
    %1489 = vmatprep.subr.bf16.mxu0 0
    %1490 = vmatpush1.bf16.msra.mxu0 %v1163
    %1491 = vmatprep.subr.bf16.mxu0 0
    %1492 = vmatpush1.bf16.msra.mxu0 %v1164
    %1493 = vmatprep.subr.bf16.mxu0 0
    %1494 = vmatpush1.bf16.msra.mxu0 0
    %1495 = vmatprep.subr.bf16.mxu0 0
    %1496 = vmatpush1.bf16.msra.mxu0 0
    %1497 = vmatprep.subr.bf16.mxu0 0
    %1498 = vmatpush1.bf16.msra.mxu0 0
    %1499 = vmatprep.subr.bf16.mxu0 0
    %1500 = vmatpush1.bf16.msra.mxu0 0
    %1501 = vmatprep.subr.bf16.mxu0 0
    %1502 = vmatpush1.bf16.msra.mxu0 0
    %1503 = vmatprep.subr.bf16.mxu0 0
    %1504 = vmatpush1.bf16.msra.mxu0 0
    %1505 = vmatprep.subr.bf16.mxu0 0
    %1506 = vmatpush1.bf16.msra.mxu0 0
    %1507 = vmatprep.subr.bf16.mxu0 0
    %1508 = vmatpush1.bf16.msra.mxu0 0
    %1509 = vmatprep.subr.bf16.mxu0 0
    %1510 = vmatpush1.bf16.msra.mxu0 0
    %1511 = vmatprep.subr.bf16.mxu0 0
    %1512 = vmatpush1.bf16.msra.mxu0 0
    %1513 = vmatprep.subr.bf16.mxu0 0
    %1514 = vmatpush1.bf16.msra.mxu0 0
    %1515 = vmatprep.subr.bf16.mxu0 0
    %1516 = vmatpush1.bf16.msra.mxu0 0
    %1517 = vmatprep.subr.bf16.mxu0 0
    %1518 = vmatpush1.bf16.msra.mxu0 0
    %1519 = vmatprep.subr.bf16.mxu0 0
    %1520 = vmatpush1.bf16.msra.mxu0 0
    %1521 = vmatprep.mubr.bf16.mxu0 0
    %1522 = vmatmul.mubr.bf16.gmra.mrb[0].mxu0 %v1487
    %v1523 = vpop.f32.mrb[0].mxu0
    %v1524 = vadd.f32 0.0, %v1523
    %v1525 = vpop.f32.mrb[0].mxu0
    %v1526 = vpop.f32.mrb[0].mxu0
    %v1527 = vpop.f32.mrb[0].mxu0
    %1528 = vdwg.mxu0
    %v1529 = vadd.f32 %v1481, %v1524
    %v1530 = vmul.f32 %v1529, 0.5
    %v1531 = vtanh.pop %v1530
    %v1532 = vadd.f32 %v1531, 1.0
    %v1533 = vmul.f32 %v1532, 0.5
    %v1534 = vadd.f32 %v1524, %v1216
    %1536 = vrot.lane.b32.xlu0 %v1534, 64
    %v1537 = vpop.permute.xlu0 %1536
    %v1539 = vmul.f32 %v1533, %v1537
    %1541 = vrot.lane.b32.xlu0 %v1539, 64
    %v1542 = vpop.permute.xlu0 %1541
    %v1544 = vadd.f32 %v1481, %v1542
    %v1545 = vtanh.pop %v1544
    %v1546 = vsub.f32 1.0, %v1533
    %1548 = vrot.lane.b32.xlu0 %v1545, 96
    %v1549 = vpop.permute.xlu0 %1548
    %v1551 = vmul.f32 %v1546, %v1549
    %v1552 = vmul.f32 %v1533, %v1474
    %v1553 = vadd.f32 %v1551, %v1552
    %1555 = vrot.lane.b32.xlu0 %v1553, 96
    %v1556 = vpop.permute.xlu0 %1555
    %s1558 = scalar_lea.vmem [#allocation3], 26
    %1559 = vst.msk [vmem:[%s1558] sm:$0x3] %vm365, %v1556
    %v1560 = vld [vmem:[%s783] sm:$0x3]
    %v1561 = vpack.c.bf16 %v1553, %v1553
    %1563 = vrot.lane.b32.xlu0 %v1561, 96
    %v1564 = vpop.permute.xlu0 %1563
    %v1566 = vsel %vm385, %v1564, 0
    %1568 = vmatprep.subr.bf16.mxu0 0
    %1569 = vmatpush1.bf16.msra.mxu0 %v1163
    %1570 = vmatprep.subr.bf16.mxu0 0
    %1571 = vmatpush1.bf16.msra.mxu0 %v1164
    %1572 = vmatprep.subr.bf16.mxu0 0
    %1573 = vmatpush1.bf16.msra.mxu0 0
    %1574 = vmatprep.subr.bf16.mxu0 0
    %1575 = vmatpush1.bf16.msra.mxu0 0
    %1576 = vmatprep.subr.bf16.mxu0 0
    %1577 = vmatpush1.bf16.msra.mxu0 0
    %1578 = vmatprep.subr.bf16.mxu0 0
    %1579 = vmatpush1.bf16.msra.mxu0 0
    %1580 = vmatprep.subr.bf16.mxu0 0
    %1581 = vmatpush1.bf16.msra.mxu0 0
    %1582 = vmatprep.subr.bf16.mxu0 0
    %1583 = vmatpush1.bf16.msra.mxu0 0
    %1584 = vmatprep.subr.bf16.mxu0 0
    %1585 = vmatpush1.bf16.msra.mxu0 0
    %1586 = vmatprep.subr.bf16.mxu0 0
    %1587 = vmatpush1.bf16.msra.mxu0 0
    %1588 = vmatprep.subr.bf16.mxu0 0
    %1589 = vmatpush1.bf16.msra.mxu0 0
    %1590 = vmatprep.subr.bf16.mxu0 0
    %1591 = vmatpush1.bf16.msra.mxu0 0
    %1592 = vmatprep.subr.bf16.mxu0 0
    %1593 = vmatpush1.bf16.msra.mxu0 0
    %1594 = vmatprep.subr.bf16.mxu0 0
    %1595 = vmatpush1.bf16.msra.mxu0 0
    %1596 = vmatprep.subr.bf16.mxu0 0
    %1597 = vmatpush1.bf16.msra.mxu0 0
    %1598 = vmatprep.subr.bf16.mxu0 0
    %1599 = vmatpush1.bf16.msra.mxu0 0
    %1600 = vmatprep.mubr.bf16.mxu0 0
    %1601 = vmatmul.mubr.bf16.gmra.mrb[0].mxu0 %v1566
    %v1602 = vpop.f32.mrb[0].mxu0
    %v1603 = vadd.f32 0.0, %v1602
    %v1604 = vpop.f32.mrb[0].mxu0
    %v1605 = vpop.f32.mrb[0].mxu0
    %v1606 = vpop.f32.mrb[0].mxu0
    %1607 = vdwg.mxu0
    %v1608 = vadd.f32 %v1560, %v1603
    %v1609 = vmul.f32 %v1608, 0.5
    %v1610 = vtanh.pop %v1609
    %v1611 = vadd.f32 %v1610, 1.0
    %v1612 = vmul.f32 %v1611, 0.5
    %v1613 = vadd.f32 %v1603, %v1216
    %1615 = vrot.lane.b32.xlu0 %v1613, 64
    %v1616 = vpop.permute.xlu0 %1615
    %v1618 = vmul.f32 %v1612, %v1616
    %1620 = vrot.lane.b32.xlu0 %v1618, 64
    %v1621 = vpop.permute.xlu0 %1620
    %v1623 = vadd.f32 %v1560, %v1621
    %v1624 = vtanh.pop %v1623
    %v1625 = vsub.f32 1.0, %v1612
    %1627 = vrot.lane.b32.xlu0 %v1624, 96
    %v1628 = vpop.permute.xlu0 %1627
    %v1630 = vmul.f32 %v1625, %v1628
    %v1631 = vmul.f32 %v1612, %v1553
    %v1632 = vadd.f32 %v1630, %v1631
    %1634 = vrot.lane.b32.xlu0 %v1632, 96
    %v1635 = vpop.permute.xlu0 %1634
    %s1637 = scalar_lea.vmem [#allocation3], 28
    %1638 = vst.msk [vmem:[%s1637] sm:$0x3] %vm365, %v1635
    %v1639 = vld [vmem:[%s863] sm:$0x3]
    %v1640 = vpack.c.bf16 %v1632, %v1632
    %1642 = vrot.lane.b32.xlu0 %v1640, 96
    %v1643 = vpop.permute.xlu0 %1642
    %v1645 = vsel %vm385, %v1643, 0
    %1647 = vmatprep.subr.bf16.mxu0 0
    %1648 = vmatpush1.bf16.msra.mxu0 %v1163
    %1649 = vmatprep.subr.bf16.mxu0 0
    %1650 = vmatpush1.bf16.msra.mxu0 %v1164
    %1651 = vmatprep.subr.bf16.mxu0 0
    %1652 = vmatpush1.bf16.msra.mxu0 0
    %1653 = vmatprep.subr.bf16.mxu0 0
    %1654 = vmatpush1.bf16.msra.mxu0 0
    %1655 = vmatprep.subr.bf16.mxu0 0
    %1656 = vmatpush1.bf16.msra.mxu0 0
    %1657 = vmatprep.subr.bf16.mxu0 0
    %1658 = vmatpush1.bf16.msra.mxu0 0
    %1659 = vmatprep.subr.bf16.mxu0 0
    %1660 = vmatpush1.bf16.msra.mxu0 0
    %1661 = vmatprep.subr.bf16.mxu0 0
    %1662 = vmatpush1.bf16.msra.mxu0 0
    %1663 = vmatprep.subr.bf16.mxu0 0
    %1664 = vmatpush1.bf16.msra.mxu0 0
    %1665 = vmatprep.subr.bf16.mxu0 0
    %1666 = vmatpush1.bf16.msra.mxu0 0
    %1667 = vmatprep.subr.bf16.mxu0 0
    %1668 = vmatpush1.bf16.msra.mxu0 0
    %1669 = vmatprep.subr.bf16.mxu0 0
    %1670 = vmatpush1.bf16.msra.mxu0 0
    %1671 = vmatprep.subr.bf16.mxu0 0
    %1672 = vmatpush1.bf16.msra.mxu0 0
    %1673 = vmatprep.subr.bf16.mxu0 0
    %1674 = vmatpush1.bf16.msra.mxu0 0
    %1675 = vmatprep.subr.bf16.mxu0 0
    %1676 = vmatpush1.bf16.msra.mxu0 0
    %1677 = vmatprep.subr.bf16.mxu0 0
    %1678 = vmatpush1.bf16.msra.mxu0 0
    %1679 = vmatprep.mubr.bf16.mxu0 0
    %1680 = vmatmul.mubr.bf16.gmra.mrb[0].mxu0 %v1645
    %v1681 = vpop.f32.mrb[0].mxu0
    %v1682 = vadd.f32 0.0, %v1681
    %v1683 = vpop.f32.mrb[0].mxu0
    %v1684 = vpop.f32.mrb[0].mxu0
    %v1685 = vpop.f32.mrb[0].mxu0
    %1686 = vdwg.mxu0
    %v1687 = vadd.f32 %v1639, %v1682
    %v1688 = vmul.f32 %v1687, 0.5
    %v1689 = vtanh.pop %v1688
    %v1690 = vadd.f32 %v1689, 1.0
    %v1691 = vmul.f32 %v1690, 0.5
    %v1692 = vadd.f32 %v1682, %v1216
    %1694 = vrot.lane.b32.xlu0 %v1692, 64
    %v1695 = vpop.permute.xlu0 %1694
    %v1697 = vmul.f32 %v1691, %v1695
    %1699 = vrot.lane.b32.xlu0 %v1697, 64
    %v1700 = vpop.permute.xlu0 %1699
    %v1702 = vadd.f32 %v1639, %v1700
    %v1703 = vtanh.pop %v1702
    %v1704 = vsub.f32 1.0, %v1691
    %1706 = vrot.lane.b32.xlu0 %v1703, 96
    %v1707 = vpop.permute.xlu0 %1706
    %v1709 = vmul.f32 %v1704, %v1707
    %v1710 = vmul.f32 %v1691, %v1632
    %v1711 = vadd.f32 %v1709, %v1710
    %1713 = vrot.lane.b32.xlu0 %v1711, 96
    %v1714 = vpop.permute.xlu0 %1713
    %s1716 = scalar_lea.vmem [#allocation3], 30
    %1717 = vst.msk [vmem:[%s1716] sm:$0x3] %vm365, %v1714
    %v1718 = vld [vmem:[%s1148] sm:$0x3]
    %v1719 = vld [vmem:[%s1148 + $0x2] sm:$0x3]
    %v1720 = vld [vmem:[%s1148 + $0x4] sm:$0x3]
    %v1721 = vld [vmem:[%s1148 + $0x6] sm:$0x3]
    %v1722 = vld [vmem:[%s1148 + $0x8] sm:$0x3]
    %v1723 = vld [vmem:[%s1148 + $0xa] sm:$0x3]
    %v1724 = vld [vmem:[%s1148 + $0xc] sm:$0x3]
    %v1725 = vld [vmem:[%s1148 + $0xe] sm:$0x3]
    %v1734 = vcombine.low %v1718, %v1719
    %v1735 = vcombine.low %v1720, %v1721
    %v1737 = vunpack.c.l.s4 1983009808
    %v1738 = vunpack.c.0.s8 %v1737
    %v1739 = vlaneseq
    %v1740 = vshrl.u32 %v1739, 7
    %v1741 = vsub.s32 %v1738, %v1740
    %v1742 = vrot.slane %v1734, %v1741
    %v1744 = vunpack.c.l.s4 1983009808
    %v1745 = vunpack.c.0.s8 %v1744
    %v1746 = vlaneseq
    %v1747 = vshrl.u32 %v1746, 7
    %v1748 = vsub.s32 %v1745, %v1747
    %v1749 = vrot.slane %v1735, %v1748
    %v1750 = vcombine.low %v1742, %v1749
    %v1751 = vcombine.low %v1722, %v1723
    %v1752 = vcombine.low %v1724, %v1725
    %v1754 = vunpack.c.l.s4 1983009808
    %v1755 = vunpack.c.0.s8 %v1754
    %v1756 = vlaneseq
    %v1757 = vshrl.u32 %v1756, 7
    %v1758 = vsub.s32 %v1755, %v1757
    %v1759 = vrot.slane %v1751, %v1758
    %v1761 = vunpack.c.l.s4 1983009808
    %v1762 = vunpack.c.0.s8 %v1761
    %v1763 = vlaneseq
    %v1764 = vshrl.u32 %v1763, 7
    %v1765 = vsub.s32 %v1762, %v1764
    %v1766 = vrot.slane %v1752, %v1765
    %v1767 = vcombine.low %v1759, %v1766
    %v1770 = vpack.c.bf16 %v1767, %v1750
    %v1771 = vld [vmem:[%s9] sm:$0xf]
    %v1772 = vld [vmem:[%s9 + $0x4] sm:$0xf]
    %v1773 = vld [vmem:[%s9 + $0x8] sm:$0xf]
    %v1774 = vld [vmem:[%s9 + $0xc] sm:$0xf]
    %v1775 = vld [vmem:[#allocation16] sm:$0x1]
    %v1777 = vlaneseq
    %v1778 = vshrl.u32 %v1777, 7
    %v1779 = vsub.s32 0, %v1778
    %v1780 = vrot.slane %v1775, %v1779
    %v1786 = vunpack.c.l.b16 %v1771
    %v1787 = vunpack.c.l.b16 %v1772
    %v1788 = vunpack.c.l.b16 %v1773
    %v1789 = vunpack.c.l.b16 %v1774
    %v1790 = vpack.c.b16 %v1787, %v1786
    %v1791 = vpack.c.b16 %v1789, %v1788
    %v1795 = vsel %vm385, %v1770, 0
    %1797 = vmatprep.subr.bf16.mxu0 0
    %1798 = vmatpush1.bf16.msra.mxu0 %v1790
    %1799 = vmatprep.subr.bf16.mxu0 0
    %1800 = vmatpush1.bf16.msra.mxu0 %v1791
    %1801 = vmatprep.subr.bf16.mxu0 0
    %1802 = vmatpush1.bf16.msra.mxu0 0
    %1803 = vmatprep.subr.bf16.mxu0 0
    %1804 = vmatpush1.bf16.msra.mxu0 0
    %1805 = vmatprep.subr.bf16.mxu0 0
    %1806 = vmatpush1.bf16.msra.mxu0 0
    %1807 = vmatprep.subr.bf16.mxu0 0
    %1808 = vmatpush1.bf16.msra.mxu0 0
    %1809 = vmatprep.subr.bf16.mxu0 0
    %1810 = vmatpush1.bf16.msra.mxu0 0
    %1811 = vmatprep.subr.bf16.mxu0 0
    %1812 = vmatpush1.bf16.msra.mxu0 0
    %1813 = vmatprep.subr.bf16.mxu0 0
    %1814 = vmatpush1.bf16.msra.mxu0 0
    %1815 = vmatprep.subr.bf16.mxu0 0
    %1816 = vmatpush1.bf16.msra.mxu0 0
    %1817 = vmatprep.subr.bf16.mxu0 0
    %1818 = vmatpush1.bf16.msra.mxu0 0
    %1819 = vmatprep.subr.bf16.mxu0 0
    %1820 = vmatpush1.bf16.msra.mxu0 0
    %1821 = vmatprep.subr.bf16.mxu0 0
    %1822 = vmatpush1.bf16.msra.mxu0 0
    %1823 = vmatprep.subr.bf16.mxu0 0
    %1824 = vmatpush1.bf16.msra.mxu0 0
    %1825 = vmatprep.subr.bf16.mxu0 0
    %1826 = vmatpush1.bf16.msra.mxu0 0
    %1827 = vmatprep.subr.bf16.mxu0 0
    %1828 = vmatpush1.bf16.msra.mxu0 0
    %1829 = vmatprep.mubr.bf16.mxu0 0
    %1830 = vmatmul.mubr.bf16.gmra.mrb[0].mxu0 %v1795
    %v1831 = vpop.f32.mrb[0].mxu0
    %v1832 = vadd.f32 %v1780, %v1831
    %v1833 = vpop.f32.mrb[0].mxu0
    %v1834 = vpop.f32.mrb[0].mxu0
    %v1835 = vadd.f32 %v1780, %v1834
    %v1836 = vpop.f32.mrb[0].mxu0
    %1837 = vdwg.mxu0
    %v1840 = vcombine.high %v1832, %v1832
    %v1842 = vunpack.c.l.s4 1983009808
    %v1843 = vunpack.c.0.s8 %v1842
    %v1844 = vlaneseq
    %v1845 = vshrl.u32 %v1844, 7
    %v1846 = vsub.s32 %v1843, %v1845
    %v1847 = vrot.slane %v1832, %v1846
    %v1849 = vunpack.c.l.s4 1983009808
    %v1850 = vunpack.c.0.s8 %v1849
    %v1851 = vlaneseq
    %v1852 = vshrl.u32 %v1851, 7
    %v1853 = vsub.s32 %v1850, %v1852
    %v1854 = vrot.slane %v1840, %v1853
    %v1855 = vcombine.high %v1847, %v1847
    %v1856 = vcombine.high %v1854, %v1854
    %v1857 = vcombine.high %v1835, %v1835
    %v1859 = vunpack.c.l.s4 1983009808
    %v1860 = vunpack.c.0.s8 %v1859
    %v1861 = vlaneseq
    %v1862 = vshrl.u32 %v1861, 7
    %v1863 = vsub.s32 %v1860, %v1862
    %v1864 = vrot.slane %v1835, %v1863
    %v1866 = vunpack.c.l.s4 1983009808
    %v1867 = vunpack.c.0.s8 %v1866
    %v1868 = vlaneseq
    %v1869 = vshrl.u32 %v1868, 7
    %v1870 = vsub.s32 %v1867, %v1869
    %v1871 = vrot.slane %v1857, %v1870
    %v1872 = vcombine.high %v1864, %v1864
    %v1873 = vcombine.high %v1871, %v1871
    %1882 = vst.msk [vmem:[#allocation2] sm:$0x3] %vm323, %v1847
    %1883 = vst.msk [vmem:[#allocation2 + $0x2] sm:$0x3] %vm323, %v1855
    %1884 = vst.msk [vmem:[#allocation2 + $0x4] sm:$0x3] %vm323, %v1854
    %1885 = vst.msk [vmem:[#allocation2 + $0x6] sm:$0x3] %vm323, %v1856
    %1886 = vst.msk [vmem:[#allocation2 + $0x8] sm:$0x3] %vm323, %v1864
    %1887 = vst.msk [vmem:[#allocation2 + $0xa] sm:$0x3] %vm323, %v1872
    %1888 = vst.msk [vmem:[#allocation2 + $0xc] sm:$0x3] %vm323, %v1871
    %1889 = vst.msk [vmem:[#allocation2 + $0xe] sm:$0x3] %vm323, %v1873
    %v1890 = vld [vmem:[%s10] sm:$0xf]
    %v1891 = vld [vmem:[%s10 + $0x4] sm:$0xf]
    %v1892 = vld [vmem:[%s10 + $0x8] sm:$0xf]
    %v1893 = vld [vmem:[%s10 + $0xc] sm:$0xf]
    %v1894 = vld [vmem:[#allocation18] sm:$0x1]
    %v1895 = vld [vmem:[#allocation2] sm:$0x3]
    %v1896 = vmul.f32 %v1895, 0.5
    %v1897 = vtanh.pop %v1896
    %v1898 = vadd.f32 %v1897, 1.0
    %v1899 = vmul.f32 %v1898, 0.5
    %v1901 = vlaneseq
    %v1902 = vshrl.u32 %v1901, 7
    %v1903 = vsub.s32 0, %v1902
    %v1904 = vrot.slane %v1894, %v1903
    %v1906 = vmul.f32 %v1899, %v1904
    %1908 = vrot.lane.b32.xlu0 %v1906, 64
    %v1909 = vpop.permute.xlu0 %1908
    %v1911 = vadd.f32 %v1895, %v1909
    %v1912 = vtanh.pop %v1911
    %v1913 = vsub.f32 1.0, %v1899
    %1915 = vrot.lane.b32.xlu0 %v1912, 96
    %v1916 = vpop.permute.xlu0 %1915
    %v1918 = vmul.f32 %v1913, %v1916
    %v1919 = vld [vmem:[%s367] sm:$0x3]
    %v1920 = vpack.c.bf16 %v1918, %v1918
    %1922 = vrot.lane.b32.xlu0 %v1920, 96
    %v1923 = vpop.permute.xlu0 %1922
    %v1928 = vunpack.c.l.b16 %v1890
    %v1929 = vunpack.c.l.b16 %v1891
    %v1930 = vunpack.c.l.b16 %v1892
    %v1931 = vunpack.c.l.b16 %v1893
    %v1932 = vpack.c.b16 %v1929, %v1928
    %v1933 = vpack.c.b16 %v1931, %v1930
    %v1937 = vsel %vm385, %v1923, 0
    %1939 = vmatprep.subr.bf16.mxu0 0
    %1940 = vmatpush1.bf16.msra.mxu0 %v1932
    %1941 = vmatprep.subr.bf16.mxu0 0
    %1942 = vmatpush1.bf16.msra.mxu0 %v1933
    %1943 = vmatprep.subr.bf16.mxu0 0
    %1944 = vmatpush1.bf16.msra.mxu0 0
    %1945 = vmatprep.subr.bf16.mxu0 0
    %1946 = vmatpush1.bf16.msra.mxu0 0
    %1947 = vmatprep.subr.bf16.mxu0 0
    %1948 = vmatpush1.bf16.msra.mxu0 0
    %1949 = vmatprep.subr.bf16.mxu0 0
    %1950 = vmatpush1.bf16.msra.mxu0 0
    %1951 = vmatprep.subr.bf16.mxu0 0
    %1952 = vmatpush1.bf16.msra.mxu0 0
    %1953 = vmatprep.subr.bf16.mxu0 0
    %1954 = vmatpush1.bf16.msra.mxu0 0
    %1955 = vmatprep.subr.bf16.mxu0 0
    %1956 = vmatpush1.bf16.msra.mxu0 0
    %1957 = vmatprep.subr.bf16.mxu0 0
    %1958 = vmatpush1.bf16.msra.mxu0 0
    %1959 = vmatprep.subr.bf16.mxu0 0
    %1960 = vmatpush1.bf16.msra.mxu0 0
    %1961 = vmatprep.subr.bf16.mxu0 0
    %1962 = vmatpush1.bf16.msra.mxu0 0
    %1963 = vmatprep.subr.bf16.mxu0 0
    %1964 = vmatpush1.bf16.msra.mxu0 0
    %1965 = vmatprep.subr.bf16.mxu0 0
    %1966 = vmatpush1.bf16.msra.mxu0 0
    %1967 = vmatprep.subr.bf16.mxu0 0
    %1968 = vmatpush1.bf16.msra.mxu0 0
    %1969 = vmatprep.subr.bf16.mxu0 0
    %1970 = vmatpush1.bf16.msra.mxu0 0
    %1971 = vmatprep.mubr.bf16.mxu0 0
    %1972 = vmatmul.mubr.bf16.gmra.mrb[0].mxu0 %v1937
    %v1973 = vpop.f32.mrb[0].mxu0
    %v1974 = vadd.f32 0.0, %v1973
    %v1975 = vpop.f32.mrb[0].mxu0
    %v1976 = vpop.f32.mrb[0].mxu0
    %v1977 = vpop.f32.mrb[0].mxu0
    %1978 = vdwg.mxu0
    %v1979 = vadd.f32 %v1919, %v1974
    %v1980 = vmul.f32 %v1979, 0.5
    %v1981 = vtanh.pop %v1980
    %v1982 = vadd.f32 %v1981, 1.0
    %v1983 = vmul.f32 %v1982, 0.5
    %1984 = vrot.lane.b32.xlu0 %v1904, 64
    %v1985 = vpop.permute.xlu0 %1984
    %v1987 = vadd.f32 %v1974, %v1985
    %1989 = vrot.lane.b32.xlu0 %v1987, 64
    %v1990 = vpop.permute.xlu0 %1989
    %v1992 = vmul.f32 %v1983, %v1990
    %1994 = vrot.lane.b32.xlu0 %v1992, 64
    %v1995 = vpop.permute.xlu0 %1994
    %v1997 = vadd.f32 %v1919, %v1995
    %v1998 = vtanh.pop %v1997
    %v1999 = vsub.f32 1.0, %v1983
    %2001 = vrot.lane.b32.xlu0 %v1998, 96
    %v2002 = vpop.permute.xlu0 %2001
    %v2004 = vmul.f32 %v1999, %v2002
    %v2005 = vmul.f32 %v1983, %v1918
    %v2006 = vadd.f32 %v2004, %v2005
    %v2007 = vld [vmem:[%s463] sm:$0x3]
    %v2008 = vpack.c.bf16 %v2006, %v2006
    %2010 = vrot.lane.b32.xlu0 %v2008, 96
    %v2011 = vpop.permute.xlu0 %2010
    %v2013 = vsel %vm385, %v2011, 0
    %2015 = vmatprep.subr.bf16.mxu0 0
    %2016 = vmatpush1.bf16.msra.mxu0 %v1932
    %2017 = vmatprep.subr.bf16.mxu0 0
    %2018 = vmatpush1.bf16.msra.mxu0 %v1933
    %2019 = vmatprep.subr.bf16.mxu0 0
    %2020 = vmatpush1.bf16.msra.mxu0 0
    %2021 = vmatprep.subr.bf16.mxu0 0
    %2022 = vmatpush1.bf16.msra.mxu0 0
    %2023 = vmatprep.subr.bf16.mxu0 0
    %2024 = vmatpush1.bf16.msra.mxu0 0
    %2025 = vmatprep.subr.bf16.mxu0 0
    %2026 = vmatpush1.bf16.msra.mxu0 0
    %2027 = vmatprep.subr.bf16.mxu0 0
    %2028 = vmatpush1.bf16.msra.mxu0 0
    %2029 = vmatprep.subr.bf16.mxu0 0
    %2030 = vmatpush1.bf16.msra.mxu0 0
    %2031 = vmatprep.subr.bf16.mxu0 0
    %2032 = vmatpush1.bf16.msra.mxu0 0
    %2033 = vmatprep.subr.bf16.mxu0 0
    %2034 = vmatpush1.bf16.msra.mxu0 0
    %2035 = vmatprep.subr.bf16.mxu0 0
    %2036 = vmatpush1.bf16.msra.mxu0 0
    %2037 = vmatprep.subr.bf16.mxu0 0
    %2038 = vmatpush1.bf16.msra.mxu0 0
    %2039 = vmatprep.subr.bf16.mxu0 0
    %2040 = vmatpush1.bf16.msra.mxu0 0
    %2041 = vmatprep.subr.bf16.mxu0 0
    %2042 = vmatpush1.bf16.msra.mxu0 0
    %2043 = vmatprep.subr.bf16.mxu0 0
    %2044 = vmatpush1.bf16.msra.mxu0 0
    %2045 = vmatprep.subr.bf16.mxu0 0
    %2046 = vmatpush1.bf16.msra.mxu0 0
    %2047 = vmatprep.mubr.bf16.mxu0 0
    %2048 = vmatmul.mubr.bf16.gmra.mrb[0].mxu0 %v2013
    %v2049 = vpop.f32.mrb[0].mxu0
    %v2050 = vadd.f32 0.0, %v2049
    %v2051 = vpop.f32.mrb[0].mxu0
    %v2052 = vpop.f32.mrb[0].mxu0
    %v2053 = vpop.f32.mrb[0].mxu0
    %2054 = vdwg.mxu0
    %v2055 = vadd.f32 %v2007, %v2050
    %v2056 = vmul.f32 %v2055, 0.5
    %v2057 = vtanh.pop %v2056
    %v2058 = vadd.f32 %v2057, 1.0
    %v2059 = vmul.f32 %v2058, 0.5
    %v2060 = vadd.f32 %v2050, %v1985
    %2062 = vrot.lane.b32.xlu0 %v2060, 64
    %v2063 = vpop.permute.xlu0 %2062
    %v2065 = vmul.f32 %v2059, %v2063
    %2067 = vrot.lane.b32.xlu0 %v2065, 64
    %v2068 = vpop.permute.xlu0 %2067
    %v2070 = vadd.f32 %v2007, %v2068
    %v2071 = vtanh.pop %v2070
    %v2072 = vsub.f32 1.0, %v2059
    %2074 = vrot.lane.b32.xlu0 %v2071, 96
    %v2075 = vpop.permute.xlu0 %2074
    %v2077 = vmul.f32 %v2072, %v2075
    %v2078 = vmul.f32 %v2059, %v2006
    %v2079 = vadd.f32 %v2077, %v2078
    %v2080 = vld [vmem:[%s543] sm:$0x3]
    %v2081 = vpack.c.bf16 %v2079, %v2079
    %2083 = vrot.lane.b32.xlu0 %v2081, 96
    %v2084 = vpop.permute.xlu0 %2083
    %v2086 = vsel %vm385, %v2084, 0
    %2088 = vmatprep.subr.bf16.mxu0 0
    %2089 = vmatpush1.bf16.msra.mxu0 %v1932
    %2090 = vmatprep.subr.bf16.mxu0 0
    %2091 = vmatpush1.bf16.msra.mxu0 %v1933
    %2092 = vmatprep.subr.bf16.mxu0 0
    %2093 = vmatpush1.bf16.msra.mxu0 0
    %2094 = vmatprep.subr.bf16.mxu0 0
    %2095 = vmatpush1.bf16.msra.mxu0 0
    %2096 = vmatprep.subr.bf16.mxu0 0
    %2097 = vmatpush1.bf16.msra.mxu0 0
    %2098 = vmatprep.subr.bf16.mxu0 0
    %2099 = vmatpush1.bf16.msra.mxu0 0
    %2100 = vmatprep.subr.bf16.mxu0 0
    %2101 = vmatpush1.bf16.msra.mxu0 0
    %2102 = vmatprep.subr.bf16.mxu0 0
    %2103 = vmatpush1.bf16.msra.mxu0 0
    %2104 = vmatprep.subr.bf16.mxu0 0
    %2105 = vmatpush1.bf16.msra.mxu0 0
    %2106 = vmatprep.subr.bf16.mxu0 0
    %2107 = vmatpush1.bf16.msra.mxu0 0
    %2108 = vmatprep.subr.bf16.mxu0 0
    %2109 = vmatpush1.bf16.msra.mxu0 0
    %2110 = vmatprep.subr.bf16.mxu0 0
    %2111 = vmatpush1.bf16.msra.mxu0 0
    %2112 = vmatprep.subr.bf16.mxu0 0
    %2113 = vmatpush1.bf16.msra.mxu0 0
    %2114 = vmatprep.subr.bf16.mxu0 0
    %2115 = vmatpush1.bf16.msra.mxu0 0
    %2116 = vmatprep.subr.bf16.mxu0 0
    %2117 = vmatpush1.bf16.msra.mxu0 0
    %2118 = vmatprep.subr.bf16.mxu0 0
    %2119 = vmatpush1.bf16.msra.mxu0 0
    %2120 = vmatprep.mubr.bf16.mxu0 0
    %2121 = vmatmul.mubr.bf16.gmra.mrb[0].mxu0 %v2086
    %v2122 = vpop.f32.mrb[0].mxu0
    %v2123 = vadd.f32 0.0, %v2122
    %v2124 = vpop.f32.mrb[0].mxu0
    %v2125 = vpop.f32.mrb[0].mxu0
    %v2126 = vpop.f32.mrb[0].mxu0
    %2127 = vdwg.mxu0
    %v2128 = vadd.f32 %v2080, %v2123
    %v2129 = vmul.f32 %v2128, 0.5
    %v2130 = vtanh.pop %v2129
    %v2131 = vadd.f32 %v2130, 1.0
    %v2132 = vmul.f32 %v2131, 0.5
    %v2133 = vadd.f32 %v2123, %v1985
    %2135 = vrot.lane.b32.xlu0 %v2133, 64
    %v2136 = vpop.permute.xlu0 %2135
    %v2138 = vmul.f32 %v2132, %v2136
    %2140 = vrot.lane.b32.xlu0 %v2138, 64
    %v2141 = vpop.permute.xlu0 %2140
    %v2143 = vadd.f32 %v2080, %v2141
    %v2144 = vtanh.pop %v2143
    %v2145 = vsub.f32 1.0, %v2132
    %2147 = vrot.lane.b32.xlu0 %v2144, 96
    %v2148 = vpop.permute.xlu0 %2147
    %v2150 = vmul.f32 %v2145, %v2148
    %v2151 = vmul.f32 %v2132, %v2079
    %v2152 = vadd.f32 %v2150, %v2151
    %v2153 = vld [vmem:[%s623] sm:$0x3]
    %v2154 = vpack.c.bf16 %v2152, %v2152
    %2156 = vrot.lane.b32.xlu0 %v2154, 96
    %v2157 = vpop.permute.xlu0 %2156
    %v2159 = vsel %vm385, %v2157, 0
    %2161 = vmatprep.subr.bf16.mxu0 0
    %2162 = vmatpush1.bf16.msra.mxu0 %v1932
    %2163 = vmatprep.subr.bf16.mxu0 0
    %2164 = vmatpush1.bf16.msra.mxu0 %v1933
    %2165 = vmatprep.subr.bf16.mxu0 0
    %2166 = vmatpush1.bf16.msra.mxu0 0
    %2167 = vmatprep.subr.bf16.mxu0 0
    %2168 = vmatpush1.bf16.msra.mxu0 0
    %2169 = vmatprep.subr.bf16.mxu0 0
    %2170 = vmatpush1.bf16.msra.mxu0 0
    %2171 = vmatprep.subr.bf16.mxu0 0
    %2172 = vmatpush1.bf16.msra.mxu0 0
    %2173 = vmatprep.subr.bf16.mxu0 0
    %2174 = vmatpush1.bf16.msra.mxu0 0
    %2175 = vmatprep.subr.bf16.mxu0 0
    %2176 = vmatpush1.bf16.msra.mxu0 0
    %2177 = vmatprep.subr.bf16.mxu0 0
    %2178 = vmatpush1.bf16.msra.mxu0 0
    %2179 = vmatprep.subr.bf16.mxu0 0
    %2180 = vmatpush1.bf16.msra.mxu0 0
    %2181 = vmatprep.subr.bf16.mxu0 0
    %2182 = vmatpush1.bf16.msra.mxu0 0
    %2183 = vmatprep.subr.bf16.mxu0 0
    %2184 = vmatpush1.bf16.msra.mxu0 0
    %2185 = vmatprep.subr.bf16.mxu0 0
    %2186 = vmatpush1.bf16.msra.mxu0 0
    %2187 = vmatprep.subr.bf16.mxu0 0
    %2188 = vmatpush1.bf16.msra.mxu0 0
    %2189 = vmatprep.subr.bf16.mxu0 0
    %2190 = vmatpush1.bf16.msra.mxu0 0
    %2191 = vmatprep.subr.bf16.mxu0 0
    %2192 = vmatpush1.bf16.msra.mxu0 0
    %2193 = vmatprep.mubr.bf16.mxu0 0
    %2194 = vmatmul.mubr.bf16.gmra.mrb[0].mxu0 %v2159
    %v2195 = vpop.f32.mrb[0].mxu0
    %v2196 = vadd.f32 0.0, %v2195
    %v2197 = vpop.f32.mrb[0].mxu0
    %v2198 = vpop.f32.mrb[0].mxu0
    %v2199 = vpop.f32.mrb[0].mxu0
    %2200 = vdwg.mxu0
    %v2201 = vadd.f32 %v2153, %v2196
    %v2202 = vmul.f32 %v2201, 0.5
    %v2203 = vtanh.pop %v2202
    %v2204 = vadd.f32 %v2203, 1.0
    %v2205 = vmul.f32 %v2204, 0.5
    %v2206 = vadd.f32 %v2196, %v1985
    %2208 = vrot.lane.b32.xlu0 %v2206, 64
    %v2209 = vpop.permute.xlu0 %2208
    %v2211 = vmul.f32 %v2205, %v2209
    %2213 = vrot.lane.b32.xlu0 %v2211, 64
    %v2214 = vpop.permute.xlu0 %2213
    %v2216 = vadd.f32 %v2153, %v2214
    %v2217 = vtanh.pop %v2216
    %v2218 = vsub.f32 1.0, %v2205
    %2220 = vrot.lane.b32.xlu0 %v2217, 96
    %v2221 = vpop.permute.xlu0 %2220
    %v2223 = vmul.f32 %v2218, %v2221
    %v2224 = vmul.f32 %v2205, %v2152
    %v2225 = vadd.f32 %v2223, %v2224
    %v2226 = vld [vmem:[%s703] sm:$0x3]
    %v2227 = vpack.c.bf16 %v2225, %v2225
    %2229 = vrot.lane.b32.xlu0 %v2227, 96
    %v2230 = vpop.permute.xlu0 %2229
    %v2232 = vsel %vm385, %v2230, 0
    %2234 = vmatprep.subr.bf16.mxu0 0
    %2235 = vmatpush1.bf16.msra.mxu0 %v1932
    %2236 = vmatprep.subr.bf16.mxu0 0
    %2237 = vmatpush1.bf16.msra.mxu0 %v1933
    %2238 = vmatprep.subr.bf16.mxu0 0
    %2239 = vmatpush1.bf16.msra.mxu0 0
    %2240 = vmatprep.subr.bf16.mxu0 0
    %2241 = vmatpush1.bf16.msra.mxu0 0
    %2242 = vmatprep.subr.bf16.mxu0 0
    %2243 = vmatpush1.bf16.msra.mxu0 0
    %2244 = vmatprep.subr.bf16.mxu0 0
    %2245 = vmatpush1.bf16.msra.mxu0 0
    %2246 = vmatprep.subr.bf16.mxu0 0
    %2247 = vmatpush1.bf16.msra.mxu0 0
    %2248 = vmatprep.subr.bf16.mxu0 0
    %2249 = vmatpush1.bf16.msra.mxu0 0
    %2250 = vmatprep.subr.bf16.mxu0 0
    %2251 = vmatpush1.bf16.msra.mxu0 0
    %2252 = vmatprep.subr.bf16.mxu0 0
    %2253 = vmatpush1.bf16.msra.mxu0 0
    %2254 = vmatprep.subr.bf16.mxu0 0
    %2255 = vmatpush1.bf16.msra.mxu0 0
    %2256 = vmatprep.subr.bf16.mxu0 0
    %2257 = vmatpush1.bf16.msra.mxu0 0
    %2258 = vmatprep.subr.bf16.mxu0 0
    %2259 = vmatpush1.bf16.msra.mxu0 0
    %2260 = vmatprep.subr.bf16.mxu0 0
    %2261 = vmatpush1.bf16.msra.mxu0 0
    %2262 = vmatprep.subr.bf16.mxu0 0
    %2263 = vmatpush1.bf16.msra.mxu0 0
    %2264 = vmatprep.subr.bf16.mxu0 0
    %2265 = vmatpush1.bf16.msra.mxu0 0
    %2266 = vmatprep.mubr.bf16.mxu0 0
    %2267 = vmatmul.mubr.bf16.gmra.mrb[0].mxu0 %v2232
    %v2268 = vpop.f32.mrb[0].mxu0
    %v2269 = vadd.f32 0.0, %v2268
    %v2270 = vpop.f32.mrb[0].mxu0
    %v2271 = vpop.f32.mrb[0].mxu0
    %v2272 = vpop.f32.mrb[0].mxu0
    %2273 = vdwg.mxu0
    %v2274 = vadd.f32 %v2226, %v2269
    %v2275 = vmul.f32 %v2274, 0.5
    %v2276 = vtanh.pop %v2275
    %v2277 = vadd.f32 %v2276, 1.0
    %v2278 = vmul.f32 %v2277, 0.5
    %v2279 = vadd.f32 %v2269, %v1985
    %2281 = vrot.lane.b32.xlu0 %v2279, 64
    %v2282 = vpop.permute.xlu0 %2281
    %v2284 = vmul.f32 %v2278, %v2282
    %2286 = vrot.lane.b32.xlu0 %v2284, 64
    %v2287 = vpop.permute.xlu0 %2286
    %v2289 = vadd.f32 %v2226, %v2287
    %v2290 = vtanh.pop %v2289
    %v2291 = vsub.f32 1.0, %v2278
    %2293 = vrot.lane.b32.xlu0 %v2290, 96
    %v2294 = vpop.permute.xlu0 %2293
    %v2296 = vmul.f32 %v2291, %v2294
    %v2297 = vmul.f32 %v2278, %v2225
    %v2298 = vadd.f32 %v2296, %v2297
    %v2299 = vld [vmem:[%s783] sm:$0x3]
    %v2300 = vpack.c.bf16 %v2298, %v2298
    %2302 = vrot.lane.b32.xlu0 %v2300, 96
    %v2303 = vpop.permute.xlu0 %2302
    %v2305 = vsel %vm385, %v2303, 0
    %2307 = vmatprep.subr.bf16.mxu0 0
    %2308 = vmatpush1.bf16.msra.mxu0 %v1932
    %2309 = vmatprep.subr.bf16.mxu0 0
    %2310 = vmatpush1.bf16.msra.mxu0 %v1933
    %2311 = vmatprep.subr.bf16.mxu0 0
    %2312 = vmatpush1.bf16.msra.mxu0 0
    %2313 = vmatprep.subr.bf16.mxu0 0
    %2314 = vmatpush1.bf16.msra.mxu0 0
    %2315 = vmatprep.subr.bf16.mxu0 0
    %2316 = vmatpush1.bf16.msra.mxu0 0
    %2317 = vmatprep.subr.bf16.mxu0 0
    %2318 = vmatpush1.bf16.msra.mxu0 0
    %2319 = vmatprep.subr.bf16.mxu0 0
    %2320 = vmatpush1.bf16.msra.mxu0 0
    %2321 = vmatprep.subr.bf16.mxu0 0
    %2322 = vmatpush1.bf16.msra.mxu0 0
    %2323 = vmatprep.subr.bf16.mxu0 0
    %2324 = vmatpush1.bf16.msra.mxu0 0
    %2325 = vmatprep.subr.bf16.mxu0 0
    %2326 = vmatpush1.bf16.msra.mxu0 0
    %2327 = vmatprep.subr.bf16.mxu0 0
    %2328 = vmatpush1.bf16.msra.mxu0 0
    %2329 = vmatprep.subr.bf16.mxu0 0
    %2330 = vmatpush1.bf16.msra.mxu0 0
    %2331 = vmatprep.subr.bf16.mxu0 0
    %2332 = vmatpush1.bf16.msra.mxu0 0
    %2333 = vmatprep.subr.bf16.mxu0 0
    %2334 = vmatpush1.bf16.msra.mxu0 0
    %2335 = vmatprep.subr.bf16.mxu0 0
    %2336 = vmatpush1.bf16.msra.mxu0 0
    %2337 = vmatprep.subr.bf16.mxu0 0
    %2338 = vmatpush1.bf16.msra.mxu0 0
    %2339 = vmatprep.mubr.bf16.mxu0 0
    %2340 = vmatmul.mubr.bf16.gmra.mrb[0].mxu0 %v2305
    %v2341 = vpop.f32.mrb[0].mxu0
    %v2342 = vadd.f32 0.0, %v2341
    %v2343 = vpop.f32.mrb[0].mxu0
    %v2344 = vpop.f32.mrb[0].mxu0
    %v2345 = vpop.f32.mrb[0].mxu0
    %2346 = vdwg.mxu0
    %v2347 = vadd.f32 %v2299, %v2342
    %v2348 = vmul.f32 %v2347, 0.5
    %v2349 = vtanh.pop %v2348
    %v2350 = vadd.f32 %v2349, 1.0
    %v2351 = vmul.f32 %v2350, 0.5
    %v2352 = vadd.f32 %v2342, %v1985
    %2354 = vrot.lane.b32.xlu0 %v2352, 64
    %v2355 = vpop.permute.xlu0 %2354
    %v2357 = vmul.f32 %v2351, %v2355
    %2359 = vrot.lane.b32.xlu0 %v2357, 64
    %v2360 = vpop.permute.xlu0 %2359
    %v2362 = vadd.f32 %v2299, %v2360
    %v2363 = vtanh.pop %v2362
    %v2364 = vsub.f32 1.0, %v2351
    %2366 = vrot.lane.b32.xlu0 %v2363, 96
    %v2367 = vpop.permute.xlu0 %2366
    %v2369 = vmul.f32 %v2364, %v2367
    %v2370 = vmul.f32 %v2351, %v2298
    %v2371 = vadd.f32 %v2369, %v2370
    %v2372 = vld [vmem:[%s863] sm:$0x3]
    %v2373 = vpack.c.bf16 %v2371, %v2371
    %2375 = vrot.lane.b32.xlu0 %v2373, 96
    %v2376 = vpop.permute.xlu0 %2375
    %v2378 = vsel %vm385, %v2376, 0
    %2380 = vmatprep.subr.bf16.mxu0 0
    %2381 = vmatpush1.bf16.msra.mxu0 %v1932
    %2382 = vmatprep.subr.bf16.mxu0 0
    %2383 = vmatpush1.bf16.msra.mxu0 %v1933
    %2384 = vmatprep.subr.bf16.mxu0 0
    %2385 = vmatpush1.bf16.msra.mxu0 0
    %2386 = vmatprep.subr.bf16.mxu0 0
    %2387 = vmatpush1.bf16.msra.mxu0 0
    %2388 = vmatprep.subr.bf16.mxu0 0
    %2389 = vmatpush1.bf16.msra.mxu0 0
    %2390 = vmatprep.subr.bf16.mxu0 0
    %2391 = vmatpush1.bf16.msra.mxu0 0
    %2392 = vmatprep.subr.bf16.mxu0 0
    %2393 = vmatpush1.bf16.msra.mxu0 0
    %2394 = vmatprep.subr.bf16.mxu0 0
    %2395 = vmatpush1.bf16.msra.mxu0 0
    %2396 = vmatprep.subr.bf16.mxu0 0
    %2397 = vmatpush1.bf16.msra.mxu0 0
    %2398 = vmatprep.subr.bf16.mxu0 0
    %2399 = vmatpush1.bf16.msra.mxu0 0
    %2400 = vmatprep.subr.bf16.mxu0 0
    %2401 = vmatpush1.bf16.msra.mxu0 0
    %2402 = vmatprep.subr.bf16.mxu0 0
    %2403 = vmatpush1.bf16.msra.mxu0 0
    %2404 = vmatprep.subr.bf16.mxu0 0
    %2405 = vmatpush1.bf16.msra.mxu0 0
    %2406 = vmatprep.subr.bf16.mxu0 0
    %2407 = vmatpush1.bf16.msra.mxu0 0
    %2408 = vmatprep.subr.bf16.mxu0 0
    %2409 = vmatpush1.bf16.msra.mxu0 0
    %2410 = vmatprep.subr.bf16.mxu0 0
    %2411 = vmatpush1.bf16.msra.mxu0 0
    %2412 = vmatprep.mubr.bf16.mxu0 0
    %2413 = vmatmul.mubr.bf16.gmra.mrb[0].mxu0 %v2378
    %v2414 = vpop.f32.mrb[0].mxu0
    %v2415 = vadd.f32 0.0, %v2414
    %v2416 = vpop.f32.mrb[0].mxu0
    %v2417 = vpop.f32.mrb[0].mxu0
    %v2418 = vpop.f32.mrb[0].mxu0
    %2419 = vdwg.mxu0
    %v2420 = vadd.f32 %v2372, %v2415
    %v2421 = vmul.f32 %v2420, 0.5
    %v2422 = vtanh.pop %v2421
    %v2423 = vadd.f32 %v2422, 1.0
    %v2424 = vmul.f32 %v2423, 0.5
    %v2425 = vadd.f32 %v2415, %v1985
    %2427 = vrot.lane.b32.xlu0 %v2425, 64
    %v2428 = vpop.permute.xlu0 %2427
    %v2430 = vmul.f32 %v2424, %v2428
    %2432 = vrot.lane.b32.xlu0 %v2430, 64
    %v2433 = vpop.permute.xlu0 %2432
    %v2435 = vadd.f32 %v2372, %v2433
    %v2436 = vtanh.pop %v2435
    %v2437 = vsub.f32 1.0, %v2424
    %2439 = vrot.lane.b32.xlu0 %v2436, 96
    %v2440 = vpop.permute.xlu0 %2439
    %v2442 = vmul.f32 %v2437, %v2440
    %v2443 = vmul.f32 %v2424, %v2371
    %v2444 = vadd.f32 %v2442, %v2443
    %2446 = vrot.lane.b32.xlu0 %v2444, 96
    %v2447 = vpop.permute.xlu0 %2446
    %2449 = vst.msk [vmem:[#allocation20] sm:$0x3] %vm365, %v939
    %2450 = vst.msk [vmem:[#allocation20 + $0x2] sm:$0x3] %vm365, %v1714
    %2451 = vst.msk [vmem:[#allocation20 + $0x4] sm:$0x3] %vm365, %v2447
    %v2452 = vpack.c.bf16 %v2444, %v2444
    %v2453 = vld [vmem:[%s13] sm:$0xff]
    %v2454 = vld [vmem:[%s13 + $0x8] sm:$0xff]
    %v2455 = vld [vmem:[%s13 + $0x10] sm:$0xff]
    %v2456 = vld [vmem:[%s13 + $0x18] sm:$0xff]
    %v2457 = vld [vmem:[%s14] sm:$0x3]
    %v2459 = vlaneseq
    %v2460 = vshrl.u32 %v2459, 7
    %v2461 = vsub.s32 0, %v2460
    %v2462 = vrot.slane %v2457, %v2461
    %v2463 = vlaneseq
    %v2464 = vshrl.u32 %v2463, 7
    %v2465 = vsub.s32 1, %v2464
    %v2466 = vrot.slane %v2457, %v2465
    %2470 = vrot.lane.b32.xlu0 %v2452, 96
    %v2471 = vpop.permute.xlu0 %2470
    %v2476 = vunpack.c.l.b16 %v2453
    %v2477 = vunpack.c.h.b16 %v2453
    %v2478 = vunpack.c.l.b16 %v2454
    %v2479 = vunpack.c.h.b16 %v2454
    %v2480 = vunpack.c.l.b16 %v2455
    %v2481 = vunpack.c.h.b16 %v2455
    %v2482 = vunpack.c.l.b16 %v2456
    %v2483 = vunpack.c.h.b16 %v2456
    %v2484 = vpack.c.b16 %v2478, %v2476
    %v2485 = vpack.c.b16 %v2479, %v2477
    %v2486 = vpack.c.b16 %v2482, %v2480
    %v2487 = vpack.c.b16 %v2483, %v2481
    %v2493 = vsel %vm385, %v2471, 0
    %2495 = vmatprep.subr.bf16.mxu0 %v2485
    %2496 = vmatpush1.bf16.msra.mxu0 %v2484
    %2497 = vmatprep.subr.bf16.mxu0 %v2487
    %2498 = vmatpush1.bf16.msra.mxu0 %v2486
    %2499 = vmatprep.subr.bf16.mxu0 0
    %2500 = vmatpush1.bf16.msra.mxu0 0
    %2501 = vmatprep.subr.bf16.mxu0 0
    %2502 = vmatpush1.bf16.msra.mxu0 0
    %2503 = vmatprep.subr.bf16.mxu0 0
    %2504 = vmatpush1.bf16.msra.mxu0 0
    %2505 = vmatprep.subr.bf16.mxu0 0
    %2506 = vmatpush1.bf16.msra.mxu0 0
    %2507 = vmatprep.subr.bf16.mxu0 0
    %2508 = vmatpush1.bf16.msra.mxu0 0
    %2509 = vmatprep.subr.bf16.mxu0 0
    %2510 = vmatpush1.bf16.msra.mxu0 0
    %2511 = vmatprep.subr.bf16.mxu0 0
    %2512 = vmatpush1.bf16.msra.mxu0 0
    %2513 = vmatprep.subr.bf16.mxu0 0
    %2514 = vmatpush1.bf16.msra.mxu0 0
    %2515 = vmatprep.subr.bf16.mxu0 0
    %2516 = vmatpush1.bf16.msra.mxu0 0
    %2517 = vmatprep.subr.bf16.mxu0 0
    %2518 = vmatpush1.bf16.msra.mxu0 0
    %2519 = vmatprep.subr.bf16.mxu0 0
    %2520 = vmatpush1.bf16.msra.mxu0 0
    %2521 = vmatprep.subr.bf16.mxu0 0
    %2522 = vmatpush1.bf16.msra.mxu0 0
    %2523 = vmatprep.subr.bf16.mxu0 0
    %2524 = vmatpush1.bf16.msra.mxu0 0
    %2525 = vmatprep.subr.bf16.mxu0 0
    %2526 = vmatpush1.bf16.msra.mxu0 0
    %2527 = vmatprep.mubr.bf16.mxu0 0
    %2528 = vmatmul.mubr.bf16.gmra.mrb[0].mxu0 %v2493
    %v2529 = vpop.f32.mrb[0].mxu0
    %v2530 = vadd.f32 %v2462, %v2529
    %v2531 = vpop.f32.mrb[0].mxu0
    %v2532 = vadd.f32 %v2466, %v2531
    %v2533 = vpop.f32.mrb[0].mxu0
    %v2534 = vpop.f32.mrb[0].mxu0
    %2535 = vdwg.mxu0
    %v2536 = vpack.c.bf16 %v2530, %v2530
    %v2537 = vpack.c.bf16 %v2532, %v2532
    %v2538 = vld [vmem:[%s15] sm:$0xf]
    %v2539 = vld [vmem:[%s15 + $0x4] sm:$0xf]
    %v2540 = vld [vmem:[%s15 + $0x8] sm:$0xf]
    %v2541 = vld [vmem:[%s15 + $0xc] sm:$0xf]
    %v2542 = vld [vmem:[%s15 + $0x10] sm:$0xf]
    %v2543 = vld [vmem:[%s15 + $0x14] sm:$0xf]
    %v2544 = vld [vmem:[%s15 + $0x18] sm:$0xf]
    %v2545 = vld [vmem:[%s15 + $0x1c] sm:$0xf]
    %v2546 = vld [vmem:[%s15 + $0x20] sm:$0xf]
    %v2547 = vld [vmem:[%s15 + $0x24] sm:$0xf]
    %v2548 = vld [vmem:[%s15 + $0x28] sm:$0xf]
    %v2549 = vld [vmem:[%s15 + $0x2c] sm:$0xf]
    %v2550 = vld [vmem:[%s15 + $0x30] sm:$0xf]
    %v2551 = vld [vmem:[%s15 + $0x34] sm:$0xf]
    %v2552 = vld [vmem:[%s15 + $0x38] sm:$0xf]
    %v2553 = vld [vmem:[%s15 + $0x3c] sm:$0xf]
    %v2554 = vld [vmem:[%s15 + $0x40] sm:$0xf]
    %v2555 = vld [vmem:[%s15 + $0x44] sm:$0xf]
    %v2556 = vld [vmem:[%s15 + $0x48] sm:$0xf]
    %v2557 = vld [vmem:[%s15 + $0x4c] sm:$0xf]
    %v2558 = vld [vmem:[%s15 + $0x50] sm:$0xf]
    %v2559 = vld [vmem:[%s15 + $0x54] sm:$0xf]
    %v2560 = vld [vmem:[%s15 + $0x58] sm:$0xf]
    %v2561 = vld [vmem:[%s15 + $0x5c] sm:$0xf]
    %v2562 = vld [vmem:[%s15 + $0x60] sm:$0xf]
    %v2563 = vld [vmem:[%s15 + $0x64] sm:$0xf]
    %v2564 = vld [vmem:[%s15 + $0x68] sm:$0xf]
    %v2565 = vld [vmem:[%s15 + $0x6c] sm:$0xf]
    %v2566 = vld [vmem:[%s15 + $0x70] sm:$0xf]
    %v2567 = vld [vmem:[%s15 + $0x74] sm:$0xf]
    %v2568 = vld [vmem:[%s15 + $0x78] sm:$0xf]
    %v2569 = vld [vmem:[%s15 + $0x7c] sm:$0xf]
    %v2570 = vld [vmem:[%s16] sm:$0x1]
    %v2572 = vlaneseq
    %v2573 = vshrl.u32 %v2572, 7
    %v2574 = vsub.s32 0, %v2573
    %v2575 = vrot.slane %v2570, %v2574
    %v2609 = vunpack.c.l.b16 %v2538
    %v2610 = vunpack.c.l.b16 %v2539
    %v2611 = vunpack.c.l.b16 %v2540
    %v2612 = vunpack.c.l.b16 %v2541
    %v2613 = vunpack.c.l.b16 %v2542
    %v2614 = vunpack.c.l.b16 %v2543
    %v2615 = vunpack.c.l.b16 %v2544
    %v2616 = vunpack.c.l.b16 %v2545
    %v2617 = vunpack.c.l.b16 %v2546
    %v2618 = vunpack.c.l.b16 %v2547
    %v2619 = vunpack.c.l.b16 %v2548
    %v2620 = vunpack.c.l.b16 %v2549
    %v2621 = vunpack.c.l.b16 %v2550
    %v2622 = vunpack.c.l.b16 %v2551
    %v2623 = vunpack.c.l.b16 %v2552
    %v2624 = vunpack.c.l.b16 %v2553
    %v2625 = vunpack.c.l.b16 %v2554
    %v2626 = vunpack.c.l.b16 %v2555
    %v2627 = vunpack.c.l.b16 %v2556
    %v2628 = vunpack.c.l.b16 %v2557
    %v2629 = vunpack.c.l.b16 %v2558
    %v2630 = vunpack.c.l.b16 %v2559
    %v2631 = vunpack.c.l.b16 %v2560
    %v2632 = vunpack.c.l.b16 %v2561
    %v2633 = vunpack.c.l.b16 %v2562
    %v2634 = vunpack.c.l.b16 %v2563
    %v2635 = vunpack.c.l.b16 %v2564
    %v2636 = vunpack.c.l.b16 %v2565
    %v2637 = vunpack.c.l.b16 %v2566
    %v2638 = vunpack.c.l.b16 %v2567
    %v2639 = vunpack.c.l.b16 %v2568
    %v2640 = vunpack.c.l.b16 %v2569
    %v2641 = vpack.c.b16 %v2610, %v2609
    %v2642 = vpack.c.b16 %v2612, %v2611
    %v2643 = vpack.c.b16 %v2614, %v2613
    %v2644 = vpack.c.b16 %v2616, %v2615
    %v2645 = vpack.c.b16 %v2618, %v2617
    %v2646 = vpack.c.b16 %v2620, %v2619
    %v2647 = vpack.c.b16 %v2622, %v2621
    %v2648 = vpack.c.b16 %v2624, %v2623
    %v2649 = vpack.c.b16 %v2626, %v2625
    %v2650 = vpack.c.b16 %v2628, %v2627
    %v2651 = vpack.c.b16 %v2630, %v2629
    %v2652 = vpack.c.b16 %v2632, %v2631
    %v2653 = vpack.c.b16 %v2634, %v2633
    %v2654 = vpack.c.b16 %v2636, %v2635
    %v2655 = vpack.c.b16 %v2638, %v2637
    %v2656 = vpack.c.b16 %v2640, %v2639
    %2673 = vmatprep.subr.bf16.mxu0 0
    %2674 = vmatpush1.bf16.msra.mxu0 %v2641
    %2675 = vmatprep.subr.bf16.mxu0 0
    %2676 = vmatpush1.bf16.msra.mxu0 %v2642
    %2677 = vmatprep.subr.bf16.mxu0 0
    %2678 = vmatpush1.bf16.msra.mxu0 %v2643
    %2679 = vmatprep.subr.bf16.mxu0 0
    %2680 = vmatpush1.bf16.msra.mxu0 %v2644
    %2681 = vmatprep.subr.bf16.mxu0 0
    %2682 = vmatpush1.bf16.msra.mxu0 %v2645
    %2683 = vmatprep.subr.bf16.mxu0 0
    %2684 = vmatpush1.bf16.msra.mxu0 %v2646
    %2685 = vmatprep.subr.bf16.mxu0 0
    %2686 = vmatpush1.bf16.msra.mxu0 %v2647
    %2687 = vmatprep.subr.bf16.mxu0 0
    %2688 = vmatpush1.bf16.msra.mxu0 %v2648
    %2689 = vmatprep.subr.bf16.mxu0 0
    %2690 = vmatpush1.bf16.msra.mxu0 %v2649
    %2691 = vmatprep.subr.bf16.mxu0 0
    %2692 = vmatpush1.bf16.msra.mxu0 %v2650
    %2693 = vmatprep.subr.bf16.mxu0 0
    %2694 = vmatpush1.bf16.msra.mxu0 %v2651
    %2695 = vmatprep.subr.bf16.mxu0 0
    %2696 = vmatpush1.bf16.msra.mxu0 %v2652
    %2697 = vmatprep.subr.bf16.mxu0 0
    %2698 = vmatpush1.bf16.msra.mxu0 %v2653
    %2699 = vmatprep.subr.bf16.mxu0 0
    %2700 = vmatpush1.bf16.msra.mxu0 %v2654
    %2701 = vmatprep.subr.bf16.mxu0 0
    %2702 = vmatpush1.bf16.msra.mxu0 %v2655
    %2703 = vmatprep.subr.bf16.mxu0 0
    %2704 = vmatpush1.bf16.msra.mxu0 %v2656
    %2705 = vmatprep.mubr.bf16.mxu0 %v2537
    %2706 = vmatmul.mubr.bf16.gmra.mrb[0].mxu0 %v2536
    %v2707 = vpop.f32.mrb[0].mxu0
    %v2708 = vadd.f32 %v2575, %v2707
    %v2709 = vpop.f32.mrb[0].mxu0
    %v2710 = vpop.f32.mrb[0].mxu0
    %v2711 = vpop.f32.mrb[0].mxu0
    %2712 = vdwg.mxu0
    %vm2713 = vcmask 17408
    %2714 = vst.msk [vmem:[#allocation19] sm:$0x3] %vm2713, %v2708
    // Predicated region
    $region106: #{fwd.1} parent=1 // pred_check
      _
    $region107: #{fwd.1} parent=1 // pred_check_branch
      %2716 = sbr.rel (0) target = $region109
    $region108: #{fwd.1} parent=1 // pred_region
      %s2718 = ssub.s32 32, 32
      %2719 = vsyncadd [#allocation6], %s2718
      %s2721 = sshll.u32 [#allocation19], 4
      %s2722 = int_to_ptr.vmem [resolvable:$true] %s2721
      %2724 = dma.vmem_to_hbm [thread:$0]  %s2722, 32, %s17, [#allocation6]
    $region109: #{fwd.1} parent=1 // pred_fallthru
      _
    // Predicated region
    $region110: #{fwd.1} parent=1 // pred_check
      _
    $region111: #{fwd.1} parent=1 // pred_check_branch
      %2726 = sbr.rel (0) target = $region113
    $region112: #{fwd.1} parent=1 // pred_region
      %s2728 = ssub.s32 96, 96
      %2729 = vsyncadd [#allocation21], %s2728
      %s2730 = sshll.u32 [#allocation20], 4
      %s2731 = int_to_ptr.vmem [resolvable:$true] %s2730
      %2736 = dma.vmem_to_hbm [thread:$0]  %s2731, 96, %s18, [#allocation21], 32, 32, 2
    $region113: #{fwd.1} parent=1 // pred_fallthru
      _
    // Predicated region
    $region114: #{fwd.1} parent=1 // pred_check
      _
    $region115: #{fwd.1} parent=1 // pred_check_branch
      %2738 = sbr.rel (0) target = $region117
    $region116: #{fwd.1} parent=1 // pred_region
      %2739 = dma.done [#allocation6], 32
    $region117: #{fwd.1} parent=1 // pred_fallthru
      _
    // Predicated region
    $region118: #{fwd.1} parent=1 // pred_check
      _
    $region119: #{fwd.1} parent=1 // pred_check_branch
      %2741 = sbr.rel (0) target = $region121
    $region120: #{fwd.1} parent=1 // pred_region
      %2742 = dma.done [#allocation21], 96
    $region121: #{fwd.1} parent=1 // pred_fallthru
      _
    %2743 = vsyncpa [#allocation5], 1
    %2744 = vsyncpa [#allocation8], 1
    %2745 = vsyncpa [#allocation11], 1
    %2746 = vsyncpa [#allocation14], 1
    %2747 = vsyncpa [#allocation17], 1
    %2748 = vsyncpa [#allocation6], 1
    %2749 = vsyncpa [#allocation21], 1

</llo_original>
